<compile_context>
chip_gen: v6e
topology: v6e:2x2x1
jax: 0.10.0
libtpu: 0.0.40
codegen_flags: <defaults>
</compile_context>

<pallas_src>
import functools

import numpy as np
import jax
import jax.numpy as jnp
from jax import lax
from jax.experimental import pallas as pl
from jax.experimental.pallas import tpu as pltpu


# ----------------------------- fused kernel ----------------------------------

def _conv_up_kernel(x1_ref, x2_ref, ut_ref,
                    w_up_ref, b_up_ref,
                    w_sm_a_ref, w_sm_b_ref, b_sm_ref,
                    w_g1_ref, b_g1_ref,
                    w_c1_ref, b_c1_ref,
                    w_att_ref, b_att_ref,
                    w_g2_ref, b_g2_ref,
                    w_c2_ref, b_c2_ref,
                    o_ref, cat_ref, *, H, W, mid, out_ch):
    HW = H * W
    f32 = jnp.float32

    def mm(a, b):
        return jnp.dot(a, b, preferred_element_type=f32)

    # ---- fused bilinear-2x upsample + 1x1 "up" conv (linear ops commute) ----
    x1 = x1_ref[0]                                    # (in_ch, H1*W1)
    x2 = x2_ref[0]                                    # (in_ch - out_ch, HW)
    t = mm(w_up_ref[...], x1) + b_up_ref[...]         # 1x1 conv at low res
    xup = mm(t, ut_ref[...])                          # (out_ch, HW) lane-dense

    # ---- short_connect + conv1x1_mid fused: one stacked weight, 2 dots ------
    sm = mm(w_sm_a_ref[...], xup) + mm(w_sm_b_ref[...], x2) + b_sm_ref[...]
    short = sm[:out_ch]                               # (out_ch, HW)

    def inorm_relu(y):
        # InstanceNorm2d (biased var, eps=1e-5, affine=False) + ReLU.
        # Both moments come from ONE cross-lane reduction over [y; y*y].
        n = y.shape[0]
        s = jnp.mean(jnp.concatenate([y, y * y], axis=0), axis=1, keepdims=True)
        m = s[:n]
        v = jnp.maximum(s[n:] - m * m, 0.0)
        return jnp.maximum((y - m) * lax.rsqrt(v + 1e-5), 0.0)

    xxx = inorm_relu(sm[out_ch:])                     # (out_ch, HW)

    # ---- boundary masks for shifted taps (explicit w- AND h-edges) ----------
    col = lax.broadcasted_iota(jnp.int32, (1, HW), 1)
    wpos = col % W
    m_w_prev = (wpos >= 1).astype(f32)        # tap reading x[.., w-1]
    m_w_next = (wpos <= W - 2).astype(f32)    # tap reading x[.., w+1]
    m_h_prev = (col >= W).astype(f32)         # tap reading x[.., h-1, :]
    m_h_next = (col < HW - W).astype(f32)     # tap reading x[.., h+1, :]

    def conv_block(z, w_ref, b_ref, j, d, m_prev, m_next):
        # Conv_block: 3-tap conv along W (d=1) or H (d=W) + IN + ReLU.
        # Shifts run on the XLU (pltpu.roll, wrap-around killed by masks);
        # the 3*mid taps are VPU broadcast FMAs -> no MXU on the serial chain.
        zp = pltpu.roll(z, d, axis=1) * m_prev          # z[..., pos - d]
        zn = pltpu.roll(z, HW - d, axis=1) * m_next     # z[..., pos + d]
        taps = (zp, z, zn)
        wj = w_ref[j]                                   # (3, mid, mid)
        y = b_ref[j]                                    # (mid, 1), broadcasts
        for tap in range(3):
            for ci in range(mid):
                y = y + wj[tap, :, ci:ci + 1] * taps[tap][ci:ci + 1, :]
        return inorm_relu(y)

    # ---- first ([1,3]) residual chain ----------------------------------------
    xs = [xxx[i * mid:(i + 1) * mid, :] for i in range(6)]
    x0 = xs[0]
    x1b = conv_block(xs[1] + x0, w_g1_ref, b_g1_ref, 0, 1, m_w_prev, m_w_next)
    x2b = conv_block(xs[2] + x1b, w_g1_ref, b_g1_ref, 1, 1, m_w_prev, m_w_next)
    x3b = conv_block(xs[3] + x2b, w_g1_ref, b_g1_ref, 2, 1, m_w_prev, m_w_next)
    x4b = conv_block(xs[4] + x3b, w_g1_ref, b_g1_ref, 3, 1, m_w_prev, m_w_next)
    x5b = conv_block(xs[5] + x4b, w_g1_ref, b_g1_ref, 4, 1, m_w_prev, m_w_next)
    branches = (x0, x1b, x2b, x3b, x4b, x5b)
    xx = x0 + x1b + x2b + x3b + x4b + x5b             # (mid, HW)

    # ---- SK attention: mean first, then the folded fc->fcs linear map -------
    xmean = jnp.mean(xx, axis=1, keepdims=True)                # (mid, 1)
    vec = mm(w_att_ref[...], xmean) + b_att_ref[...]           # (6*mid, 1)
    v = [vec[i * mid:(i + 1) * mid, :] for i in range(6)]
    vmax = v[0]
    for i in range(1, 6):
        vmax = jnp.maximum(vmax, v[i])
    e = [jnp.exp(vi - vmax) for vi in v]
    den = e[0]
    for i in range(1, 6):
        den = den + e[i]
    inv_den = 1.0 / den                                        # (mid, 1)

    # branch * attention written straight into the shared VMEM scratch
    for i in range(6):
        cat_ref[i * mid:(i + 1) * mid, :] = branches[i] * (e[i] * inv_den)

    # ---- conv1x1_1 (no norm/act), second ([3,1]) chain, conv1x1_2 + residual
    xxx2 = mm(w_c1_ref[...], cat_ref[...]) + b_c1_ref[...]
    ys = [xxx2[i * mid:(i + 1) * mid, :] for i in range(6)]
    y0 = ys[0]
    y1 = conv_block(ys[1], w_g2_ref, b_g2_ref, 0, W, m_h_prev, m_h_next)  # no +y0
    y2 = conv_block(y1 + ys[2], w_g2_ref, b_g2_ref, 1, W, m_h_prev, m_h_next)
    y3 = conv_block(y2 + ys[3], w_g2_ref, b_g2_ref, 2, W, m_h_prev, m_h_next)
    y4 = conv_block(y3 + ys[4], w_g2_ref, b_g2_ref, 3, W, m_h_prev, m_h_next)
    y5 = conv_block(y4 + ys[5], w_g2_ref, b_g2_ref, 4, W, m_h_prev, m_h_next)
    ybr = (y0, y1, y2, y3, y4, y5)
    for i in range(6):
        cat_ref[i * mid:(i + 1) * mid, :] = ybr[i]

    out = mm(w_c2_ref[...], cat_ref[...]) + b_c2_ref[...] + short
    o_ref[0] = jnp.maximum(out, 0.0).astype(o_ref.dtype)


# ---------------------------- wrapper / glue ----------------------------------

def _upsample_matrix_T(h, w):
    # Bilinear 2x (align_corners=False) as a fixed interpolation matrix, T'd:
    # (h*w, 4*h*w).  Dense kron is fine at these sizes (64 KiB at 16x16);
    # switch to two separable 1-D stencil matmuls before scaling H*W on v7x.
    def m1(n):
        m = np.zeros((2 * n, n), np.float32)
        for o in range(2 * n):
            src = (o + 0.5) / 2.0 - 0.5
            i0 = int(np.floor(src))
            fr = src - i0
            lo = min(max(i0, 0), n - 1)
            hi = min(max(i0 + 1, 0), n - 1)
            m[o, lo] += 1.0 - fr
            m[o, hi] += fr
        return m
    u = np.kron(m1(h), m1(w))            # (2h*2w, h*w)
    return jnp.asarray(u.T)


def conv_up_forward(x1_nchw, x2_nchw, p, in_ch, out_ch):
    B, C1, H1, W1 = x1_nchw.shape
    _, C2, H, W = x2_nchw.shape
    assert C1 == in_ch and C2 == in_ch - out_ch and H == 2 * H1 and W == 2 * W1
    assert out_ch % 6 == 0 and in_ch > out_ch        # short_connect path
    mid = out_ch // 6
    HW = H * W
    HIGH = jax.lax.Precision.HIGHEST

    # NCHW is already channel-major; only a reshape (no transpose) is needed.
    x1 = x1_nchw.reshape(B, C1, H1 * W1)
    x2 = x2_nchw.reshape(B, C2, HW)
    UT = _upsample_matrix_T(H1, W1)

    w_up, b_up = p['up']
    w_s, b_s = p['short']
    w_m, b_m = p['mid']
    # short_connect and conv1x1_mid fused into one stacked weight, split by
    # input source (upsampled x1 vs x2) so no concatenated activation is built.
    w_sm_a = jnp.concatenate([w_s[:, :out_ch], w_m[:, :out_ch]], axis=0)
    w_sm_b = jnp.concatenate([w_s[:, out_ch:], w_m[:, out_ch:]], axis=0)
    b_sm = jnp.concatenate([b_s, b_m], axis=0)

    w_g1, b_g1 = p['g1']
    w_c1, b_c1 = p['c1']
    w_g2, b_g2 = p['g2']
    w_c2, b_c2 = p['c2']
    w_fc, b_fc = p['fc']
    w_fcs, b_fcs = p['fcs']
    # fc -> fcs has no nonlinearity in between (matches the reference module):
    # fold into one linear map.
    w_att = jnp.dot(w_fcs, w_fc, precision=HIGH)               # (6*mid, mid)
    b_att = jnp.dot(w_fcs, b_fc, precision=HIGH) + b_fcs       # (6*mid, 1)

    consts = [UT, w_up, b_up, w_sm_a, w_sm_b, b_sm,
              w_g1, b_g1, w_c1, b_c1, w_att, b_att, w_g2, b_g2, w_c2, b_c2]

    def cspec(a):
        nd = a.ndim
        return pl.BlockSpec(a.shape, lambda b, _nd=nd: (0,) * _nd)

    in_specs = [
        pl.BlockSpec((1, C1, H1 * W1), lambda b: (b, 0, 0)),
        pl.BlockSpec((1, C2, HW), lambda b: (b, 0, 0)),
    ] + [cspec(a) for a in consts]

    kernel = functools.partial(_conv_up_kernel, H=H, W=W, mid=mid, out_ch=out_ch)
    out = pl.pallas_call(
        kernel,
        out_shape=jax.ShapeDtypeStruct((B, out_ch, HW), jnp.float32),
        grid=(B,),
        in_specs=in_specs,
        out_specs=pl.BlockSpec((1, out_ch, HW), lambda b: (b, 0, 0)),
        scratch_shapes=[pltpu.VMEM((out_ch, HW), jnp.float32)],
        compiler_params=pltpu.CompilerParams(
            dimension_semantics=("parallel",),       # B splits across v7x TCs
            vmem_limit_bytes=32 * 1024 * 1024),
    )(x1, x2, *consts)
    # TODO(synk): at larger H*W, add lane-axis sample batching (needs
    # per-sample segmented InstanceNorm stats) and a separable upsample.
    return out.reshape(B, out_ch, H, W)


# ----------------------------- parameters ------------------------------------

def init_params(key, in_ch, out_ch):
    assert out_ch % 6 == 0 and in_ch > out_ch
    mid = out_ch // 6
    num = max(mid // 2, 12)
    keys = iter(jax.random.split(key, 24))

    def w(shape, scale=0.1):
        return jax.random.normal(next(keys), shape, jnp.float32) * scale

    p = {}
    p['up'] = (w((out_ch, in_ch)), w((out_ch, 1), 0.01))        # Conv_up.up
    p['short'] = (w((out_ch, in_ch)), w((out_ch, 1), 0.01))     # short_connect
    p['mid'] = (w((out_ch, in_ch)), w((out_ch, 1), 0.01))       # conv1x1_mid
    p['g1'] = (w((5, 3, mid, mid)), w((5, mid, 1), 0.01))       # [1,3] chain (tap,co,ci)
    p['c1'] = (w((out_ch, out_ch)), w((out_ch, 1), 0.01))       # conv1x1_1
    p['g2'] = (w((5, 3, mid, mid)), w((5, mid, 1), 0.01))       # [3,1] chain
    p['c2'] = (w((out_ch, out_ch)), w((out_ch, 1), 0.01))       # conv1x1_2
    p['fc'] = (w((num, mid)), w((num, 1), 0.01))                # fc
    p['fcs'] = (w((6 * mid, num)), w((6 * mid, 1), 0.01))       # 6 fcs stacked (i*mid+c)
    return p


# ------------------- pure-JAX reference (validation only) --------------------

def conv_up_reference(x1, x2, p, in_ch, out_ch):
    mid = out_ch // 6
    B = x1.shape[0]
    PREC = jax.lax.Precision.HIGHEST

    def up2(x):  # bilinear 2x, align_corners=False
        _, _, H, W = x.shape

        def coords(n):
            o = jnp.arange(2 * n, dtype=jnp.float32)
            src = (o + 0.5) / 2.0 - 0.5
            i0f = jnp.floor(src)
            fr = (src - i0f).astype(jnp.float32)
            i0 = jnp.clip(i0f.astype(jnp.int32), 0, n - 1)
            i1 = jnp.clip(i0f.astype(jnp.int32) + 1, 0, n - 1)
            return i0, i1, fr

        h0, h1, fh = coords(H)
        w0, w1, fw = coords(W)
        xh = (x[:, :, h0, :] * (1 - fh)[None, None, :, None]
              + x[:, :, h1, :] * fh[None, None, :, None])
        return (xh[:, :, :, w0] * (1 - fw)[None, None, None, :]
                + xh[:, :, :, w1] * fw[None, None, None, :])

    def conv1x1(x, w, b):
        return (jnp.einsum('oc,bchw->bohw', w, x, precision=PREC)
                + b.reshape(1, -1, 1, 1))

    def inorm_relu(y):
        m = jnp.mean(y, axis=(2, 3), keepdims=True)
        v = jnp.mean((y - m) ** 2, axis=(2, 3), keepdims=True)
        return jnp.maximum((y - m) * lax.rsqrt(v + 1e-5), 0.0)

    def conv_block_k3(x, w3, b, axis):  # w3: (3, co, ci)
        w4 = jnp.transpose(w3, (1, 2, 0))
        if axis == 'w':
            w4 = w4[:, :, None, :]
            pad = ((0, 0), (1, 1))
        else:
            w4 = w4[:, :, :, None]
            pad = ((1, 1), (0, 0))
        y = lax.conv_general_dilated(
            x, w4, (1, 1), pad, dimension_numbers=('NCHW', 'OIHW', 'NCHW'),
            precision=PREC)
        return inorm_relu(y + b.reshape(1, -1, 1, 1))

    x1u = conv1x1(up2(x1), *p['up'])
    x = jnp.concatenate([x1u, x2], axis=1)

    short = conv1x1(x, *p['short'])
    xxx = inorm_relu(conv1x1(x, *p['mid']))
    xs = [xxx[:, i * mid:(i + 1) * mid] for i in range(6)]
    wg1, bg1 = p['g1']
    x0 = xs[0]
    x1b = conv_block_k3(xs[1] + x0, wg1[0], bg1[0], 'w')
    x2b = conv_block_k3(xs[2] + x1b, wg1[1], bg1[1], 'w')
    x3b = conv_block_k3(xs[3] + x2b, wg1[2], bg1[2], 'w')
    x4b = conv_block_k3(xs[4] + x3b, wg1[3], bg1[3], 'w')
    x5b = conv_block_k3(xs[5] + x4b, wg1[4], bg1[4], 'w')
    branches = [x0, x1b, x2b, x3b, x4b, x5b]
    xx = x0 + x1b + x2b + x3b + x4b + x5b

    sk1 = jnp.mean(xx, axis=(2, 3))
    w_fc, b_fc = p['fc']
    w_fcs, b_fcs = p['fcs']
    sk2 = jnp.dot(sk1, w_fc.T, precision=PREC) + b_fc.reshape(-1)
    vecs = (jnp.dot(sk2, w_fcs.T, precision=PREC)
            + b_fcs.reshape(-1)).reshape(B, 6, mid)
    att = jax.nn.softmax(vecs, axis=1)
    xx_cat = jnp.concatenate(
        [branches[i] * att[:, i][:, :, None, None] for i in range(6)], axis=1)

    xxx2 = conv1x1(xx_cat, *p['c1'])
    ys = [xxx2[:, i * mid:(i + 1) * mid] for i in range(6)]
    wg2, bg2 = p['g2']
    y0 = ys[0]
    y1 = conv_block_k3(ys[1], wg2[0], bg2[0], 'h')
    y2 = conv_block_k3(y1 + ys[2], wg2[1], bg2[1], 'h')
    y3 = conv_block_k3(y2 + ys[3], wg2[2], bg2[2], 'h')
    y4 = conv_block_k3(y3 + ys[4], wg2[3], bg2[3], 'h')
    y5 = conv_block_k3(y4 + ys[5], wg2[4], bg2[4], 'h')
    yy = jnp.concatenate([y0, y1, y2, y3, y4, y5], axis=1)
    out = conv1x1(yy, *p['c2']) + short
    return jnp.maximum(out, 0.0)


# ----------------------------------- main -------------------------------------

if __name__ == "__main__":
    B, in_ch, out_ch = 2, 24, 12          # out_ch % 6 == 0, in_ch > out_ch
    H1 = W1 = 8                           # x1 is upsampled 2x -> 16x16
    key = jax.random.PRNGKey(0)
    k1, k2, kp = jax.random.split(key, 3)
    x1 = jax.random.normal(k1, (B, in_ch, H1, W1), jnp.float32)
    x2 = jax.random.normal(k2, (B, in_ch - out_ch, 2 * H1, 2 * W1), jnp.float32)
    params = init_params(kp, in_ch, out_ch)

    fwd = jax.jit(functools.partial(conv_up_forward, in_ch=in_ch, out_ch=out_ch))
    out = fwd(x1, x2, params)
    jax.block_until_ready(out)
    assert out.shape == (B, out_ch, 2 * H1, 2 * W1), out.shape
    assert bool(jnp.all(jnp.isfinite(out)))

    ref = jax.jit(functools.partial(conv_up_reference,
                                    in_ch=in_ch, out_ch=out_ch))(x1, x2, params)
    err = float(jnp.max(jnp.abs(out - ref)))
    assert err < 2e-2, f"mismatch vs pure-JAX reference: {err}"
    print("KERNEL_OK")
</pallas_src>

<mosaic_0001>
module attributes {stable_mosaic.version = 11 : i64} {
  func.func @_conv_up_kernel(%arg0: i32, %arg1: memref<1x24x64xf32, #tpu.memory_space<vmem>>, %arg2: memref<1x12x256xf32, #tpu.memory_space<vmem>>, %arg3: memref<64x256xf32, #tpu.memory_space<vmem>>, %arg4: memref<12x24xf32, #tpu.memory_space<vmem>>, %arg5: memref<12x1xf32, #tpu.memory_space<vmem>>, %arg6: memref<24x12xf32, #tpu.memory_space<vmem>>, %arg7: memref<24x12xf32, #tpu.memory_space<vmem>>, %arg8: memref<24x1xf32, #tpu.memory_space<vmem>>, %arg9: memref<5x3x2x2xf32, #tpu.memory_space<vmem>>, %arg10: memref<5x2x1xf32, #tpu.memory_space<vmem>>, %arg11: memref<12x12xf32, #tpu.memory_space<vmem>>, %arg12: memref<12x1xf32, #tpu.memory_space<vmem>>, %arg13: memref<12x2xf32, #tpu.memory_space<vmem>>, %arg14: memref<12x1xf32, #tpu.memory_space<vmem>>, %arg15: memref<5x3x2x2xf32, #tpu.memory_space<vmem>>, %arg16: memref<5x2x1xf32, #tpu.memory_space<vmem>>, %arg17: memref<12x12xf32, #tpu.memory_space<vmem>>, %arg18: memref<12x1xf32, #tpu.memory_space<vmem>>, %arg19: memref<1x12x256xf32, #tpu.memory_space<vmem>>, %arg20: memref<12x256xf32, #tpu.memory_space<vmem>>) attributes {dimension_semantics = [#tpu.dimension_semantics<parallel>], iteration_bounds = array<i64: 2>, scalar_prefetch = 0 : i64, scratch_operands = 1 : i64, tpu.core_type = #tpu.core_type<tc>, window_params = [{transform_indices = @transform_0, window_bounds = array<i64: 1, 24, 64>}, {transform_indices = @transform_1, window_bounds = array<i64: 1, 12, 256>}, {pipeline_mode = #tpu.pipeline_mode<synchronous>, transform_indices = @transform_2, window_bounds = array<i64: 64, 256>}, {pipeline_mode = #tpu.pipeline_mode<synchronous>, transform_indices = @transform_3, window_bounds = array<i64: 12, 24>}, {pipeline_mode = #tpu.pipeline_mode<synchronous>, transform_indices = @transform_4, window_bounds = array<i64: 12, 1>}, {pipeline_mode = #tpu.pipeline_mode<synchronous>, transform_indices = @transform_5, window_bounds = array<i64: 24, 12>}, {pipeline_mode = #tpu.pipeline_mode<synchronous>, transform_indices = @transform_6, window_bounds = array<i64: 24, 12>}, {pipeline_mode = #tpu.pipeline_mode<synchronous>, transform_indices = @transform_7, window_bounds = array<i64: 24, 1>}, {pipeline_mode = #tpu.pipeline_mode<synchronous>, transform_indices = @transform_8, window_bounds = array<i64: 5, 3, 2, 2>}, {pipeline_mode = #tpu.pipeline_mode<synchronous>, transform_indices = @transform_9, window_bounds = array<i64: 5, 2, 1>}, {pipeline_mode = #tpu.pipeline_mode<synchronous>, transform_indices = @transform_10, window_bounds = array<i64: 12, 12>}, {pipeline_mode = #tpu.pipeline_mode<synchronous>, transform_indices = @transform_11, window_bounds = array<i64: 12, 1>}, {pipeline_mode = #tpu.pipeline_mode<synchronous>, transform_indices = @transform_12, window_bounds = array<i64: 12, 2>}, {pipeline_mode = #tpu.pipeline_mode<synchronous>, transform_indices = @transform_13, window_bounds = array<i64: 12, 1>}, {pipeline_mode = #tpu.pipeline_mode<synchronous>, transform_indices = @transform_14, window_bounds = array<i64: 5, 3, 2, 2>}, {pipeline_mode = #tpu.pipeline_mode<synchronous>, transform_indices = @transform_15, window_bounds = array<i64: 5, 2, 1>}, {pipeline_mode = #tpu.pipeline_mode<synchronous>, transform_indices = @transform_16, window_bounds = array<i64: 12, 12>}, {pipeline_mode = #tpu.pipeline_mode<synchronous>, transform_indices = @transform_17, window_bounds = array<i64: 12, 1>}, {transform_indices = @transform_18, window_bounds = array<i64: 1, 12, 256>}]} {
    %c0 = arith.constant 0 : index
    %c0_0 = arith.constant 0 : index
    %c0_1 = arith.constant 0 : index
    %0 = vector.load %arg1[%c0, %c0_0, %c0_1] : memref<1x24x64xf32, #tpu.memory_space<vmem>>, vector<1x24x64xf32>
    %1 = vector.shape_cast %0 : vector<1x24x64xf32> to vector<24x64xf32>
    %c0_2 = arith.constant 0 : index
    %c0_3 = arith.constant 0 : index
    %c0_4 = arith.constant 0 : index
    %2 = vector.load %arg2[%c0_2, %c0_3, %c0_4] : memref<1x12x256xf32, #tpu.memory_space<vmem>>, vector<1x12x256xf32>
    %3 = vector.shape_cast %2 : vector<1x12x256xf32> to vector<12x256xf32>
    %c0_5 = arith.constant 0 : index
    %c0_6 = arith.constant 0 : index
    %4 = vector.load %arg4[%c0_5, %c0_6] : memref<12x24xf32, #tpu.memory_space<vmem>>, vector<12x24xf32>
    %cst = arith.constant dense<0.000000e+00> : vector<12x64xf32>
    %5 = tpu.matmul %4, %1, %cst {dimension_numbers = #tpu.dot_dimension_numbers<[1], [0], [0], [1], [0, 0, 1, 1], [], []>} : vector<12x24xf32>, vector<24x64xf32>, vector<12x64xf32> -> vector<12x64xf32>
    %c0_7 = arith.constant 0 : index
    %c0_8 = arith.constant 0 : index
    %6 = vector.load %arg5[%c0_7, %c0_8] : memref<12x1xf32, #tpu.memory_space<vmem>>, vector<12x1xf32>
    %7 = vector.broadcast %6 : vector<12x1xf32> to vector<12x64xf32>
    %8 = arith.addf %5, %7 : vector<12x64xf32>
    %c0_9 = arith.constant 0 : index
    %c0_10 = arith.constant 0 : index
    %9 = vector.load %arg3[%c0_9, %c0_10] : memref<64x256xf32, #tpu.memory_space<vmem>>, vector<64x256xf32>
    %cst_11 = arith.constant dense<0.000000e+00> : vector<12x256xf32>
    %10 = tpu.matmul %8, %9, %cst_11 {dimension_numbers = #tpu.dot_dimension_numbers<[1], [0], [0], [1], [0, 0, 1, 1], [], []>} : vector<12x64xf32>, vector<64x256xf32>, vector<12x256xf32> -> vector<12x256xf32>
    %c0_12 = arith.constant 0 : index
    %c0_13 = arith.constant 0 : index
    %11 = vector.load %arg6[%c0_12, %c0_13] : memref<24x12xf32, #tpu.memory_space<vmem>>, vector<24x12xf32>
    %cst_14 = arith.constant dense<0.000000e+00> : vector<24x256xf32>
    %12 = tpu.matmul %11, %10, %cst_14 {dimension_numbers = #tpu.dot_dimension_numbers<[1], [0], [0], [1], [0, 0, 1, 1], [], []>} : vector<24x12xf32>, vector<12x256xf32>, vector<24x256xf32> -> vector<24x256xf32>
    %c0_15 = arith.constant 0 : index
    %c0_16 = arith.constant 0 : index
    %13 = vector.load %arg7[%c0_15, %c0_16] : memref<24x12xf32, #tpu.memory_space<vmem>>, vector<24x12xf32>
    %cst_17 = arith.constant dense<0.000000e+00> : vector<24x256xf32>
    %14 = tpu.matmul %13, %3, %cst_17 {dimension_numbers = #tpu.dot_dimension_numbers<[1], [0], [0], [1], [0, 0, 1, 1], [], []>} : vector<24x12xf32>, vector<12x256xf32>, vector<24x256xf32> -> vector<24x256xf32>
    %15 = arith.addf %12, %14 : vector<24x256xf32>
    %c0_18 = arith.constant 0 : index
    %c0_19 = arith.constant 0 : index
    %16 = vector.load %arg8[%c0_18, %c0_19] : memref<24x1xf32, #tpu.memory_space<vmem>>, vector<24x1xf32>
    %17 = vector.broadcast %16 : vector<24x1xf32> to vector<24x256xf32>
    %18 = arith.addf %15, %17 : vector<24x256xf32>
    %19 = vector.extract_strided_slice %18 {offsets = [0, 0], sizes = [12, 256], strides = [1, 1]} : vector<24x256xf32> to vector<12x256xf32>
    %20 = vector.extract_strided_slice %18 {offsets = [12, 0], sizes = [12, 256], strides = [1, 1]} : vector<24x256xf32> to vector<12x256xf32>
    %21 = arith.mulf %20, %20 : vector<12x256xf32>
    %22 = tpu.concatenate %20, %21 in 0 : vector<12x256xf32>, vector<12x256xf32> -> vector<24x256xf32>
    %cst_20 = arith.constant dense<0.000000e+00> : vector<24xf32>
    %23 = vector.multi_reduction <add>, %22, %cst_20 [1] : vector<24x256xf32> to vector<24xf32>
    %24 = vector.shape_cast %23 : vector<24xf32> to vector<24x1xf32>
    %cst_21 = arith.constant 2.560000e+02 : f32
    %25 = vector.broadcast %cst_21 : f32 to vector<24x1xf32>
    %26 = arith.divf %24, %25 : vector<24x1xf32>
    %27 = vector.extract_strided_slice %26 {offsets = [0, 0], sizes = [12, 1], strides = [1, 1]} : vector<24x1xf32> to vector<12x1xf32>
    %28 = vector.extract_strided_slice %26 {offsets = [12, 0], sizes = [12, 1], strides = [1, 1]} : vector<24x1xf32> to vector<12x1xf32>
    %29 = arith.mulf %27, %27 : vector<12x1xf32>
    %30 = arith.subf %28, %29 : vector<12x1xf32>
    %cst_22 = arith.constant 0.000000e+00 : f32
    %31 = vector.broadcast %cst_22 : f32 to vector<12x1xf32>
    %32 = arith.maximumf %30, %31 : vector<12x1xf32>
    %33 = vector.broadcast %27 : vector<12x1xf32> to vector<12x256xf32>
    %34 = arith.subf %20, %33 : vector<12x256xf32>
    %cst_23 = arith.constant 9.99999974E-6 : f32
    %35 = vector.broadcast %cst_23 : f32 to vector<12x1xf32>
    %36 = arith.addf %32, %35 : vector<12x1xf32>
    %37 = math.rsqrt %36 : vector<12x1xf32>
    %38 = vector.broadcast %37 : vector<12x1xf32> to vector<12x256xf32>
    %39 = arith.mulf %34, %38 : vector<12x256xf32>
    %cst_24 = arith.constant 0.000000e+00 : f32
    %40 = vector.broadcast %cst_24 : f32 to vector<12x256xf32>
    %41 = arith.maximumf %39, %40 : vector<12x256xf32>
    %42 = tpu.iota {dimensions = array<i32: 1>} : vector<1x256xi32>
    %c16_i32 = arith.constant 16 : i32
    %c0_i32 = arith.constant 0 : i32
    %43 = arith.cmpi eq, %c16_i32, %c0_i32 : i32
    %c1_i32 = arith.constant 1 : i32
    %44 = arith.select %43, %c1_i32, %c16_i32 : i32
    %45 = vector.broadcast %44 : i32 to vector<1x256xi32>
    %46 = arith.remsi %42, %45 : vector<1x256xi32>
    %c0_i32_25 = arith.constant 0 : i32
    %47 = vector.broadcast %c0_i32_25 : i32 to vector<1x256xi32>
    %48 = arith.cmpi ne, %46, %47 : vector<1x256xi32>
    %c0_i32_26 = arith.constant 0 : i32
    %49 = vector.broadcast %c0_i32_26 : i32 to vector<1x256xi32>
    %50 = arith.cmpi slt, %46, %49 : vector<1x256xi32>
    %c0_i32_27 = arith.constant 0 : i32
    %51 = arith.cmpi slt, %44, %c0_i32_27 : i32
    %52 = vector.broadcast %51 : i1 to vector<1x256xi1>
    %53 = vector.broadcast %52 : vector<1x256xi1> to vector<1x256xi1>
    %54 = arith.xori %50, %53 : vector<1x256xi1>
    %55 = arith.andi %54, %48 : vector<1x256xi1>
    %56 = vector.broadcast %44 : i32 to vector<1x256xi32>
    %57 = arith.addi %46, %56 : vector<1x256xi32>
    %58 = arith.select %55, %57, %46 : vector<1x256xi1>, vector<1x256xi32>
    %c1_i32_28 = arith.constant 1 : i32
    %59 = vector.broadcast %c1_i32_28 : i32 to vector<1x256xi32>
    %60 = arith.cmpi sge, %58, %59 : vector<1x256xi32>
    %61 = arith.extui %60 : vector<1x256xi1> to vector<1x256xi32>
    %62 = arith.sitofp %61 : vector<1x256xi32> to vector<1x256xf32>
    %c14_i32 = arith.constant 14 : i32
    %63 = vector.broadcast %c14_i32 : i32 to vector<1x256xi32>
    %64 = arith.cmpi sle, %58, %63 : vector<1x256xi32>
    %65 = arith.extui %64 : vector<1x256xi1> to vector<1x256xi32>
    %66 = arith.sitofp %65 : vector<1x256xi32> to vector<1x256xf32>
    %c16_i32_29 = arith.constant 16 : i32
    %67 = vector.broadcast %c16_i32_29 : i32 to vector<1x256xi32>
    %68 = arith.cmpi sge, %42, %67 : vector<1x256xi32>
    %69 = arith.extui %68 : vector<1x256xi1> to vector<1x256xi32>
    %70 = arith.sitofp %69 : vector<1x256xi32> to vector<1x256xf32>
    %c240_i32 = arith.constant 240 : i32
    %71 = vector.broadcast %c240_i32 : i32 to vector<1x256xi32>
    %72 = arith.cmpi slt, %42, %71 : vector<1x256xi32>
    %73 = arith.extui %72 : vector<1x256xi1> to vector<1x256xi32>
    %74 = arith.sitofp %73 : vector<1x256xi32> to vector<1x256xf32>
    %75 = vector.extract_strided_slice %41 {offsets = [0, 0], sizes = [2, 256], strides = [1, 1]} : vector<12x256xf32> to vector<2x256xf32>
    %76 = vector.extract_strided_slice %41 {offsets = [2, 0], sizes = [2, 256], strides = [1, 1]} : vector<12x256xf32> to vector<2x256xf32>
    %77 = vector.extract_strided_slice %41 {offsets = [4, 0], sizes = [2, 256], strides = [1, 1]} : vector<12x256xf32> to vector<2x256xf32>
    %78 = vector.extract_strided_slice %41 {offsets = [6, 0], sizes = [2, 256], strides = [1, 1]} : vector<12x256xf32> to vector<2x256xf32>
    %79 = vector.extract_strided_slice %41 {offsets = [8, 0], sizes = [2, 256], strides = [1, 1]} : vector<12x256xf32> to vector<2x256xf32>
    %80 = vector.extract_strided_slice %41 {offsets = [10, 0], sizes = [2, 256], strides = [1, 1]} : vector<12x256xf32> to vector<2x256xf32>
    %81 = arith.addf %76, %75 : vector<2x256xf32>
    %c1_i32_30 = arith.constant 1 : i32
    %82 = tpu.dynamic_rotate %81 by %c1_i32_30 dim 1 : vector<2x256xf32>, i32 -> vector<2x256xf32>
    %83 = vector.broadcast %62 : vector<1x256xf32> to vector<2x256xf32>
    %84 = arith.mulf %82, %83 : vector<2x256xf32>
    %c255_i32 = arith.constant 255 : i32
    %85 = tpu.dynamic_rotate %81 by %c255_i32 dim 1 : vector<2x256xf32>, i32 -> vector<2x256xf32>
    %86 = vector.broadcast %66 : vector<1x256xf32> to vector<2x256xf32>
    %87 = arith.mulf %85, %86 : vector<2x256xf32>
    %c0_31 = arith.constant 0 : index
    %c0_32 = arith.constant 0 : index
    %c0_33 = arith.constant 0 : index
    %c0_34 = arith.constant 0 : index
    %88 = vector.load %arg9[%c0_31, %c0_32, %c0_33, %c0_34] : memref<5x3x2x2xf32, #tpu.memory_space<vmem>>, vector<1x3x2x2xf32>
    %89 = vector.shape_cast %88 : vector<1x3x2x2xf32> to vector<3x2x2xf32>
    %c0_35 = arith.constant 0 : index
    %c0_36 = arith.constant 0 : index
    %c0_37 = arith.constant 0 : index
    %90 = vector.load %arg10[%c0_35, %c0_36, %c0_37] : memref<5x2x1xf32, #tpu.memory_space<vmem>>, vector<1x2x1xf32>
    %91 = vector.shape_cast %90 : vector<1x2x1xf32> to vector<2x1xf32>
    %92 = vector.extract_strided_slice %89 {offsets = [0, 0, 0], sizes = [1, 2, 1], strides = [1, 1, 1]} : vector<3x2x2xf32> to vector<1x2x1xf32>
    %93 = vector.shape_cast %92 : vector<1x2x1xf32> to vector<2x1xf32>
    %94 = vector.extract_strided_slice %84 {offsets = [0, 0], sizes = [1, 256], strides = [1, 1]} : vector<2x256xf32> to vector<1x256xf32>
    %95 = vector.broadcast %93 : vector<2x1xf32> to vector<2x256xf32>
    %96 = vector.broadcast %94 : vector<1x256xf32> to vector<2x256xf32>
    %97 = arith.mulf %95, %96 : vector<2x256xf32>
    %98 = vector.broadcast %91 : vector<2x1xf32> to vector<2x256xf32>
    %99 = arith.addf %98, %97 : vector<2x256xf32>
    %100 = vector.extract_strided_slice %89 {offsets = [0, 0, 1], sizes = [1, 2, 1], strides = [1, 1, 1]} : vector<3x2x2xf32> to vector<1x2x1xf32>
    %101 = vector.shape_cast %100 : vector<1x2x1xf32> to vector<2x1xf32>
    %102 = vector.extract_strided_slice %84 {offsets = [1, 0], sizes = [1, 256], strides = [1, 1]} : vector<2x256xf32> to vector<1x256xf32>
    %103 = vector.broadcast %101 : vector<2x1xf32> to vector<2x256xf32>
    %104 = vector.broadcast %102 : vector<1x256xf32> to vector<2x256xf32>
    %105 = arith.mulf %103, %104 : vector<2x256xf32>
    %106 = arith.addf %99, %105 : vector<2x256xf32>
    %107 = vector.extract_strided_slice %89 {offsets = [1, 0, 0], sizes = [1, 2, 1], strides = [1, 1, 1]} : vector<3x2x2xf32> to vector<1x2x1xf32>
    %108 = vector.shape_cast %107 : vector<1x2x1xf32> to vector<2x1xf32>
    %109 = vector.extract_strided_slice %81 {offsets = [0, 0], sizes = [1, 256], strides = [1, 1]} : vector<2x256xf32> to vector<1x256xf32>
    %110 = vector.broadcast %108 : vector<2x1xf32> to vector<2x256xf32>
    %111 = vector.broadcast %109 : vector<1x256xf32> to vector<2x256xf32>
    %112 = arith.mulf %110, %111 : vector<2x256xf32>
    %113 = arith.addf %106, %112 : vector<2x256xf32>
    %114 = vector.extract_strided_slice %89 {offsets = [1, 0, 1], sizes = [1, 2, 1], strides = [1, 1, 1]} : vector<3x2x2xf32> to vector<1x2x1xf32>
    %115 = vector.shape_cast %114 : vector<1x2x1xf32> to vector<2x1xf32>
    %116 = vector.extract_strided_slice %81 {offsets = [1, 0], sizes = [1, 256], strides = [1, 1]} : vector<2x256xf32> to vector<1x256xf32>
    %117 = vector.broadcast %115 : vector<2x1xf32> to vector<2x256xf32>
    %118 = vector.broadcast %116 : vector<1x256xf32> to vector<2x256xf32>
    %119 = arith.mulf %117, %118 : vector<2x256xf32>
    %120 = arith.addf %113, %119 : vector<2x256xf32>
    %121 = vector.extract_strided_slice %89 {offsets = [2, 0, 0], sizes = [1, 2, 1], strides = [1, 1, 1]} : vector<3x2x2xf32> to vector<1x2x1xf32>
    %122 = vector.shape_cast %121 : vector<1x2x1xf32> to vector<2x1xf32>
    %123 = vector.extract_strided_slice %87 {offsets = [0, 0], sizes = [1, 256], strides = [1, 1]} : vector<2x256xf32> to vector<1x256xf32>
    %124 = vector.broadcast %122 : vector<2x1xf32> to vector<2x256xf32>
    %125 = vector.broadcast %123 : vector<1x256xf32> to vector<2x256xf32>
    %126 = arith.mulf %124, %125 : vector<2x256xf32>
    %127 = arith.addf %120, %126 : vector<2x256xf32>
    %128 = vector.extract_strided_slice %89 {offsets = [2, 0, 1], sizes = [1, 2, 1], strides = [1, 1, 1]} : vector<3x2x2xf32> to vector<1x2x1xf32>
    %129 = vector.shape_cast %128 : vector<1x2x1xf32> to vector<2x1xf32>
    %130 = vector.extract_strided_slice %87 {offsets = [1, 0], sizes = [1, 256], strides = [1, 1]} : vector<2x256xf32> to vector<1x256xf32>
    %131 = vector.broadcast %129 : vector<2x1xf32> to vector<2x256xf32>
    %132 = vector.broadcast %130 : vector<1x256xf32> to vector<2x256xf32>
    %133 = arith.mulf %131, %132 : vector<2x256xf32>
    %134 = arith.addf %127, %133 : vector<2x256xf32>
    %135 = arith.mulf %134, %134 : vector<2x256xf32>
    %136 = tpu.concatenate %134, %135 in 0 : vector<2x256xf32>, vector<2x256xf32> -> vector<4x256xf32>
    %cst_38 = arith.constant dense<0.000000e+00> : vector<4xf32>
    %137 = vector.multi_reduction <add>, %136, %cst_38 [1] : vector<4x256xf32> to vector<4xf32>
    %138 = vector.shape_cast %137 : vector<4xf32> to vector<4x1xf32>
    %cst_39 = arith.constant 2.560000e+02 : f32
    %139 = vector.broadcast %cst_39 : f32 to vector<4x1xf32>
    %140 = arith.divf %138, %139 : vector<4x1xf32>
    %141 = vector.extract_strided_slice %140 {offsets = [0, 0], sizes = [2, 1], strides = [1, 1]} : vector<4x1xf32> to vector<2x1xf32>
    %142 = vector.extract_strided_slice %140 {offsets = [2, 0], sizes = [2, 1], strides = [1, 1]} : vector<4x1xf32> to vector<2x1xf32>
    %143 = arith.mulf %141, %141 : vector<2x1xf32>
    %144 = arith.subf %142, %143 : vector<2x1xf32>
    %cst_40 = arith.constant 0.000000e+00 : f32
    %145 = vector.broadcast %cst_40 : f32 to vector<2x1xf32>
    %146 = arith.maximumf %144, %145 : vector<2x1xf32>
    %147 = vector.broadcast %141 : vector<2x1xf32> to vector<2x256xf32>
    %148 = arith.subf %134, %147 : vector<2x256xf32>
    %cst_41 = arith.constant 9.99999974E-6 : f32
    %149 = vector.broadcast %cst_41 : f32 to vector<2x1xf32>
    %150 = arith.addf %146, %149 : vector<2x1xf32>
    %151 = math.rsqrt %150 : vector<2x1xf32>
    %152 = vector.broadcast %151 : vector<2x1xf32> to vector<2x256xf32>
    %153 = arith.mulf %148, %152 : vector<2x256xf32>
    %cst_42 = arith.constant 0.000000e+00 : f32
    %154 = vector.broadcast %cst_42 : f32 to vector<2x256xf32>
    %155 = arith.maximumf %153, %154 : vector<2x256xf32>
    %156 = arith.addf %77, %155 : vector<2x256xf32>
    %c1_i32_43 = arith.constant 1 : i32
    %157 = tpu.dynamic_rotate %156 by %c1_i32_43 dim 1 : vector<2x256xf32>, i32 -> vector<2x256xf32>
    %158 = vector.broadcast %62 : vector<1x256xf32> to vector<2x256xf32>
    %159 = arith.mulf %157, %158 : vector<2x256xf32>
    %c255_i32_44 = arith.constant 255 : i32
    %160 = tpu.dynamic_rotate %156 by %c255_i32_44 dim 1 : vector<2x256xf32>, i32 -> vector<2x256xf32>
    %161 = vector.broadcast %66 : vector<1x256xf32> to vector<2x256xf32>
    %162 = arith.mulf %160, %161 : vector<2x256xf32>
    %c1 = arith.constant 1 : index
    %c0_45 = arith.constant 0 : index
    %c0_46 = arith.constant 0 : index
    %c0_47 = arith.constant 0 : index
    %163 = vector.load %arg9[%c1, %c0_45, %c0_46, %c0_47] : memref<5x3x2x2xf32, #tpu.memory_space<vmem>>, vector<1x3x2x2xf32>
    %164 = vector.shape_cast %163 : vector<1x3x2x2xf32> to vector<3x2x2xf32>
    %c1_48 = arith.constant 1 : index
    %c0_49 = arith.constant 0 : index
    %c0_50 = arith.constant 0 : index
    %165 = vector.load %arg10[%c1_48, %c0_49, %c0_50] : memref<5x2x1xf32, #tpu.memory_space<vmem>>, vector<1x2x1xf32>
    %166 = vector.shape_cast %165 : vector<1x2x1xf32> to vector<2x1xf32>
    %167 = vector.extract_strided_slice %164 {offsets = [0, 0, 0], sizes = [1, 2, 1], strides = [1, 1, 1]} : vector<3x2x2xf32> to vector<1x2x1xf32>
    %168 = vector.shape_cast %167 : vector<1x2x1xf32> to vector<2x1xf32>
    %169 = vector.extract_strided_slice %159 {offsets = [0, 0], sizes = [1, 256], strides = [1, 1]} : vector<2x256xf32> to vector<1x256xf32>
    %170 = vector.broadcast %168 : vector<2x1xf32> to vector<2x256xf32>
    %171 = vector.broadcast %169 : vector<1x256xf32> to vector<2x256xf32>
    %172 = arith.mulf %170, %171 : vector<2x256xf32>
    %173 = vector.broadcast %166 : vector<2x1xf32> to vector<2x256xf32>
    %174 = arith.addf %173, %172 : vector<2x256xf32>
    %175 = vector.extract_strided_slice %164 {offsets = [0, 0, 1], sizes = [1, 2, 1], strides = [1, 1, 1]} : vector<3x2x2xf32> to vector<1x2x1xf32>
    %176 = vector.shape_cast %175 : vector<1x2x1xf32> to vector<2x1xf32>
    %177 = vector.extract_strided_slice %159 {offsets = [1, 0], sizes = [1, 256], strides = [1, 1]} : vector<2x256xf32> to vector<1x256xf32>
    %178 = vector.broadcast %176 : vector<2x1xf32> to vector<2x256xf32>
    %179 = vector.broadcast %177 : vector<1x256xf32> to vector<2x256xf32>
    %180 = arith.mulf %178, %179 : vector<2x256xf32>
    %181 = arith.addf %174, %180 : vector<2x256xf32>
    %182 = vector.extract_strided_slice %164 {offsets = [1, 0, 0], sizes = [1, 2, 1], strides = [1, 1, 1]} : vector<3x2x2xf32> to vector<1x2x1xf32>
    %183 = vector.shape_cast %182 : vector<1x2x1xf32> to vector<2x1xf32>
    %184 = vector.extract_strided_slice %156 {offsets = [0, 0], sizes = [1, 256], strides = [1, 1]} : vector<2x256xf32> to vector<1x256xf32>
    %185 = vector.broadcast %183 : vector<2x1xf32> to vector<2x256xf32>
    %186 = vector.broadcast %184 : vector<1x256xf32> to vector<2x256xf32>
    %187 = arith.mulf %185, %186 : vector<2x256xf32>
    %188 = arith.addf %181, %187 : vector<2x256xf32>
    %189 = vector.extract_strided_slice %164 {offsets = [1, 0, 1], sizes = [1, 2, 1], strides = [1, 1, 1]} : vector<3x2x2xf32> to vector<1x2x1xf32>
    %190 = vector.shape_cast %189 : vector<1x2x1xf32> to vector<2x1xf32>
    %191 = vector.extract_strided_slice %156 {offsets = [1, 0], sizes = [1, 256], strides = [1, 1]} : vector<2x256xf32> to vector<1x256xf32>
    %192 = vector.broadcast %190 : vector<2x1xf32> to vector<2x256xf32>
    %193 = vector.broadcast %191 : vector<1x256xf32> to vector<2x256xf32>
    %194 = arith.mulf %192, %193 : vector<2x256xf32>
    %195 = arith.addf %188, %194 : vector<2x256xf32>
    %196 = vector.extract_strided_slice %164 {offsets = [2, 0, 0], sizes = [1, 2, 1], strides = [1, 1, 1]} : vector<3x2x2xf32> to vector<1x2x1xf32>
    %197 = vector.shape_cast %196 : vector<1x2x1xf32> to vector<2x1xf32>
    %198 = vector.extract_strided_slice %162 {offsets = [0, 0], sizes = [1, 256], strides = [1, 1]} : vector<2x256xf32> to vector<1x256xf32>
    %199 = vector.broadcast %197 : vector<2x1xf32> to vector<2x256xf32>
    %200 = vector.broadcast %198 : vector<1x256xf32> to vector<2x256xf32>
    %201 = arith.mulf %199, %200 : vector<2x256xf32>
    %202 = arith.addf %195, %201 : vector<2x256xf32>
    %203 = vector.extract_strided_slice %164 {offsets = [2, 0, 1], sizes = [1, 2, 1], strides = [1, 1, 1]} : vector<3x2x2xf32> to vector<1x2x1xf32>
    %204 = vector.shape_cast %203 : vector<1x2x1xf32> to vector<2x1xf32>
    %205 = vector.extract_strided_slice %162 {offsets = [1, 0], sizes = [1, 256], strides = [1, 1]} : vector<2x256xf32> to vector<1x256xf32>
    %206 = vector.broadcast %204 : vector<2x1xf32> to vector<2x256xf32>
    %207 = vector.broadcast %205 : vector<1x256xf32> to vector<2x256xf32>
    %208 = arith.mulf %206, %207 : vector<2x256xf32>
    %209 = arith.addf %202, %208 : vector<2x256xf32>
    %210 = arith.mulf %209, %209 : vector<2x256xf32>
    %211 = tpu.concatenate %209, %210 in 0 : vector<2x256xf32>, vector<2x256xf32> -> vector<4x256xf32>
    %cst_51 = arith.constant dense<0.000000e+00> : vector<4xf32>
    %212 = vector.multi_reduction <add>, %211, %cst_51 [1] : vector<4x256xf32> to vector<4xf32>
    %213 = vector.shape_cast %212 : vector<4xf32> to vector<4x1xf32>
    %cst_52 = arith.constant 2.560000e+02 : f32
    %214 = vector.broadcast %cst_52 : f32 to vector<4x1xf32>
    %215 = arith.divf %213, %214 : vector<4x1xf32>
    %216 = vector.extract_strided_slice %215 {offsets = [0, 0], sizes = [2, 1], strides = [1, 1]} : vector<4x1xf32> to vector<2x1xf32>
    %217 = vector.extract_strided_slice %215 {offsets = [2, 0], sizes = [2, 1], strides = [1, 1]} : vector<4x1xf32> to vector<2x1xf32>
    %218 = arith.mulf %216, %216 : vector<2x1xf32>
    %219 = arith.subf %217, %218 : vector<2x1xf32>
    %cst_53 = arith.constant 0.000000e+00 : f32
    %220 = vector.broadcast %cst_53 : f32 to vector<2x1xf32>
    %221 = arith.maximumf %219, %220 : vector<2x1xf32>
    %222 = vector.broadcast %216 : vector<2x1xf32> to vector<2x256xf32>
    %223 = arith.subf %209, %222 : vector<2x256xf32>
    %cst_54 = arith.constant 9.99999974E-6 : f32
    %224 = vector.broadcast %cst_54 : f32 to vector<2x1xf32>
    %225 = arith.addf %221, %224 : vector<2x1xf32>
    %226 = math.rsqrt %225 : vector<2x1xf32>
    %227 = vector.broadcast %226 : vector<2x1xf32> to vector<2x256xf32>
    %228 = arith.mulf %223, %227 : vector<2x256xf32>
    %cst_55 = arith.constant 0.000000e+00 : f32
    %229 = vector.broadcast %cst_55 : f32 to vector<2x256xf32>
    %230 = arith.maximumf %228, %229 : vector<2x256xf32>
    %231 = arith.addf %78, %230 : vector<2x256xf32>
    %c1_i32_56 = arith.constant 1 : i32
    %232 = tpu.dynamic_rotate %231 by %c1_i32_56 dim 1 : vector<2x256xf32>, i32 -> vector<2x256xf32>
    %233 = vector.broadcast %62 : vector<1x256xf32> to vector<2x256xf32>
    %234 = arith.mulf %232, %233 : vector<2x256xf32>
    %c255_i32_57 = arith.constant 255 : i32
    %235 = tpu.dynamic_rotate %231 by %c255_i32_57 dim 1 : vector<2x256xf32>, i32 -> vector<2x256xf32>
    %236 = vector.broadcast %66 : vector<1x256xf32> to vector<2x256xf32>
    %237 = arith.mulf %235, %236 : vector<2x256xf32>
    %c2 = arith.constant 2 : index
    %c0_58 = arith.constant 0 : index
    %c0_59 = arith.constant 0 : index
    %c0_60 = arith.constant 0 : index
    %238 = vector.load %arg9[%c2, %c0_58, %c0_59, %c0_60] : memref<5x3x2x2xf32, #tpu.memory_space<vmem>>, vector<1x3x2x2xf32>
    %239 = vector.shape_cast %238 : vector<1x3x2x2xf32> to vector<3x2x2xf32>
    %c2_61 = arith.constant 2 : index
    %c0_62 = arith.constant 0 : index
    %c0_63 = arith.constant 0 : index
    %240 = vector.load %arg10[%c2_61, %c0_62, %c0_63] : memref<5x2x1xf32, #tpu.memory_space<vmem>>, vector<1x2x1xf32>
    %241 = vector.shape_cast %240 : vector<1x2x1xf32> to vector<2x1xf32>
    %242 = vector.extract_strided_slice %239 {offsets = [0, 0, 0], sizes = [1, 2, 1], strides = [1, 1, 1]} : vector<3x2x2xf32> to vector<1x2x1xf32>
    %243 = vector.shape_cast %242 : vector<1x2x1xf32> to vector<2x1xf32>
    %244 = vector.extract_strided_slice %234 {offsets = [0, 0], sizes = [1, 256], strides = [1, 1]} : vector<2x256xf32> to vector<1x256xf32>
    %245 = vector.broadcast %243 : vector<2x1xf32> to vector<2x256xf32>
    %246 = vector.broadcast %244 : vector<1x256xf32> to vector<2x256xf32>
    %247 = arith.mulf %245, %246 : vector<2x256xf32>
    %248 = vector.broadcast %241 : vector<2x1xf32> to vector<2x256xf32>
    %249 = arith.addf %248, %247 : vector<2x256xf32>
    %250 = vector.extract_strided_slice %239 {offsets = [0, 0, 1], sizes = [1, 2, 1], strides = [1, 1, 1]} : vector<3x2x2xf32> to vector<1x2x1xf32>
    %251 = vector.shape_cast %250 : vector<1x2x1xf32> to vector<2x1xf32>
    %252 = vector.extract_strided_slice %234 {offsets = [1, 0], sizes = [1, 256], strides = [1, 1]} : vector<2x256xf32> to vector<1x256xf32>
    %253 = vector.broadcast %251 : vector<2x1xf32> to vector<2x256xf32>
    %254 = vector.broadcast %252 : vector<1x256xf32> to vector<2x256xf32>
    %255 = arith.mulf %253, %254 : vector<2x256xf32>
    %256 = arith.addf %249, %255 : vector<2x256xf32>
    %257 = vector.extract_strided_slice %239 {offsets = [1, 0, 0], sizes = [1, 2, 1], strides = [1, 1, 1]} : vector<3x2x2xf32> to vector<1x2x1xf32>
    %258 = vector.shape_cast %257 : vector<1x2x1xf32> to vector<2x1xf32>
    %259 = vector.extract_strided_slice %231 {offsets = [0, 0], sizes = [1, 256], strides = [1, 1]} : vector<2x256xf32> to vector<1x256xf32>
    %260 = vector.broadcast %258 : vector<2x1xf32> to vector<2x256xf32>
    %261 = vector.broadcast %259 : vector<1x256xf32> to vector<2x256xf32>
    %262 = arith.mulf %260, %261 : vector<2x256xf32>
    %263 = arith.addf %256, %262 : vector<2x256xf32>
    %264 = vector.extract_strided_slice %239 {offsets = [1, 0, 1], sizes = [1, 2, 1], strides = [1, 1, 1]} : vector<3x2x2xf32> to vector<1x2x1xf32>
    %265 = vector.shape_cast %264 : vector<1x2x1xf32> to vector<2x1xf32>
    %266 = vector.extract_strided_slice %231 {offsets = [1, 0], sizes = [1, 256], strides = [1, 1]} : vector<2x256xf32> to vector<1x256xf32>
    %267 = vector.broadcast %265 : vector<2x1xf32> to vector<2x256xf32>
    %268 = vector.broadcast %266 : vector<1x256xf32> to vector<2x256xf32>
    %269 = arith.mulf %267, %268 : vector<2x256xf32>
    %270 = arith.addf %263, %269 : vector<2x256xf32>
    %271 = vector.extract_strided_slice %239 {offsets = [2, 0, 0], sizes = [1, 2, 1], strides = [1, 1, 1]} : vector<3x2x2xf32> to vector<1x2x1xf32>
    %272 = vector.shape_cast %271 : vector<1x2x1xf32> to vector<2x1xf32>
    %273 = vector.extract_strided_slice %237 {offsets = [0, 0], sizes = [1, 256], strides = [1, 1]} : vector<2x256xf32> to vector<1x256xf32>
    %274 = vector.broadcast %272 : vector<2x1xf32> to vector<2x256xf32>
    %275 = vector.broadcast %273 : vector<1x256xf32> to vector<2x256xf32>
    %276 = arith.mulf %274, %275 : vector<2x256xf32>
    %277 = arith.addf %270, %276 : vector<2x256xf32>
    %278 = vector.extract_strided_slice %239 {offsets = [2, 0, 1], sizes = [1, 2, 1], strides = [1, 1, 1]} : vector<3x2x2xf32> to vector<1x2x1xf32>
    %279 = vector.shape_cast %278 : vector<1x2x1xf32> to vector<2x1xf32>
    %280 = vector.extract_strided_slice %237 {offsets = [1, 0], sizes = [1, 256], strides = [1, 1]} : vector<2x256xf32> to vector<1x256xf32>
    %281 = vector.broadcast %279 : vector<2x1xf32> to vector<2x256xf32>
    %282 = vector.broadcast %280 : vector<1x256xf32> to vector<2x256xf32>
    %283 = arith.mulf %281, %282 : vector<2x256xf32>
    %284 = arith.addf %277, %283 : vector<2x256xf32>
    %285 = arith.mulf %284, %284 : vector<2x256xf32>
    %286 = tpu.concatenate %284, %285 in 0 : vector<2x256xf32>, vector<2x256xf32> -> vector<4x256xf32>
    %cst_64 = arith.constant dense<0.000000e+00> : vector<4xf32>
    %287 = vector.multi_reduction <add>, %286, %cst_64 [1] : vector<4x256xf32> to vector<4xf32>
    %288 = vector.shape_cast %287 : vector<4xf32> to vector<4x1xf32>
    %cst_65 = arith.constant 2.560000e+02 : f32
    %289 = vector.broadcast %cst_65 : f32 to vector<4x1xf32>
    %290 = arith.divf %288, %289 : vector<4x1xf32>
    %291 = vector.extract_strided_slice %290 {offsets = [0, 0], sizes = [2, 1], strides = [1, 1]} : vector<4x1xf32> to vector<2x1xf32>
    %292 = vector.extract_strided_slice %290 {offsets = [2, 0], sizes = [2, 1], strides = [1, 1]} : vector<4x1xf32> to vector<2x1xf32>
    %293 = arith.mulf %291, %291 : vector<2x1xf32>
    %294 = arith.subf %292, %293 : vector<2x1xf32>
    %cst_66 = arith.constant 0.000000e+00 : f32
    %295 = vector.broadcast %cst_66 : f32 to vector<2x1xf32>
    %296 = arith.maximumf %294, %295 : vector<2x1xf32>
    %297 = vector.broadcast %291 : vector<2x1xf32> to vector<2x256xf32>
    %298 = arith.subf %284, %297 : vector<2x256xf32>
    %cst_67 = arith.constant 9.99999974E-6 : f32
    %299 = vector.broadcast %cst_67 : f32 to vector<2x1xf32>
    %300 = arith.addf %296, %299 : vector<2x1xf32>
    %301 = math.rsqrt %300 : vector<2x1xf32>
    %302 = vector.broadcast %301 : vector<2x1xf32> to vector<2x256xf32>
    %303 = arith.mulf %298, %302 : vector<2x256xf32>
    %cst_68 = arith.constant 0.000000e+00 : f32
    %304 = vector.broadcast %cst_68 : f32 to vector<2x256xf32>
    %305 = arith.maximumf %303, %304 : vector<2x256xf32>
    %306 = arith.addf %79, %305 : vector<2x256xf32>
    %c1_i32_69 = arith.constant 1 : i32
    %307 = tpu.dynamic_rotate %306 by %c1_i32_69 dim 1 : vector<2x256xf32>, i32 -> vector<2x256xf32>
    %308 = vector.broadcast %62 : vector<1x256xf32> to vector<2x256xf32>
    %309 = arith.mulf %307, %308 : vector<2x256xf32>
    %c255_i32_70 = arith.constant 255 : i32
    %310 = tpu.dynamic_rotate %306 by %c255_i32_70 dim 1 : vector<2x256xf32>, i32 -> vector<2x256xf32>
    %311 = vector.broadcast %66 : vector<1x256xf32> to vector<2x256xf32>
    %312 = arith.mulf %310, %311 : vector<2x256xf32>
    %c3 = arith.constant 3 : index
    %c0_71 = arith.constant 0 : index
    %c0_72 = arith.constant 0 : index
    %c0_73 = arith.constant 0 : index
    %313 = vector.load %arg9[%c3, %c0_71, %c0_72, %c0_73] : memref<5x3x2x2xf32, #tpu.memory_space<vmem>>, vector<1x3x2x2xf32>
    %314 = vector.shape_cast %313 : vector<1x3x2x2xf32> to vector<3x2x2xf32>
    %c3_74 = arith.constant 3 : index
    %c0_75 = arith.constant 0 : index
    %c0_76 = arith.constant 0 : index
    %315 = vector.load %arg10[%c3_74, %c0_75, %c0_76] : memref<5x2x1xf32, #tpu.memory_space<vmem>>, vector<1x2x1xf32>
    %316 = vector.shape_cast %315 : vector<1x2x1xf32> to vector<2x1xf32>
    %317 = vector.extract_strided_slice %314 {offsets = [0, 0, 0], sizes = [1, 2, 1], strides = [1, 1, 1]} : vector<3x2x2xf32> to vector<1x2x1xf32>
    %318 = vector.shape_cast %317 : vector<1x2x1xf32> to vector<2x1xf32>
    %319 = vector.extract_strided_slice %309 {offsets = [0, 0], sizes = [1, 256], strides = [1, 1]} : vector<2x256xf32> to vector<1x256xf32>
    %320 = vector.broadcast %318 : vector<2x1xf32> to vector<2x256xf32>
    %321 = vector.broadcast %319 : vector<1x256xf32> to vector<2x256xf32>
    %322 = arith.mulf %320, %321 : vector<2x256xf32>
    %323 = vector.broadcast %316 : vector<2x1xf32> to vector<2x256xf32>
    %324 = arith.addf %323, %322 : vector<2x256xf32>
    %325 = vector.extract_strided_slice %314 {offsets = [0, 0, 1], sizes = [1, 2, 1], strides = [1, 1, 1]} : vector<3x2x2xf32> to vector<1x2x1xf32>
    %326 = vector.shape_cast %325 : vector<1x2x1xf32> to vector<2x1xf32>
    %327 = vector.extract_strided_slice %309 {offsets = [1, 0], sizes = [1, 256], strides = [1, 1]} : vector<2x256xf32> to vector<1x256xf32>
    %328 = vector.broadcast %326 : vector<2x1xf32> to vector<2x256xf32>
    %329 = vector.broadcast %327 : vector<1x256xf32> to vector<2x256xf32>
    %330 = arith.mulf %328, %329 : vector<2x256xf32>
    %331 = arith.addf %324, %330 : vector<2x256xf32>
    %332 = vector.extract_strided_slice %314 {offsets = [1, 0, 0], sizes = [1, 2, 1], strides = [1, 1, 1]} : vector<3x2x2xf32> to vector<1x2x1xf32>
    %333 = vector.shape_cast %332 : vector<1x2x1xf32> to vector<2x1xf32>
    %334 = vector.extract_strided_slice %306 {offsets = [0, 0], sizes = [1, 256], strides = [1, 1]} : vector<2x256xf32> to vector<1x256xf32>
    %335 = vector.broadcast %333 : vector<2x1xf32> to vector<2x256xf32>
    %336 = vector.broadcast %334 : vector<1x256xf32> to vector<2x256xf32>
    %337 = arith.mulf %335, %336 : vector<2x256xf32>
    %338 = arith.addf %331, %337 : vector<2x256xf32>
    %339 = vector.extract_strided_slice %314 {offsets = [1, 0, 1], sizes = [1, 2, 1], strides = [1, 1, 1]} : vector<3x2x2xf32> to vector<1x2x1xf32>
    %340 = vector.shape_cast %339 : vector<1x2x1xf32> to vector<2x1xf32>
    %341 = vector.extract_strided_slice %306 {offsets = [1, 0], sizes = [1, 256], strides = [1, 1]} : vector<2x256xf32> to vector<1x256xf32>
    %342 = vector.broadcast %340 : vector<2x1xf32> to vector<2x256xf32>
    %343 = vector.broadcast %341 : vector<1x256xf32> to vector<2x256xf32>
    %344 = arith.mulf %342, %343 : vector<2x256xf32>
    %345 = arith.addf %338, %344 : vector<2x256xf32>
    %346 = vector.extract_strided_slice %314 {offsets = [2, 0, 0], sizes = [1, 2, 1], strides = [1, 1, 1]} : vector<3x2x2xf32> to vector<1x2x1xf32>
    %347 = vector.shape_cast %346 : vector<1x2x1xf32> to vector<2x1xf32>
    %348 = vector.extract_strided_slice %312 {offsets = [0, 0], sizes = [1, 256], strides = [1, 1]} : vector<2x256xf32> to vector<1x256xf32>
    %349 = vector.broadcast %347 : vector<2x1xf32> to vector<2x256xf32>
    %350 = vector.broadcast %348 : vector<1x256xf32> to vector<2x256xf32>
    %351 = arith.mulf %349, %350 : vector<2x256xf32>
    %352 = arith.addf %345, %351 : vector<2x256xf32>
    %353 = vector.extract_strided_slice %314 {offsets = [2, 0, 1], sizes = [1, 2, 1], strides = [1, 1, 1]} : vector<3x2x2xf32> to vector<1x2x1xf32>
    %354 = vector.shape_cast %353 : vector<1x2x1xf32> to vector<2x1xf32>
    %355 = vector.extract_strided_slice %312 {offsets = [1, 0], sizes = [1, 256], strides = [1, 1]} : vector<2x256xf32> to vector<1x256xf32>
    %356 = vector.broadcast %354 : vector<2x1xf32> to vector<2x256xf32>
    %357 = vector.broadcast %355 : vector<1x256xf32> to vector<2x256xf32>
    %358 = arith.mulf %356, %357 : vector<2x256xf32>
    %359 = arith.addf %352, %358 : vector<2x256xf32>
    %360 = arith.mulf %359, %359 : vector<2x256xf32>
    %361 = tpu.concatenate %359, %360 in 0 : vector<2x256xf32>, vector<2x256xf32> -> vector<4x256xf32>
    %cst_77 = arith.constant dense<0.000000e+00> : vector<4xf32>
    %362 = vector.multi_reduction <add>, %361, %cst_77 [1] : vector<4x256xf32> to vector<4xf32>
    %363 = vector.shape_cast %362 : vector<4xf32> to vector<4x1xf32>
    %cst_78 = arith.constant 2.560000e+02 : f32
    %364 = vector.broadcast %cst_78 : f32 to vector<4x1xf32>
    %365 = arith.divf %363, %364 : vector<4x1xf32>
    %366 = vector.extract_strided_slice %365 {offsets = [0, 0], sizes = [2, 1], strides = [1, 1]} : vector<4x1xf32> to vector<2x1xf32>
    %367 = vector.extract_strided_slice %365 {offsets = [2, 0], sizes = [2, 1], strides = [1, 1]} : vector<4x1xf32> to vector<2x1xf32>
    %368 = arith.mulf %366, %366 : vector<2x1xf32>
    %369 = arith.subf %367, %368 : vector<2x1xf32>
    %cst_79 = arith.constant 0.000000e+00 : f32
    %370 = vector.broadcast %cst_79 : f32 to vector<2x1xf32>
    %371 = arith.maximumf %369, %370 : vector<2x1xf32>
    %372 = vector.broadcast %366 : vector<2x1xf32> to vector<2x256xf32>
    %373 = arith.subf %359, %372 : vector<2x256xf32>
    %cst_80 = arith.constant 9.99999974E-6 : f32
    %374 = vector.broadcast %cst_80 : f32 to vector<2x1xf32>
    %375 = arith.addf %371, %374 : vector<2x1xf32>
    %376 = math.rsqrt %375 : vector<2x1xf32>
    %377 = vector.broadcast %376 : vector<2x1xf32> to vector<2x256xf32>
    %378 = arith.mulf %373, %377 : vector<2x256xf32>
    %cst_81 = arith.constant 0.000000e+00 : f32
    %379 = vector.broadcast %cst_81 : f32 to vector<2x256xf32>
    %380 = arith.maximumf %378, %379 : vector<2x256xf32>
    %381 = arith.addf %80, %380 : vector<2x256xf32>
    %c1_i32_82 = arith.constant 1 : i32
    %382 = tpu.dynamic_rotate %381 by %c1_i32_82 dim 1 : vector<2x256xf32>, i32 -> vector<2x256xf32>
    %383 = vector.broadcast %62 : vector<1x256xf32> to vector<2x256xf32>
    %384 = arith.mulf %382, %383 : vector<2x256xf32>
    %c255_i32_83 = arith.constant 255 : i32
    %385 = tpu.dynamic_rotate %381 by %c255_i32_83 dim 1 : vector<2x256xf32>, i32 -> vector<2x256xf32>
    %386 = vector.broadcast %66 : vector<1x256xf32> to vector<2x256xf32>
    %387 = arith.mulf %385, %386 : vector<2x256xf32>
    %c4 = arith.constant 4 : index
    %c0_84 = arith.constant 0 : index
    %c0_85 = arith.constant 0 : index
    %c0_86 = arith.constant 0 : index
    %388 = vector.load %arg9[%c4, %c0_84, %c0_85, %c0_86] : memref<5x3x2x2xf32, #tpu.memory_space<vmem>>, vector<1x3x2x2xf32>
    %389 = vector.shape_cast %388 : vector<1x3x2x2xf32> to vector<3x2x2xf32>
    %c4_87 = arith.constant 4 : index
    %c0_88 = arith.constant 0 : index
    %c0_89 = arith.constant 0 : index
    %390 = vector.load %arg10[%c4_87, %c0_88, %c0_89] : memref<5x2x1xf32, #tpu.memory_space<vmem>>, vector<1x2x1xf32>
    %391 = vector.shape_cast %390 : vector<1x2x1xf32> to vector<2x1xf32>
    %392 = vector.extract_strided_slice %389 {offsets = [0, 0, 0], sizes = [1, 2, 1], strides = [1, 1, 1]} : vector<3x2x2xf32> to vector<1x2x1xf32>
    %393 = vector.shape_cast %392 : vector<1x2x1xf32> to vector<2x1xf32>
    %394 = vector.extract_strided_slice %384 {offsets = [0, 0], sizes = [1, 256], strides = [1, 1]} : vector<2x256xf32> to vector<1x256xf32>
    %395 = vector.broadcast %393 : vector<2x1xf32> to vector<2x256xf32>
    %396 = vector.broadcast %394 : vector<1x256xf32> to vector<2x256xf32>
    %397 = arith.mulf %395, %396 : vector<2x256xf32>
    %398 = vector.broadcast %391 : vector<2x1xf32> to vector<2x256xf32>
    %399 = arith.addf %398, %397 : vector<2x256xf32>
    %400 = vector.extract_strided_slice %389 {offsets = [0, 0, 1], sizes = [1, 2, 1], strides = [1, 1, 1]} : vector<3x2x2xf32> to vector<1x2x1xf32>
    %401 = vector.shape_cast %400 : vector<1x2x1xf32> to vector<2x1xf32>
    %402 = vector.extract_strided_slice %384 {offsets = [1, 0], sizes = [1, 256], strides = [1, 1]} : vector<2x256xf32> to vector<1x256xf32>
    %403 = vector.broadcast %401 : vector<2x1xf32> to vector<2x256xf32>
    %404 = vector.broadcast %402 : vector<1x256xf32> to vector<2x256xf32>
    %405 = arith.mulf %403, %404 : vector<2x256xf32>
    %406 = arith.addf %399, %405 : vector<2x256xf32>
    %407 = vector.extract_strided_slice %389 {offsets = [1, 0, 0], sizes = [1, 2, 1], strides = [1, 1, 1]} : vector<3x2x2xf32> to vector<1x2x1xf32>
    %408 = vector.shape_cast %407 : vector<1x2x1xf32> to vector<2x1xf32>
    %409 = vector.extract_strided_slice %381 {offsets = [0, 0], sizes = [1, 256], strides = [1, 1]} : vector<2x256xf32> to vector<1x256xf32>
    %410 = vector.broadcast %408 : vector<2x1xf32> to vector<2x256xf32>
    %411 = vector.broadcast %409 : vector<1x256xf32> to vector<2x256xf32>
    %412 = arith.mulf %410, %411 : vector<2x256xf32>
    %413 = arith.addf %406, %412 : vector<2x256xf32>
    %414 = vector.extract_strided_slice %389 {offsets = [1, 0, 1], sizes = [1, 2, 1], strides = [1, 1, 1]} : vector<3x2x2xf32> to vector<1x2x1xf32>
    %415 = vector.shape_cast %414 : vector<1x2x1xf32> to vector<2x1xf32>
    %416 = vector.extract_strided_slice %381 {offsets = [1, 0], sizes = [1, 256], strides = [1, 1]} : vector<2x256xf32> to vector<1x256xf32>
    %417 = vector.broadcast %415 : vector<2x1xf32> to vector<2x256xf32>
    %418 = vector.broadcast %416 : vector<1x256xf32> to vector<2x256xf32>
    %419 = arith.mulf %417, %418 : vector<2x256xf32>
    %420 = arith.addf %413, %419 : vector<2x256xf32>
    %421 = vector.extract_strided_slice %389 {offsets = [2, 0, 0], sizes = [1, 2, 1], strides = [1, 1, 1]} : vector<3x2x2xf32> to vector<1x2x1xf32>
    %422 = vector.shape_cast %421 : vector<1x2x1xf32> to vector<2x1xf32>
    %423 = vector.extract_strided_slice %387 {offsets = [0, 0], sizes = [1, 256], strides = [1, 1]} : vector<2x256xf32> to vector<1x256xf32>
    %424 = vector.broadcast %422 : vector<2x1xf32> to vector<2x256xf32>
    %425 = vector.broadcast %423 : vector<1x256xf32> to vector<2x256xf32>
    %426 = arith.mulf %424, %425 : vector<2x256xf32>
    %427 = arith.addf %420, %426 : vector<2x256xf32>
    %428 = vector.extract_strided_slice %389 {offsets = [2, 0, 1], sizes = [1, 2, 1], strides = [1, 1, 1]} : vector<3x2x2xf32> to vector<1x2x1xf32>
    %429 = vector.shape_cast %428 : vector<1x2x1xf32> to vector<2x1xf32>
    %430 = vector.extract_strided_slice %387 {offsets = [1, 0], sizes = [1, 256], strides = [1, 1]} : vector<2x256xf32> to vector<1x256xf32>
    %431 = vector.broadcast %429 : vector<2x1xf32> to vector<2x256xf32>
    %432 = vector.broadcast %430 : vector<1x256xf32> to vector<2x256xf32>
    %433 = arith.mulf %431, %432 : vector<2x256xf32>
    %434 = arith.addf %427, %433 : vector<2x256xf32>
    %435 = arith.mulf %434, %434 : vector<2x256xf32>
    %436 = tpu.concatenate %434, %435 in 0 : vector<2x256xf32>, vector<2x256xf32> -> vector<4x256xf32>
    %cst_90 = arith.constant dense<0.000000e+00> : vector<4xf32>
    %437 = vector.multi_reduction <add>, %436, %cst_90 [1] : vector<4x256xf32> to vector<4xf32>
    %438 = vector.shape_cast %437 : vector<4xf32> to vector<4x1xf32>
    %cst_91 = arith.constant 2.560000e+02 : f32
    %439 = vector.broadcast %cst_91 : f32 to vector<4x1xf32>
    %440 = arith.divf %438, %439 : vector<4x1xf32>
    %441 = vector.extract_strided_slice %440 {offsets = [0, 0], sizes = [2, 1], strides = [1, 1]} : vector<4x1xf32> to vector<2x1xf32>
    %442 = vector.extract_strided_slice %440 {offsets = [2, 0], sizes = [2, 1], strides = [1, 1]} : vector<4x1xf32> to vector<2x1xf32>
    %443 = arith.mulf %441, %441 : vector<2x1xf32>
    %444 = arith.subf %442, %443 : vector<2x1xf32>
    %cst_92 = arith.constant 0.000000e+00 : f32
    %445 = vector.broadcast %cst_92 : f32 to vector<2x1xf32>
    %446 = arith.maximumf %444, %445 : vector<2x1xf32>
    %447 = vector.broadcast %441 : vector<2x1xf32> to vector<2x256xf32>
    %448 = arith.subf %434, %447 : vector<2x256xf32>
    %cst_93 = arith.constant 9.99999974E-6 : f32
    %449 = vector.broadcast %cst_93 : f32 to vector<2x1xf32>
    %450 = arith.addf %446, %449 : vector<2x1xf32>
    %451 = math.rsqrt %450 : vector<2x1xf32>
    %452 = vector.broadcast %451 : vector<2x1xf32> to vector<2x256xf32>
    %453 = arith.mulf %448, %452 : vector<2x256xf32>
    %cst_94 = arith.constant 0.000000e+00 : f32
    %454 = vector.broadcast %cst_94 : f32 to vector<2x256xf32>
    %455 = arith.maximumf %453, %454 : vector<2x256xf32>
    %456 = arith.addf %75, %155 : vector<2x256xf32>
    %457 = arith.addf %456, %230 : vector<2x256xf32>
    %458 = arith.addf %457, %305 : vector<2x256xf32>
    %459 = arith.addf %458, %380 : vector<2x256xf32>
    %460 = arith.addf %459, %455 : vector<2x256xf32>
    %cst_95 = arith.constant dense<0.000000e+00> : vector<2xf32>
    %461 = vector.multi_reduction <add>, %460, %cst_95 [1] : vector<2x256xf32> to vector<2xf32>
    %462 = vector.shape_cast %461 : vector<2xf32> to vector<2x1xf32>
    %cst_96 = arith.constant 2.560000e+02 : f32
    %463 = vector.broadcast %cst_96 : f32 to vector<2x1xf32>
    %464 = arith.divf %462, %463 : vector<2x1xf32>
    %c0_97 = arith.constant 0 : index
    %c0_98 = arith.constant 0 : index
    %465 = vector.load %arg13[%c0_97, %c0_98] : memref<12x2xf32, #tpu.memory_space<vmem>>, vector<12x2xf32>
    %cst_99 = arith.constant dense<0.000000e+00> : vector<12x1xf32>
    %466 = tpu.matmul %465, %464, %cst_99 {dimension_numbers = #tpu.dot_dimension_numbers<[1], [0], [0], [1], [0, 0, 1, 1], [], []>} : vector<12x2xf32>, vector<2x1xf32>, vector<12x1xf32> -> vector<12x1xf32>
    %c0_100 = arith.constant 0 : index
    %c0_101 = arith.constant 0 : index
    %467 = vector.load %arg14[%c0_100, %c0_101] : memref<12x1xf32, #tpu.memory_space<vmem>>, vector<12x1xf32>
    %468 = arith.addf %466, %467 : vector<12x1xf32>
    %469 = vector.extract_strided_slice %468 {offsets = [0, 0], sizes = [2, 1], strides = [1, 1]} : vector<12x1xf32> to vector<2x1xf32>
    %470 = vector.extract_strided_slice %468 {offsets = [2, 0], sizes = [2, 1], strides = [1, 1]} : vector<12x1xf32> to vector<2x1xf32>
    %471 = vector.extract_strided_slice %468 {offsets = [4, 0], sizes = [2, 1], strides = [1, 1]} : vector<12x1xf32> to vector<2x1xf32>
    %472 = vector.extract_strided_slice %468 {offsets = [6, 0], sizes = [2, 1], strides = [1, 1]} : vector<12x1xf32> to vector<2x1xf32>
    %473 = vector.extract_strided_slice %468 {offsets = [8, 0], sizes = [2, 1], strides = [1, 1]} : vector<12x1xf32> to vector<2x1xf32>
    %474 = vector.extract_strided_slice %468 {offsets = [10, 0], sizes = [2, 1], strides = [1, 1]} : vector<12x1xf32> to vector<2x1xf32>
    %475 = arith.maximumf %469, %470 : vector<2x1xf32>
    %476 = arith.maximumf %475, %471 : vector<2x1xf32>
    %477 = arith.maximumf %476, %472 : vector<2x1xf32>
    %478 = arith.maximumf %477, %473 : vector<2x1xf32>
    %479 = arith.maximumf %478, %474 : vector<2x1xf32>
    %480 = arith.subf %469, %479 : vector<2x1xf32>
    %481 = math.exp %480 : vector<2x1xf32>
    %482 = arith.subf %470, %479 : vector<2x1xf32>
    %483 = math.exp %482 : vector<2x1xf32>
    %484 = arith.subf %471, %479 : vector<2x1xf32>
    %485 = math.exp %484 : vector<2x1xf32>
    %486 = arith.subf %472, %479 : vector<2x1xf32>
    %487 = math.exp %486 : vector<2x1xf32>
    %488 = arith.subf %473, %479 : vector<2x1xf32>
    %489 = math.exp %488 : vector<2x1xf32>
    %490 = arith.subf %474, %479 : vector<2x1xf32>
    %491 = math.exp %490 : vector<2x1xf32>
    %492 = arith.addf %481, %483 : vector<2x1xf32>
    %493 = arith.addf %492, %485 : vector<2x1xf32>
    %494 = arith.addf %493, %487 : vector<2x1xf32>
    %495 = arith.addf %494, %489 : vector<2x1xf32>
    %496 = arith.addf %495, %491 : vector<2x1xf32>
    %cst_102 = arith.constant 1.000000e+00 : f32
    %497 = vector.broadcast %cst_102 : f32 to vector<2x1xf32>
    %498 = arith.divf %497, %496 : vector<2x1xf32>
    %499 = arith.mulf %481, %498 : vector<2x1xf32>
    %500 = vector.broadcast %499 : vector<2x1xf32> to vector<2x256xf32>
    %501 = arith.mulf %75, %500 : vector<2x256xf32>
    %c0_103 = arith.constant 0 : index
    %c0_104 = arith.constant 0 : index
    %502 = vector.load %arg20[%c0_103, %c0_104] : memref<12x256xf32, #tpu.memory_space<vmem>>, vector<2x256xf32>
    tpu.vector_store %arg20[%c0_103, %c0_104], %501 {strides = array<i32>} : memref<12x256xf32, #tpu.memory_space<vmem>>, vector<2x256xf32>,
    %503 = arith.mulf %483, %498 : vector<2x1xf32>
    %504 = vector.broadcast %503 : vector<2x1xf32> to vector<2x256xf32>
    %505 = arith.mulf %155, %504 : vector<2x256xf32>
    %c2_105 = arith.constant 2 : index
    %c0_106 = arith.constant 0 : index
    %506 = vector.load %arg20[%c2_105, %c0_106] : memref<12x256xf32, #tpu.memory_space<vmem>>, vector<2x256xf32>
    tpu.vector_store %arg20[%c2_105, %c0_106], %505 {strides = array<i32>} : memref<12x256xf32, #tpu.memory_space<vmem>>, vector<2x256xf32>,
    %507 = arith.mulf %485, %498 : vector<2x1xf32>
    %508 = vector.broadcast %507 : vector<2x1xf32> to vector<2x256xf32>
    %509 = arith.mulf %230, %508 : vector<2x256xf32>
    %c4_107 = arith.constant 4 : index
    %c0_108 = arith.constant 0 : index
    %510 = vector.load %arg20[%c4_107, %c0_108] : memref<12x256xf32, #tpu.memory_space<vmem>>, vector<2x256xf32>
    tpu.vector_store %arg20[%c4_107, %c0_108], %509 {strides = array<i32>} : memref<12x256xf32, #tpu.memory_space<vmem>>, vector<2x256xf32>,
    %511 = arith.mulf %487, %498 : vector<2x1xf32>
    %512 = vector.broadcast %511 : vector<2x1xf32> to vector<2x256xf32>
    %513 = arith.mulf %305, %512 : vector<2x256xf32>
    %c6 = arith.constant 6 : index
    %c0_109 = arith.constant 0 : index
    %514 = vector.load %arg20[%c6, %c0_109] : memref<12x256xf32, #tpu.memory_space<vmem>>, vector<2x256xf32>
    tpu.vector_store %arg20[%c6, %c0_109], %513 {strides = array<i32>} : memref<12x256xf32, #tpu.memory_space<vmem>>, vector<2x256xf32>,
    %515 = arith.mulf %489, %498 : vector<2x1xf32>
    %516 = vector.broadcast %515 : vector<2x1xf32> to vector<2x256xf32>
    %517 = arith.mulf %380, %516 : vector<2x256xf32>
    %c8 = arith.constant 8 : index
    %c0_110 = arith.constant 0 : index
    %518 = vector.load %arg20[%c8, %c0_110] : memref<12x256xf32, #tpu.memory_space<vmem>>, vector<2x256xf32>
    tpu.vector_store %arg20[%c8, %c0_110], %517 {strides = array<i32>} : memref<12x256xf32, #tpu.memory_space<vmem>>, vector<2x256xf32>,
    %519 = arith.mulf %491, %498 : vector<2x1xf32>
    %520 = vector.broadcast %519 : vector<2x1xf32> to vector<2x256xf32>
    %521 = arith.mulf %455, %520 : vector<2x256xf32>
    %c10 = arith.constant 10 : index
    %c0_111 = arith.constant 0 : index
    %522 = vector.load %arg20[%c10, %c0_111] : memref<12x256xf32, #tpu.memory_space<vmem>>, vector<2x256xf32>
    tpu.vector_store %arg20[%c10, %c0_111], %521 {strides = array<i32>} : memref<12x256xf32, #tpu.memory_space<vmem>>, vector<2x256xf32>,
    %c0_112 = arith.constant 0 : index
    %c0_113 = arith.constant 0 : index
    %523 = vector.load %arg11[%c0_112, %c0_113] : memref<12x12xf32, #tpu.memory_space<vmem>>, vector<12x12xf32>
    %c0_114 = arith.constant 0 : index
    %c0_115 = arith.constant 0 : index
    %524 = vector.load %arg20[%c0_114, %c0_115] : memref<12x256xf32, #tpu.memory_space<vmem>>, vector<12x256xf32>
    %cst_116 = arith.constant dense<0.000000e+00> : vector<12x256xf32>
    %525 = tpu.matmul %523, %524, %cst_116 {dimension_numbers = #tpu.dot_dimension_numbers<[1], [0], [0], [1], [0, 0, 1, 1], [], []>} : vector<12x12xf32>, vector<12x256xf32>, vector<12x256xf32> -> vector<12x256xf32>
    %c0_117 = arith.constant 0 : index
    %c0_118 = arith.constant 0 : index
    %526 = vector.load %arg12[%c0_117, %c0_118] : memref<12x1xf32, #tpu.memory_space<vmem>>, vector<12x1xf32>
    %527 = vector.broadcast %526 : vector<12x1xf32> to vector<12x256xf32>
    %528 = arith.addf %525, %527 : vector<12x256xf32>
    %529 = vector.extract_strided_slice %528 {offsets = [0, 0], sizes = [2, 256], strides = [1, 1]} : vector<12x256xf32> to vector<2x256xf32>
    %530 = vector.extract_strided_slice %528 {offsets = [2, 0], sizes = [2, 256], strides = [1, 1]} : vector<12x256xf32> to vector<2x256xf32>
    %531 = vector.extract_strided_slice %528 {offsets = [4, 0], sizes = [2, 256], strides = [1, 1]} : vector<12x256xf32> to vector<2x256xf32>
    %532 = vector.extract_strided_slice %528 {offsets = [6, 0], sizes = [2, 256], strides = [1, 1]} : vector<12x256xf32> to vector<2x256xf32>
    %533 = vector.extract_strided_slice %528 {offsets = [8, 0], sizes = [2, 256], strides = [1, 1]} : vector<12x256xf32> to vector<2x256xf32>
    %534 = vector.extract_strided_slice %528 {offsets = [10, 0], sizes = [2, 256], strides = [1, 1]} : vector<12x256xf32> to vector<2x256xf32>
    %c16_i32_119 = arith.constant 16 : i32
    %535 = tpu.dynamic_rotate %530 by %c16_i32_119 dim 1 : vector<2x256xf32>, i32 -> vector<2x256xf32>
    %536 = vector.broadcast %70 : vector<1x256xf32> to vector<2x256xf32>
    %537 = arith.mulf %535, %536 : vector<2x256xf32>
    %c240_i32_120 = arith.constant 240 : i32
    %538 = tpu.dynamic_rotate %530 by %c240_i32_120 dim 1 : vector<2x256xf32>, i32 -> vector<2x256xf32>
    %539 = vector.broadcast %74 : vector<1x256xf32> to vector<2x256xf32>
    %540 = arith.mulf %538, %539 : vector<2x256xf32>
    %c0_121 = arith.constant 0 : index
    %c0_122 = arith.constant 0 : index
    %c0_123 = arith.constant 0 : index
    %c0_124 = arith.constant 0 : index
    %541 = vector.load %arg15[%c0_121, %c0_122, %c0_123, %c0_124] : memref<5x3x2x2xf32, #tpu.memory_space<vmem>>, vector<1x3x2x2xf32>
    %542 = vector.shape_cast %541 : vector<1x3x2x2xf32> to vector<3x2x2xf32>
    %c0_125 = arith.constant 0 : index
    %c0_126 = arith.constant 0 : index
    %c0_127 = arith.constant 0 : index
    %543 = vector.load %arg16[%c0_125, %c0_126, %c0_127] : memref<5x2x1xf32, #tpu.memory_space<vmem>>, vector<1x2x1xf32>
    %544 = vector.shape_cast %543 : vector<1x2x1xf32> to vector<2x1xf32>
    %545 = vector.extract_strided_slice %542 {offsets = [0, 0, 0], sizes = [1, 2, 1], strides = [1, 1, 1]} : vector<3x2x2xf32> to vector<1x2x1xf32>
    %546 = vector.shape_cast %545 : vector<1x2x1xf32> to vector<2x1xf32>
    %547 = vector.extract_strided_slice %537 {offsets = [0, 0], sizes = [1, 256], strides = [1, 1]} : vector<2x256xf32> to vector<1x256xf32>
    %548 = vector.broadcast %546 : vector<2x1xf32> to vector<2x256xf32>
    %549 = vector.broadcast %547 : vector<1x256xf32> to vector<2x256xf32>
    %550 = arith.mulf %548, %549 : vector<2x256xf32>
    %551 = vector.broadcast %544 : vector<2x1xf32> to vector<2x256xf32>
    %552 = arith.addf %551, %550 : vector<2x256xf32>
    %553 = vector.extract_strided_slice %542 {offsets = [0, 0, 1], sizes = [1, 2, 1], strides = [1, 1, 1]} : vector<3x2x2xf32> to vector<1x2x1xf32>
    %554 = vector.shape_cast %553 : vector<1x2x1xf32> to vector<2x1xf32>
    %555 = vector.extract_strided_slice %537 {offsets = [1, 0], sizes = [1, 256], strides = [1, 1]} : vector<2x256xf32> to vector<1x256xf32>
    %556 = vector.broadcast %554 : vector<2x1xf32> to vector<2x256xf32>
    %557 = vector.broadcast %555 : vector<1x256xf32> to vector<2x256xf32>
    %558 = arith.mulf %556, %557 : vector<2x256xf32>
    %559 = arith.addf %552, %558 : vector<2x256xf32>
    %560 = vector.extract_strided_slice %542 {offsets = [1, 0, 0], sizes = [1, 2, 1], strides = [1, 1, 1]} : vector<3x2x2xf32> to vector<1x2x1xf32>
    %561 = vector.shape_cast %560 : vector<1x2x1xf32> to vector<2x1xf32>
    %562 = vector.extract_strided_slice %530 {offsets = [0, 0], sizes = [1, 256], strides = [1, 1]} : vector<2x256xf32> to vector<1x256xf32>
    %563 = vector.broadcast %561 : vector<2x1xf32> to vector<2x256xf32>
    %564 = vector.broadcast %562 : vector<1x256xf32> to vector<2x256xf32>
    %565 = arith.mulf %563, %564 : vector<2x256xf32>
    %566 = arith.addf %559, %565 : vector<2x256xf32>
    %567 = vector.extract_strided_slice %542 {offsets = [1, 0, 1], sizes = [1, 2, 1], strides = [1, 1, 1]} : vector<3x2x2xf32> to vector<1x2x1xf32>
    %568 = vector.shape_cast %567 : vector<1x2x1xf32> to vector<2x1xf32>
    %569 = vector.extract_strided_slice %530 {offsets = [1, 0], sizes = [1, 256], strides = [1, 1]} : vector<2x256xf32> to vector<1x256xf32>
    %570 = vector.broadcast %568 : vector<2x1xf32> to vector<2x256xf32>
    %571 = vector.broadcast %569 : vector<1x256xf32> to vector<2x256xf32>
    %572 = arith.mulf %570, %571 : vector<2x256xf32>
    %573 = arith.addf %566, %572 : vector<2x256xf32>
    %574 = vector.extract_strided_slice %542 {offsets = [2, 0, 0], sizes = [1, 2, 1], strides = [1, 1, 1]} : vector<3x2x2xf32> to vector<1x2x1xf32>
    %575 = vector.shape_cast %574 : vector<1x2x1xf32> to vector<2x1xf32>
    %576 = vector.extract_strided_slice %540 {offsets = [0, 0], sizes = [1, 256], strides = [1, 1]} : vector<2x256xf32> to vector<1x256xf32>
    %577 = vector.broadcast %575 : vector<2x1xf32> to vector<2x256xf32>
    %578 = vector.broadcast %576 : vector<1x256xf32> to vector<2x256xf32>
    %579 = arith.mulf %577, %578 : vector<2x256xf32>
    %580 = arith.addf %573, %579 : vector<2x256xf32>
    %581 = vector.extract_strided_slice %542 {offsets = [2, 0, 1], sizes = [1, 2, 1], strides = [1, 1, 1]} : vector<3x2x2xf32> to vector<1x2x1xf32>
    %582 = vector.shape_cast %581 : vector<1x2x1xf32> to vector<2x1xf32>
    %583 = vector.extract_strided_slice %540 {offsets = [1, 0], sizes = [1, 256], strides = [1, 1]} : vector<2x256xf32> to vector<1x256xf32>
    %584 = vector.broadcast %582 : vector<2x1xf32> to vector<2x256xf32>
    %585 = vector.broadcast %583 : vector<1x256xf32> to vector<2x256xf32>
    %586 = arith.mulf %584, %585 : vector<2x256xf32>
    %587 = arith.addf %580, %586 : vector<2x256xf32>
    %588 = arith.mulf %587, %587 : vector<2x256xf32>
    %589 = tpu.concatenate %587, %588 in 0 : vector<2x256xf32>, vector<2x256xf32> -> vector<4x256xf32>
    %cst_128 = arith.constant dense<0.000000e+00> : vector<4xf32>
    %590 = vector.multi_reduction <add>, %589, %cst_128 [1] : vector<4x256xf32> to vector<4xf32>
    %591 = vector.shape_cast %590 : vector<4xf32> to vector<4x1xf32>
    %cst_129 = arith.constant 2.560000e+02 : f32
    %592 = vector.broadcast %cst_129 : f32 to vector<4x1xf32>
    %593 = arith.divf %591, %592 : vector<4x1xf32>
    %594 = vector.extract_strided_slice %593 {offsets = [0, 0], sizes = [2, 1], strides = [1, 1]} : vector<4x1xf32> to vector<2x1xf32>
    %595 = vector.extract_strided_slice %593 {offsets = [2, 0], sizes = [2, 1], strides = [1, 1]} : vector<4x1xf32> to vector<2x1xf32>
    %596 = arith.mulf %594, %594 : vector<2x1xf32>
    %597 = arith.subf %595, %596 : vector<2x1xf32>
    %cst_130 = arith.constant 0.000000e+00 : f32
    %598 = vector.broadcast %cst_130 : f32 to vector<2x1xf32>
    %599 = arith.maximumf %597, %598 : vector<2x1xf32>
    %600 = vector.broadcast %594 : vector<2x1xf32> to vector<2x256xf32>
    %601 = arith.subf %587, %600 : vector<2x256xf32>
    %cst_131 = arith.constant 9.99999974E-6 : f32
    %602 = vector.broadcast %cst_131 : f32 to vector<2x1xf32>
    %603 = arith.addf %599, %602 : vector<2x1xf32>
    %604 = math.rsqrt %603 : vector<2x1xf32>
    %605 = vector.broadcast %604 : vector<2x1xf32> to vector<2x256xf32>
    %606 = arith.mulf %601, %605 : vector<2x256xf32>
    %cst_132 = arith.constant 0.000000e+00 : f32
    %607 = vector.broadcast %cst_132 : f32 to vector<2x256xf32>
    %608 = arith.maximumf %606, %607 : vector<2x256xf32>
    %609 = arith.addf %608, %531 : vector<2x256xf32>
    %c16_i32_133 = arith.constant 16 : i32
    %610 = tpu.dynamic_rotate %609 by %c16_i32_133 dim 1 : vector<2x256xf32>, i32 -> vector<2x256xf32>
    %611 = vector.broadcast %70 : vector<1x256xf32> to vector<2x256xf32>
    %612 = arith.mulf %610, %611 : vector<2x256xf32>
    %c240_i32_134 = arith.constant 240 : i32
    %613 = tpu.dynamic_rotate %609 by %c240_i32_134 dim 1 : vector<2x256xf32>, i32 -> vector<2x256xf32>
    %614 = vector.broadcast %74 : vector<1x256xf32> to vector<2x256xf32>
    %615 = arith.mulf %613, %614 : vector<2x256xf32>
    %c1_135 = arith.constant 1 : index
    %c0_136 = arith.constant 0 : index
    %c0_137 = arith.constant 0 : index
    %c0_138 = arith.constant 0 : index
    %616 = vector.load %arg15[%c1_135, %c0_136, %c0_137, %c0_138] : memref<5x3x2x2xf32, #tpu.memory_space<vmem>>, vector<1x3x2x2xf32>
    %617 = vector.shape_cast %616 : vector<1x3x2x2xf32> to vector<3x2x2xf32>
    %c1_139 = arith.constant 1 : index
    %c0_140 = arith.constant 0 : index
    %c0_141 = arith.constant 0 : index
    %618 = vector.load %arg16[%c1_139, %c0_140, %c0_141] : memref<5x2x1xf32, #tpu.memory_space<vmem>>, vector<1x2x1xf32>
    %619 = vector.shape_cast %618 : vector<1x2x1xf32> to vector<2x1xf32>
    %620 = vector.extract_strided_slice %617 {offsets = [0, 0, 0], sizes = [1, 2, 1], strides = [1, 1, 1]} : vector<3x2x2xf32> to vector<1x2x1xf32>
    %621 = vector.shape_cast %620 : vector<1x2x1xf32> to vector<2x1xf32>
    %622 = vector.extract_strided_slice %612 {offsets = [0, 0], sizes = [1, 256], strides = [1, 1]} : vector<2x256xf32> to vector<1x256xf32>
    %623 = vector.broadcast %621 : vector<2x1xf32> to vector<2x256xf32>
    %624 = vector.broadcast %622 : vector<1x256xf32> to vector<2x256xf32>
    %625 = arith.mulf %623, %624 : vector<2x256xf32>
    %626 = vector.broadcast %619 : vector<2x1xf32> to vector<2x256xf32>
    %627 = arith.addf %626, %625 : vector<2x256xf32>
    %628 = vector.extract_strided_slice %617 {offsets = [0, 0, 1], sizes = [1, 2, 1], strides = [1, 1, 1]} : vector<3x2x2xf32> to vector<1x2x1xf32>
    %629 = vector.shape_cast %628 : vector<1x2x1xf32> to vector<2x1xf32>
    %630 = vector.extract_strided_slice %612 {offsets = [1, 0], sizes = [1, 256], strides = [1, 1]} : vector<2x256xf32> to vector<1x256xf32>
    %631 = vector.broadcast %629 : vector<2x1xf32> to vector<2x256xf32>
    %632 = vector.broadcast %630 : vector<1x256xf32> to vector<2x256xf32>
    %633 = arith.mulf %631, %632 : vector<2x256xf32>
    %634 = arith.addf %627, %633 : vector<2x256xf32>
    %635 = vector.extract_strided_slice %617 {offsets = [1, 0, 0], sizes = [1, 2, 1], strides = [1, 1, 1]} : vector<3x2x2xf32> to vector<1x2x1xf32>
    %636 = vector.shape_cast %635 : vector<1x2x1xf32> to vector<2x1xf32>
    %637 = vector.extract_strided_slice %609 {offsets = [0, 0], sizes = [1, 256], strides = [1, 1]} : vector<2x256xf32> to vector<1x256xf32>
    %638 = vector.broadcast %636 : vector<2x1xf32> to vector<2x256xf32>
    %639 = vector.broadcast %637 : vector<1x256xf32> to vector<2x256xf32>
    %640 = arith.mulf %638, %639 : vector<2x256xf32>
    %641 = arith.addf %634, %640 : vector<2x256xf32>
    %642 = vector.extract_strided_slice %617 {offsets = [1, 0, 1], sizes = [1, 2, 1], strides = [1, 1, 1]} : vector<3x2x2xf32> to vector<1x2x1xf32>
    %643 = vector.shape_cast %642 : vector<1x2x1xf32> to vector<2x1xf32>
    %644 = vector.extract_strided_slice %609 {offsets = [1, 0], sizes = [1, 256], strides = [1, 1]} : vector<2x256xf32> to vector<1x256xf32>
    %645 = vector.broadcast %643 : vector<2x1xf32> to vector<2x256xf32>
    %646 = vector.broadcast %644 : vector<1x256xf32> to vector<2x256xf32>
    %647 = arith.mulf %645, %646 : vector<2x256xf32>
    %648 = arith.addf %641, %647 : vector<2x256xf32>
    %649 = vector.extract_strided_slice %617 {offsets = [2, 0, 0], sizes = [1, 2, 1], strides = [1, 1, 1]} : vector<3x2x2xf32> to vector<1x2x1xf32>
    %650 = vector.shape_cast %649 : vector<1x2x1xf32> to vector<2x1xf32>
    %651 = vector.extract_strided_slice %615 {offsets = [0, 0], sizes = [1, 256], strides = [1, 1]} : vector<2x256xf32> to vector<1x256xf32>
    %652 = vector.broadcast %650 : vector<2x1xf32> to vector<2x256xf32>
    %653 = vector.broadcast %651 : vector<1x256xf32> to vector<2x256xf32>
    %654 = arith.mulf %652, %653 : vector<2x256xf32>
    %655 = arith.addf %648, %654 : vector<2x256xf32>
    %656 = vector.extract_strided_slice %617 {offsets = [2, 0, 1], sizes = [1, 2, 1], strides = [1, 1, 1]} : vector<3x2x2xf32> to vector<1x2x1xf32>
    %657 = vector.shape_cast %656 : vector<1x2x1xf32> to vector<2x1xf32>
    %658 = vector.extract_strided_slice %615 {offsets = [1, 0], sizes = [1, 256], strides = [1, 1]} : vector<2x256xf32> to vector<1x256xf32>
    %659 = vector.broadcast %657 : vector<2x1xf32> to vector<2x256xf32>
    %660 = vector.broadcast %658 : vector<1x256xf32> to vector<2x256xf32>
    %661 = arith.mulf %659, %660 : vector<2x256xf32>
    %662 = arith.addf %655, %661 : vector<2x256xf32>
    %663 = arith.mulf %662, %662 : vector<2x256xf32>
    %664 = tpu.concatenate %662, %663 in 0 : vector<2x256xf32>, vector<2x256xf32> -> vector<4x256xf32>
    %cst_142 = arith.constant dense<0.000000e+00> : vector<4xf32>
    %665 = vector.multi_reduction <add>, %664, %cst_142 [1] : vector<4x256xf32> to vector<4xf32>
    %666 = vector.shape_cast %665 : vector<4xf32> to vector<4x1xf32>
    %cst_143 = arith.constant 2.560000e+02 : f32
    %667 = vector.broadcast %cst_143 : f32 to vector<4x1xf32>
    %668 = arith.divf %666, %667 : vector<4x1xf32>
    %669 = vector.extract_strided_slice %668 {offsets = [0, 0], sizes = [2, 1], strides = [1, 1]} : vector<4x1xf32> to vector<2x1xf32>
    %670 = vector.extract_strided_slice %668 {offsets = [2, 0], sizes = [2, 1], strides = [1, 1]} : vector<4x1xf32> to vector<2x1xf32>
    %671 = arith.mulf %669, %669 : vector<2x1xf32>
    %672 = arith.subf %670, %671 : vector<2x1xf32>
    %cst_144 = arith.constant 0.000000e+00 : f32
    %673 = vector.broadcast %cst_144 : f32 to vector<2x1xf32>
    %674 = arith.maximumf %672, %673 : vector<2x1xf32>
    %675 = vector.broadcast %669 : vector<2x1xf32> to vector<2x256xf32>
    %676 = arith.subf %662, %675 : vector<2x256xf32>
    %cst_145 = arith.constant 9.99999974E-6 : f32
    %677 = vector.broadcast %cst_145 : f32 to vector<2x1xf32>
    %678 = arith.addf %674, %677 : vector<2x1xf32>
    %679 = math.rsqrt %678 : vector<2x1xf32>
    %680 = vector.broadcast %679 : vector<2x1xf32> to vector<2x256xf32>
    %681 = arith.mulf %676, %680 : vector<2x256xf32>
    %cst_146 = arith.constant 0.000000e+00 : f32
    %682 = vector.broadcast %cst_146 : f32 to vector<2x256xf32>
    %683 = arith.maximumf %681, %682 : vector<2x256xf32>
    %684 = arith.addf %683, %532 : vector<2x256xf32>
    %c16_i32_147 = arith.constant 16 : i32
    %685 = tpu.dynamic_rotate %684 by %c16_i32_147 dim 1 : vector<2x256xf32>, i32 -> vector<2x256xf32>
    %686 = vector.broadcast %70 : vector<1x256xf32> to vector<2x256xf32>
    %687 = arith.mulf %685, %686 : vector<2x256xf32>
    %c240_i32_148 = arith.constant 240 : i32
    %688 = tpu.dynamic_rotate %684 by %c240_i32_148 dim 1 : vector<2x256xf32>, i32 -> vector<2x256xf32>
    %689 = vector.broadcast %74 : vector<1x256xf32> to vector<2x256xf32>
    %690 = arith.mulf %688, %689 : vector<2x256xf32>
    %c2_149 = arith.constant 2 : index
    %c0_150 = arith.constant 0 : index
    %c0_151 = arith.constant 0 : index
    %c0_152 = arith.constant 0 : index
    %691 = vector.load %arg15[%c2_149, %c0_150, %c0_151, %c0_152] : memref<5x3x2x2xf32, #tpu.memory_space<vmem>>, vector<1x3x2x2xf32>
    %692 = vector.shape_cast %691 : vector<1x3x2x2xf32> to vector<3x2x2xf32>
    %c2_153 = arith.constant 2 : index
    %c0_154 = arith.constant 0 : index
    %c0_155 = arith.constant 0 : index
    %693 = vector.load %arg16[%c2_153, %c0_154, %c0_155] : memref<5x2x1xf32, #tpu.memory_space<vmem>>, vector<1x2x1xf32>
    %694 = vector.shape_cast %693 : vector<1x2x1xf32> to vector<2x1xf32>
    %695 = vector.extract_strided_slice %692 {offsets = [0, 0, 0], sizes = [1, 2, 1], strides = [1, 1, 1]} : vector<3x2x2xf32> to vector<1x2x1xf32>
    %696 = vector.shape_cast %695 : vector<1x2x1xf32> to vector<2x1xf32>
    %697 = vector.extract_strided_slice %687 {offsets = [0, 0], sizes = [1, 256], strides = [1, 1]} : vector<2x256xf32> to vector<1x256xf32>
    %698 = vector.broadcast %696 : vector<2x1xf32> to vector<2x256xf32>
    %699 = vector.broadcast %697 : vector<1x256xf32> to vector<2x256xf32>
    %700 = arith.mulf %698, %699 : vector<2x256xf32>
    %701 = vector.broadcast %694 : vector<2x1xf32> to vector<2x256xf32>
    %702 = arith.addf %701, %700 : vector<2x256xf32>
    %703 = vector.extract_strided_slice %692 {offsets = [0, 0, 1], sizes = [1, 2, 1], strides = [1, 1, 1]} : vector<3x2x2xf32> to vector<1x2x1xf32>
    %704 = vector.shape_cast %703 : vector<1x2x1xf32> to vector<2x1xf32>
    %705 = vector.extract_strided_slice %687 {offsets = [1, 0], sizes = [1, 256], strides = [1, 1]} : vector<2x256xf32> to vector<1x256xf32>
    %706 = vector.broadcast %704 : vector<2x1xf32> to vector<2x256xf32>
    %707 = vector.broadcast %705 : vector<1x256xf32> to vector<2x256xf32>
    %708 = arith.mulf %706, %707 : vector<2x256xf32>
    %709 = arith.addf %702, %708 : vector<2x256xf32>
    %710 = vector.extract_strided_slice %692 {offsets = [1, 0, 0], sizes = [1, 2, 1], strides = [1, 1, 1]} : vector<3x2x2xf32> to vector<1x2x1xf32>
    %711 = vector.shape_cast %710 : vector<1x2x1xf32> to vector<2x1xf32>
    %712 = vector.extract_strided_slice %684 {offsets = [0, 0], sizes = [1, 256], strides = [1, 1]} : vector<2x256xf32> to vector<1x256xf32>
    %713 = vector.broadcast %711 : vector<2x1xf32> to vector<2x256xf32>
    %714 = vector.broadcast %712 : vector<1x256xf32> to vector<2x256xf32>
    %715 = arith.mulf %713, %714 : vector<2x256xf32>
    %716 = arith.addf %709, %715 : vector<2x256xf32>
    %717 = vector.extract_strided_slice %692 {offsets = [1, 0, 1], sizes = [1, 2, 1], strides = [1, 1, 1]} : vector<3x2x2xf32> to vector<1x2x1xf32>
    %718 = vector.shape_cast %717 : vector<1x2x1xf32> to vector<2x1xf32>
    %719 = vector.extract_strided_slice %684 {offsets = [1, 0], sizes = [1, 256], strides = [1, 1]} : vector<2x256xf32> to vector<1x256xf32>
    %720 = vector.broadcast %718 : vector<2x1xf32> to vector<2x256xf32>
    %721 = vector.broadcast %719 : vector<1x256xf32> to vector<2x256xf32>
    %722 = arith.mulf %720, %721 : vector<2x256xf32>
    %723 = arith.addf %716, %722 : vector<2x256xf32>
    %724 = vector.extract_strided_slice %692 {offsets = [2, 0, 0], sizes = [1, 2, 1], strides = [1, 1, 1]} : vector<3x2x2xf32> to vector<1x2x1xf32>
    %725 = vector.shape_cast %724 : vector<1x2x1xf32> to vector<2x1xf32>
    %726 = vector.extract_strided_slice %690 {offsets = [0, 0], sizes = [1, 256], strides = [1, 1]} : vector<2x256xf32> to vector<1x256xf32>
    %727 = vector.broadcast %725 : vector<2x1xf32> to vector<2x256xf32>
    %728 = vector.broadcast %726 : vector<1x256xf32> to vector<2x256xf32>
    %729 = arith.mulf %727, %728 : vector<2x256xf32>
    %730 = arith.addf %723, %729 : vector<2x256xf32>
    %731 = vector.extract_strided_slice %692 {offsets = [2, 0, 1], sizes = [1, 2, 1], strides = [1, 1, 1]} : vector<3x2x2xf32> to vector<1x2x1xf32>
    %732 = vector.shape_cast %731 : vector<1x2x1xf32> to vector<2x1xf32>
    %733 = vector.extract_strided_slice %690 {offsets = [1, 0], sizes = [1, 256], strides = [1, 1]} : vector<2x256xf32> to vector<1x256xf32>
    %734 = vector.broadcast %732 : vector<2x1xf32> to vector<2x256xf32>
    %735 = vector.broadcast %733 : vector<1x256xf32> to vector<2x256xf32>
    %736 = arith.mulf %734, %735 : vector<2x256xf32>
    %737 = arith.addf %730, %736 : vector<2x256xf32>
    %738 = arith.mulf %737, %737 : vector<2x256xf32>
    %739 = tpu.concatenate %737, %738 in 0 : vector<2x256xf32>, vector<2x256xf32> -> vector<4x256xf32>
    %cst_156 = arith.constant dense<0.000000e+00> : vector<4xf32>
    %740 = vector.multi_reduction <add>, %739, %cst_156 [1] : vector<4x256xf32> to vector<4xf32>
    %741 = vector.shape_cast %740 : vector<4xf32> to vector<4x1xf32>
    %cst_157 = arith.constant 2.560000e+02 : f32
    %742 = vector.broadcast %cst_157 : f32 to vector<4x1xf32>
    %743 = arith.divf %741, %742 : vector<4x1xf32>
    %744 = vector.extract_strided_slice %743 {offsets = [0, 0], sizes = [2, 1], strides = [1, 1]} : vector<4x1xf32> to vector<2x1xf32>
    %745 = vector.extract_strided_slice %743 {offsets = [2, 0], sizes = [2, 1], strides = [1, 1]} : vector<4x1xf32> to vector<2x1xf32>
    %746 = arith.mulf %744, %744 : vector<2x1xf32>
    %747 = arith.subf %745, %746 : vector<2x1xf32>
    %cst_158 = arith.constant 0.000000e+00 : f32
    %748 = vector.broadcast %cst_158 : f32 to vector<2x1xf32>
    %749 = arith.maximumf %747, %748 : vector<2x1xf32>
    %750 = vector.broadcast %744 : vector<2x1xf32> to vector<2x256xf32>
    %751 = arith.subf %737, %750 : vector<2x256xf32>
    %cst_159 = arith.constant 9.99999974E-6 : f32
    %752 = vector.broadcast %cst_159 : f32 to vector<2x1xf32>
    %753 = arith.addf %749, %752 : vector<2x1xf32>
    %754 = math.rsqrt %753 : vector<2x1xf32>
    %755 = vector.broadcast %754 : vector<2x1xf32> to vector<2x256xf32>
    %756 = arith.mulf %751, %755 : vector<2x256xf32>
    %cst_160 = arith.constant 0.000000e+00 : f32
    %757 = vector.broadcast %cst_160 : f32 to vector<2x256xf32>
    %758 = arith.maximumf %756, %757 : vector<2x256xf32>
    %759 = arith.addf %758, %533 : vector<2x256xf32>
    %c16_i32_161 = arith.constant 16 : i32
    %760 = tpu.dynamic_rotate %759 by %c16_i32_161 dim 1 : vector<2x256xf32>, i32 -> vector<2x256xf32>
    %761 = vector.broadcast %70 : vector<1x256xf32> to vector<2x256xf32>
    %762 = arith.mulf %760, %761 : vector<2x256xf32>
    %c240_i32_162 = arith.constant 240 : i32
    %763 = tpu.dynamic_rotate %759 by %c240_i32_162 dim 1 : vector<2x256xf32>, i32 -> vector<2x256xf32>
    %764 = vector.broadcast %74 : vector<1x256xf32> to vector<2x256xf32>
    %765 = arith.mulf %763, %764 : vector<2x256xf32>
    %c3_163 = arith.constant 3 : index
    %c0_164 = arith.constant 0 : index
    %c0_165 = arith.constant 0 : index
    %c0_166 = arith.constant 0 : index
    %766 = vector.load %arg15[%c3_163, %c0_164, %c0_165, %c0_166] : memref<5x3x2x2xf32, #tpu.memory_space<vmem>>, vector<1x3x2x2xf32>
    %767 = vector.shape_cast %766 : vector<1x3x2x2xf32> to vector<3x2x2xf32>
    %c3_167 = arith.constant 3 : index
    %c0_168 = arith.constant 0 : index
    %c0_169 = arith.constant 0 : index
    %768 = vector.load %arg16[%c3_167, %c0_168, %c0_169] : memref<5x2x1xf32, #tpu.memory_space<vmem>>, vector<1x2x1xf32>
    %769 = vector.shape_cast %768 : vector<1x2x1xf32> to vector<2x1xf32>
    %770 = vector.extract_strided_slice %767 {offsets = [0, 0, 0], sizes = [1, 2, 1], strides = [1, 1, 1]} : vector<3x2x2xf32> to vector<1x2x1xf32>
    %771 = vector.shape_cast %770 : vector<1x2x1xf32> to vector<2x1xf32>
    %772 = vector.extract_strided_slice %762 {offsets = [0, 0], sizes = [1, 256], strides = [1, 1]} : vector<2x256xf32> to vector<1x256xf32>
    %773 = vector.broadcast %771 : vector<2x1xf32> to vector<2x256xf32>
    %774 = vector.broadcast %772 : vector<1x256xf32> to vector<2x256xf32>
    %775 = arith.mulf %773, %774 : vector<2x256xf32>
    %776 = vector.broadcast %769 : vector<2x1xf32> to vector<2x256xf32>
    %777 = arith.addf %776, %775 : vector<2x256xf32>
    %778 = vector.extract_strided_slice %767 {offsets = [0, 0, 1], sizes = [1, 2, 1], strides = [1, 1, 1]} : vector<3x2x2xf32> to vector<1x2x1xf32>
    %779 = vector.shape_cast %778 : vector<1x2x1xf32> to vector<2x1xf32>
    %780 = vector.extract_strided_slice %762 {offsets = [1, 0], sizes = [1, 256], strides = [1, 1]} : vector<2x256xf32> to vector<1x256xf32>
    %781 = vector.broadcast %779 : vector<2x1xf32> to vector<2x256xf32>
    %782 = vector.broadcast %780 : vector<1x256xf32> to vector<2x256xf32>
    %783 = arith.mulf %781, %782 : vector<2x256xf32>
    %784 = arith.addf %777, %783 : vector<2x256xf32>
    %785 = vector.extract_strided_slice %767 {offsets = [1, 0, 0], sizes = [1, 2, 1], strides = [1, 1, 1]} : vector<3x2x2xf32> to vector<1x2x1xf32>
    %786 = vector.shape_cast %785 : vector<1x2x1xf32> to vector<2x1xf32>
    %787 = vector.extract_strided_slice %759 {offsets = [0, 0], sizes = [1, 256], strides = [1, 1]} : vector<2x256xf32> to vector<1x256xf32>
    %788 = vector.broadcast %786 : vector<2x1xf32> to vector<2x256xf32>
    %789 = vector.broadcast %787 : vector<1x256xf32> to vector<2x256xf32>
    %790 = arith.mulf %788, %789 : vector<2x256xf32>
    %791 = arith.addf %784, %790 : vector<2x256xf32>
    %792 = vector.extract_strided_slice %767 {offsets = [1, 0, 1], sizes = [1, 2, 1], strides = [1, 1, 1]} : vector<3x2x2xf32> to vector<1x2x1xf32>
    %793 = vector.shape_cast %792 : vector<1x2x1xf32> to vector<2x1xf32>
    %794 = vector.extract_strided_slice %759 {offsets = [1, 0], sizes = [1, 256], strides = [1, 1]} : vector<2x256xf32> to vector<1x256xf32>
    %795 = vector.broadcast %793 : vector<2x1xf32> to vector<2x256xf32>
    %796 = vector.broadcast %794 : vector<1x256xf32> to vector<2x256xf32>
    %797 = arith.mulf %795, %796 : vector<2x256xf32>
    %798 = arith.addf %791, %797 : vector<2x256xf32>
    %799 = vector.extract_strided_slice %767 {offsets = [2, 0, 0], sizes = [1, 2, 1], strides = [1, 1, 1]} : vector<3x2x2xf32> to vector<1x2x1xf32>
    %800 = vector.shape_cast %799 : vector<1x2x1xf32> to vector<2x1xf32>
    %801 = vector.extract_strided_slice %765 {offsets = [0, 0], sizes = [1, 256], strides = [1, 1]} : vector<2x256xf32> to vector<1x256xf32>
    %802 = vector.broadcast %800 : vector<2x1xf32> to vector<2x256xf32>
    %803 = vector.broadcast %801 : vector<1x256xf32> to vector<2x256xf32>
    %804 = arith.mulf %802, %803 : vector<2x256xf32>
    %805 = arith.addf %798, %804 : vector<2x256xf32>
    %806 = vector.extract_strided_slice %767 {offsets = [2, 0, 1], sizes = [1, 2, 1], strides = [1, 1, 1]} : vector<3x2x2xf32> to vector<1x2x1xf32>
    %807 = vector.shape_cast %806 : vector<1x2x1xf32> to vector<2x1xf32>
    %808 = vector.extract_strided_slice %765 {offsets = [1, 0], sizes = [1, 256], strides = [1, 1]} : vector<2x256xf32> to vector<1x256xf32>
    %809 = vector.broadcast %807 : vector<2x1xf32> to vector<2x256xf32>
    %810 = vector.broadcast %808 : vector<1x256xf32> to vector<2x256xf32>
    %811 = arith.mulf %809, %810 : vector<2x256xf32>
    %812 = arith.addf %805, %811 : vector<2x256xf32>
    %813 = arith.mulf %812, %812 : vector<2x256xf32>
    %814 = tpu.concatenate %812, %813 in 0 : vector<2x256xf32>, vector<2x256xf32> -> vector<4x256xf32>
    %cst_170 = arith.constant dense<0.000000e+00> : vector<4xf32>
    %815 = vector.multi_reduction <add>, %814, %cst_170 [1] : vector<4x256xf32> to vector<4xf32>
    %816 = vector.shape_cast %815 : vector<4xf32> to vector<4x1xf32>
    %cst_171 = arith.constant 2.560000e+02 : f32
    %817 = vector.broadcast %cst_171 : f32 to vector<4x1xf32>
    %818 = arith.divf %816, %817 : vector<4x1xf32>
    %819 = vector.extract_strided_slice %818 {offsets = [0, 0], sizes = [2, 1], strides = [1, 1]} : vector<4x1xf32> to vector<2x1xf32>
    %820 = vector.extract_strided_slice %818 {offsets = [2, 0], sizes = [2, 1], strides = [1, 1]} : vector<4x1xf32> to vector<2x1xf32>
    %821 = arith.mulf %819, %819 : vector<2x1xf32>
    %822 = arith.subf %820, %821 : vector<2x1xf32>
    %cst_172 = arith.constant 0.000000e+00 : f32
    %823 = vector.broadcast %cst_172 : f32 to vector<2x1xf32>
    %824 = arith.maximumf %822, %823 : vector<2x1xf32>
    %825 = vector.broadcast %819 : vector<2x1xf32> to vector<2x256xf32>
    %826 = arith.subf %812, %825 : vector<2x256xf32>
    %cst_173 = arith.constant 9.99999974E-6 : f32
    %827 = vector.broadcast %cst_173 : f32 to vector<2x1xf32>
    %828 = arith.addf %824, %827 : vector<2x1xf32>
    %829 = math.rsqrt %828 : vector<2x1xf32>
    %830 = vector.broadcast %829 : vector<2x1xf32> to vector<2x256xf32>
    %831 = arith.mulf %826, %830 : vector<2x256xf32>
    %cst_174 = arith.constant 0.000000e+00 : f32
    %832 = vector.broadcast %cst_174 : f32 to vector<2x256xf32>
    %833 = arith.maximumf %831, %832 : vector<2x256xf32>
    %834 = arith.addf %833, %534 : vector<2x256xf32>
    %c16_i32_175 = arith.constant 16 : i32
    %835 = tpu.dynamic_rotate %834 by %c16_i32_175 dim 1 : vector<2x256xf32>, i32 -> vector<2x256xf32>
    %836 = vector.broadcast %70 : vector<1x256xf32> to vector<2x256xf32>
    %837 = arith.mulf %835, %836 : vector<2x256xf32>
    %c240_i32_176 = arith.constant 240 : i32
    %838 = tpu.dynamic_rotate %834 by %c240_i32_176 dim 1 : vector<2x256xf32>, i32 -> vector<2x256xf32>
    %839 = vector.broadcast %74 : vector<1x256xf32> to vector<2x256xf32>
    %840 = arith.mulf %838, %839 : vector<2x256xf32>
    %c4_177 = arith.constant 4 : index
    %c0_178 = arith.constant 0 : index
    %c0_179 = arith.constant 0 : index
    %c0_180 = arith.constant 0 : index
    %841 = vector.load %arg15[%c4_177, %c0_178, %c0_179, %c0_180] : memref<5x3x2x2xf32, #tpu.memory_space<vmem>>, vector<1x3x2x2xf32>
    %842 = vector.shape_cast %841 : vector<1x3x2x2xf32> to vector<3x2x2xf32>
    %c4_181 = arith.constant 4 : index
    %c0_182 = arith.constant 0 : index
    %c0_183 = arith.constant 0 : index
    %843 = vector.load %arg16[%c4_181, %c0_182, %c0_183] : memref<5x2x1xf32, #tpu.memory_space<vmem>>, vector<1x2x1xf32>
    %844 = vector.shape_cast %843 : vector<1x2x1xf32> to vector<2x1xf32>
    %845 = vector.extract_strided_slice %842 {offsets = [0, 0, 0], sizes = [1, 2, 1], strides = [1, 1, 1]} : vector<3x2x2xf32> to vector<1x2x1xf32>
    %846 = vector.shape_cast %845 : vector<1x2x1xf32> to vector<2x1xf32>
    %847 = vector.extract_strided_slice %837 {offsets = [0, 0], sizes = [1, 256], strides = [1, 1]} : vector<2x256xf32> to vector<1x256xf32>
    %848 = vector.broadcast %846 : vector<2x1xf32> to vector<2x256xf32>
    %849 = vector.broadcast %847 : vector<1x256xf32> to vector<2x256xf32>
    %850 = arith.mulf %848, %849 : vector<2x256xf32>
    %851 = vector.broadcast %844 : vector<2x1xf32> to vector<2x256xf32>
    %852 = arith.addf %851, %850 : vector<2x256xf32>
    %853 = vector.extract_strided_slice %842 {offsets = [0, 0, 1], sizes = [1, 2, 1], strides = [1, 1, 1]} : vector<3x2x2xf32> to vector<1x2x1xf32>
    %854 = vector.shape_cast %853 : vector<1x2x1xf32> to vector<2x1xf32>
    %855 = vector.extract_strided_slice %837 {offsets = [1, 0], sizes = [1, 256], strides = [1, 1]} : vector<2x256xf32> to vector<1x256xf32>
    %856 = vector.broadcast %854 : vector<2x1xf32> to vector<2x256xf32>
    %857 = vector.broadcast %855 : vector<1x256xf32> to vector<2x256xf32>
    %858 = arith.mulf %856, %857 : vector<2x256xf32>
    %859 = arith.addf %852, %858 : vector<2x256xf32>
    %860 = vector.extract_strided_slice %842 {offsets = [1, 0, 0], sizes = [1, 2, 1], strides = [1, 1, 1]} : vector<3x2x2xf32> to vector<1x2x1xf32>
    %861 = vector.shape_cast %860 : vector<1x2x1xf32> to vector<2x1xf32>
    %862 = vector.extract_strided_slice %834 {offsets = [0, 0], sizes = [1, 256], strides = [1, 1]} : vector<2x256xf32> to vector<1x256xf32>
    %863 = vector.broadcast %861 : vector<2x1xf32> to vector<2x256xf32>
    %864 = vector.broadcast %862 : vector<1x256xf32> to vector<2x256xf32>
    %865 = arith.mulf %863, %864 : vector<2x256xf32>
    %866 = arith.addf %859, %865 : vector<2x256xf32>
    %867 = vector.extract_strided_slice %842 {offsets = [1, 0, 1], sizes = [1, 2, 1], strides = [1, 1, 1]} : vector<3x2x2xf32> to vector<1x2x1xf32>
    %868 = vector.shape_cast %867 : vector<1x2x1xf32> to vector<2x1xf32>
    %869 = vector.extract_strided_slice %834 {offsets = [1, 0], sizes = [1, 256], strides = [1, 1]} : vector<2x256xf32> to vector<1x256xf32>
    %870 = vector.broadcast %868 : vector<2x1xf32> to vector<2x256xf32>
    %871 = vector.broadcast %869 : vector<1x256xf32> to vector<2x256xf32>
    %872 = arith.mulf %870, %871 : vector<2x256xf32>
    %873 = arith.addf %866, %872 : vector<2x256xf32>
    %874 = vector.extract_strided_slice %842 {offsets = [2, 0, 0], sizes = [1, 2, 1], strides = [1, 1, 1]} : vector<3x2x2xf32> to vector<1x2x1xf32>
    %875 = vector.shape_cast %874 : vector<1x2x1xf32> to vector<2x1xf32>
    %876 = vector.extract_strided_slice %840 {offsets = [0, 0], sizes = [1, 256], strides = [1, 1]} : vector<2x256xf32> to vector<1x256xf32>
    %877 = vector.broadcast %875 : vector<2x1xf32> to vector<2x256xf32>
    %878 = vector.broadcast %876 : vector<1x256xf32> to vector<2x256xf32>
    %879 = arith.mulf %877, %878 : vector<2x256xf32>
    %880 = arith.addf %873, %879 : vector<2x256xf32>
    %881 = vector.extract_strided_slice %842 {offsets = [2, 0, 1], sizes = [1, 2, 1], strides = [1, 1, 1]} : vector<3x2x2xf32> to vector<1x2x1xf32>
    %882 = vector.shape_cast %881 : vector<1x2x1xf32> to vector<2x1xf32>
    %883 = vector.extract_strided_slice %840 {offsets = [1, 0], sizes = [1, 256], strides = [1, 1]} : vector<2x256xf32> to vector<1x256xf32>
    %884 = vector.broadcast %882 : vector<2x1xf32> to vector<2x256xf32>
    %885 = vector.broadcast %883 : vector<1x256xf32> to vector<2x256xf32>
    %886 = arith.mulf %884, %885 : vector<2x256xf32>
    %887 = arith.addf %880, %886 : vector<2x256xf32>
    %888 = arith.mulf %887, %887 : vector<2x256xf32>
    %889 = tpu.concatenate %887, %888 in 0 : vector<2x256xf32>, vector<2x256xf32> -> vector<4x256xf32>
    %cst_184 = arith.constant dense<0.000000e+00> : vector<4xf32>
    %890 = vector.multi_reduction <add>, %889, %cst_184 [1] : vector<4x256xf32> to vector<4xf32>
    %891 = vector.shape_cast %890 : vector<4xf32> to vector<4x1xf32>
    %cst_185 = arith.constant 2.560000e+02 : f32
    %892 = vector.broadcast %cst_185 : f32 to vector<4x1xf32>
    %893 = arith.divf %891, %892 : vector<4x1xf32>
    %894 = vector.extract_strided_slice %893 {offsets = [0, 0], sizes = [2, 1], strides = [1, 1]} : vector<4x1xf32> to vector<2x1xf32>
    %895 = vector.extract_strided_slice %893 {offsets = [2, 0], sizes = [2, 1], strides = [1, 1]} : vector<4x1xf32> to vector<2x1xf32>
    %896 = arith.mulf %894, %894 : vector<2x1xf32>
    %897 = arith.subf %895, %896 : vector<2x1xf32>
    %cst_186 = arith.constant 0.000000e+00 : f32
    %898 = vector.broadcast %cst_186 : f32 to vector<2x1xf32>
    %899 = arith.maximumf %897, %898 : vector<2x1xf32>
    %900 = vector.broadcast %894 : vector<2x1xf32> to vector<2x256xf32>
    %901 = arith.subf %887, %900 : vector<2x256xf32>
    %cst_187 = arith.constant 9.99999974E-6 : f32
    %902 = vector.broadcast %cst_187 : f32 to vector<2x1xf32>
    %903 = arith.addf %899, %902 : vector<2x1xf32>
    %904 = math.rsqrt %903 : vector<2x1xf32>
    %905 = vector.broadcast %904 : vector<2x1xf32> to vector<2x256xf32>
    %906 = arith.mulf %901, %905 : vector<2x256xf32>
    %cst_188 = arith.constant 0.000000e+00 : f32
    %907 = vector.broadcast %cst_188 : f32 to vector<2x256xf32>
    %908 = arith.maximumf %906, %907 : vector<2x256xf32>
    %c0_189 = arith.constant 0 : index
    %c0_190 = arith.constant 0 : index
    %909 = vector.load %arg20[%c0_189, %c0_190] : memref<12x256xf32, #tpu.memory_space<vmem>>, vector<2x256xf32>
    tpu.vector_store %arg20[%c0_189, %c0_190], %529 {strides = array<i32>} : memref<12x256xf32, #tpu.memory_space<vmem>>, vector<2x256xf32>,
    %c2_191 = arith.constant 2 : index
    %c0_192 = arith.constant 0 : index
    %910 = vector.load %arg20[%c2_191, %c0_192] : memref<12x256xf32, #tpu.memory_space<vmem>>, vector<2x256xf32>
    tpu.vector_store %arg20[%c2_191, %c0_192], %608 {strides = array<i32>} : memref<12x256xf32, #tpu.memory_space<vmem>>, vector<2x256xf32>,
    %c4_193 = arith.constant 4 : index
    %c0_194 = arith.constant 0 : index
    %911 = vector.load %arg20[%c4_193, %c0_194] : memref<12x256xf32, #tpu.memory_space<vmem>>, vector<2x256xf32>
    tpu.vector_store %arg20[%c4_193, %c0_194], %683 {strides = array<i32>} : memref<12x256xf32, #tpu.memory_space<vmem>>, vector<2x256xf32>,
    %c6_195 = arith.constant 6 : index
    %c0_196 = arith.constant 0 : index
    %912 = vector.load %arg20[%c6_195, %c0_196] : memref<12x256xf32, #tpu.memory_space<vmem>>, vector<2x256xf32>
    tpu.vector_store %arg20[%c6_195, %c0_196], %758 {strides = array<i32>} : memref<12x256xf32, #tpu.memory_space<vmem>>, vector<2x256xf32>,
    %c8_197 = arith.constant 8 : index
    %c0_198 = arith.constant 0 : index
    %913 = vector.load %arg20[%c8_197, %c0_198] : memref<12x256xf32, #tpu.memory_space<vmem>>, vector<2x256xf32>
    tpu.vector_store %arg20[%c8_197, %c0_198], %833 {strides = array<i32>} : memref<12x256xf32, #tpu.memory_space<vmem>>, vector<2x256xf32>,
    %c10_199 = arith.constant 10 : index
    %c0_200 = arith.constant 0 : index
    %914 = vector.load %arg20[%c10_199, %c0_200] : memref<12x256xf32, #tpu.memory_space<vmem>>, vector<2x256xf32>
    tpu.vector_store %arg20[%c10_199, %c0_200], %908 {strides = array<i32>} : memref<12x256xf32, #tpu.memory_space<vmem>>, vector<2x256xf32>,
    %c0_201 = arith.constant 0 : index
    %c0_202 = arith.constant 0 : index
    %915 = vector.load %arg17[%c0_201, %c0_202] : memref<12x12xf32, #tpu.memory_space<vmem>>, vector<12x12xf32>
    %c0_203 = arith.constant 0 : index
    %c0_204 = arith.constant 0 : index
    %916 = vector.load %arg20[%c0_203, %c0_204] : memref<12x256xf32, #tpu.memory_space<vmem>>, vector<12x256xf32>
    %cst_205 = arith.constant dense<0.000000e+00> : vector<12x256xf32>
    %917 = tpu.matmul %915, %916, %cst_205 {dimension_numbers = #tpu.dot_dimension_numbers<[1], [0], [0], [1], [0, 0, 1, 1], [], []>} : vector<12x12xf32>, vector<12x256xf32>, vector<12x256xf32> -> vector<12x256xf32>
    %c0_206 = arith.constant 0 : index
    %c0_207 = arith.constant 0 : index
    %918 = vector.load %arg18[%c0_206, %c0_207] : memref<12x1xf32, #tpu.memory_space<vmem>>, vector<12x1xf32>
    %919 = vector.broadcast %918 : vector<12x1xf32> to vector<12x256xf32>
    %920 = arith.addf %917, %919 : vector<12x256xf32>
    %921 = arith.addf %920, %19 : vector<12x256xf32>
    %cst_208 = arith.constant 0.000000e+00 : f32
    %922 = vector.broadcast %cst_208 : f32 to vector<12x256xf32>
    %923 = arith.maximumf %921, %922 : vector<12x256xf32>
    %c0_209 = arith.constant 0 : index
    %c0_210 = arith.constant 0 : index
    %c0_211 = arith.constant 0 : index
    %924 = vector.load %arg19[%c0_209, %c0_210, %c0_211] : memref<1x12x256xf32, #tpu.memory_space<vmem>>, vector<1x12x256xf32>
    %925 = vector.shape_cast %924 : vector<1x12x256xf32> to vector<12x256xf32>
    %926 = vector.shape_cast %923 : vector<12x256xf32> to vector<1x12x256xf32>
    tpu.vector_store %arg19[%c0_209, %c0_210, %c0_211], %926 {strides = array<i32>} : memref<1x12x256xf32, #tpu.memory_space<vmem>>, vector<1x12x256xf32>,
    return
  }
  func.func @transform_0(%arg0: i32) -> (i32, i32, i32) {
    %c0_i32 = arith.constant 0 : i32
    %c0_i32_0 = arith.constant 0 : i32
    %c0_i32_1 = arith.constant 0 : i32
    return %arg0, %c0_i32, %c0_i32_0 : i32, i32, i32
  }
  func.func @transform_1(%arg0: i32) -> (i32, i32, i32) {
    %c0_i32 = arith.constant 0 : i32
    %c0_i32_0 = arith.constant 0 : i32
    %c0_i32_1 = arith.constant 0 : i32
    return %arg0, %c0_i32, %c0_i32_0 : i32, i32, i32
  }
  func.func @transform_2(%arg0: i32) -> (i32, i32) {
    %c0_i32 = arith.constant 0 : i32
    %c0_i32_0 = arith.constant 0 : i32
    %c0_i32_1 = arith.constant 0 : i32
    return %c0_i32, %c0_i32_0 : i32, i32
  }
  func.func @transform_3(%arg0: i32) -> (i32, i32) {
    %c0_i32 = arith.constant 0 : i32
    %c0_i32_0 = arith.constant 0 : i32
    %c0_i32_1 = arith.constant 0 : i32
    return %c0_i32, %c0_i32_0 : i32, i32
  }
  func.func @transform_4(%arg0: i32) -> (i32, i32) {
    %c0_i32 = arith.constant 0 : i32
    %c0_i32_0 = arith.constant 0 : i32
    %c0_i32_1 = arith.constant 0 : i32
    return %c0_i32, %c0_i32_0 : i32, i32
  }
  func.func @transform_5(%arg0: i32) -> (i32, i32) {
    %c0_i32 = arith.constant 0 : i32
    %c0_i32_0 = arith.constant 0 : i32
    %c0_i32_1 = arith.constant 0 : i32
    return %c0_i32, %c0_i32_0 : i32, i32
  }
  func.func @transform_6(%arg0: i32) -> (i32, i32) {
    %c0_i32 = arith.constant 0 : i32
    %c0_i32_0 = arith.constant 0 : i32
    %c0_i32_1 = arith.constant 0 : i32
    return %c0_i32, %c0_i32_0 : i32, i32
  }
  func.func @transform_7(%arg0: i32) -> (i32, i32) {
    %c0_i32 = arith.constant 0 : i32
    %c0_i32_0 = arith.constant 0 : i32
    %c0_i32_1 = arith.constant 0 : i32
    return %c0_i32, %c0_i32_0 : i32, i32
  }
  func.func @transform_8(%arg0: i32) -> (i32, i32, i32, i32) {
    %c0_i32 = arith.constant 0 : i32
    %c0_i32_0 = arith.constant 0 : i32
    %c0_i32_1 = arith.constant 0 : i32
    %c0_i32_2 = arith.constant 0 : i32
    %c0_i32_3 = arith.constant 0 : i32
    return %c0_i32, %c0_i32_0, %c0_i32_1, %c0_i32_2 : i32, i32, i32, i32
  }
  func.func @transform_9(%arg0: i32) -> (i32, i32, i32) {
    %c0_i32 = arith.constant 0 : i32
    %c0_i32_0 = arith.constant 0 : i32
    %c0_i32_1 = arith.constant 0 : i32
    %c0_i32_2 = arith.constant 0 : i32
    return %c0_i32, %c0_i32_0, %c0_i32_1 : i32, i32, i32
  }
  func.func @transform_10(%arg0: i32) -> (i32, i32) {
    %c0_i32 = arith.constant 0 : i32
    %c0_i32_0 = arith.constant 0 : i32
    %c0_i32_1 = arith.constant 0 : i32
    return %c0_i32, %c0_i32_0 : i32, i32
  }
  func.func @transform_11(%arg0: i32) -> (i32, i32) {
    %c0_i32 = arith.constant 0 : i32
    %c0_i32_0 = arith.constant 0 : i32
    %c0_i32_1 = arith.constant 0 : i32
    return %c0_i32, %c0_i32_0 : i32, i32
  }
  func.func @transform_12(%arg0: i32) -> (i32, i32) {
    %c0_i32 = arith.constant 0 : i32
    %c0_i32_0 = arith.constant 0 : i32
    %c0_i32_1 = arith.constant 0 : i32
    return %c0_i32, %c0_i32_0 : i32, i32
  }
  func.func @transform_13(%arg0: i32) -> (i32, i32) {
    %c0_i32 = arith.constant 0 : i32
    %c0_i32_0 = arith.constant 0 : i32
    %c0_i32_1 = arith.constant 0 : i32
    return %c0_i32, %c0_i32_0 : i32, i32
  }
  func.func @transform_14(%arg0: i32) -> (i32, i32, i32, i32) {
    %c0_i32 = arith.constant 0 : i32
    %c0_i32_0 = arith.constant 0 : i32
    %c0_i32_1 = arith.constant 0 : i32
    %c0_i32_2 = arith.constant 0 : i32
    %c0_i32_3 = arith.constant 0 : i32
    return %c0_i32, %c0_i32_0, %c0_i32_1, %c0_i32_2 : i32, i32, i32, i32
  }
  func.func @transform_15(%arg0: i32) -> (i32, i32, i32) {
    %c0_i32 = arith.constant 0 : i32
    %c0_i32_0 = arith.constant 0 : i32
    %c0_i32_1 = arith.constant 0 : i32
    %c0_i32_2 = arith.constant 0 : i32
    return %c0_i32, %c0_i32_0, %c0_i32_1 : i32, i32, i32
  }
  func.func @transform_16(%arg0: i32) -> (i32, i32) {
    %c0_i32 = arith.constant 0 : i32
    %c0_i32_0 = arith.constant 0 : i32
    %c0_i32_1 = arith.constant 0 : i32
    return %c0_i32, %c0_i32_0 : i32, i32
  }
  func.func @transform_17(%arg0: i32) -> (i32, i32) {
    %c0_i32 = arith.constant 0 : i32
    %c0_i32_0 = arith.constant 0 : i32
    %c0_i32_1 = arith.constant 0 : i32
    return %c0_i32, %c0_i32_0 : i32, i32
  }
  func.func @transform_18(%arg0: i32) -> (i32, i32, i32) {
    %c0_i32 = arith.constant 0 : i32
    %c0_i32_0 = arith.constant 0 : i32
    %c0_i32_1 = arith.constant 0 : i32
    return %arg0, %c0_i32, %c0_i32_0 : i32, i32, i32
  }
}

</mosaic_0001>

<llo_original>
// kernel: conv_up_forward.1
$region0: #{conv_up_forward.1}
  #allocation0 [shape = 'u32[]', space=smem, size = 0x4, offset = 0x4, fixed_abs, tag = 'smem constant byte address 0x4 - core index']
  #allocation1 [shape = 'u32[144,128]{1,0:T(1,128)}', space=vmem, size = 0x12000, scoped, tag = 'internal scratch']
  #allocation2 [shape = 'f32[12,256]{1,0:T(8,128)}', space=vmem, size = 0x4000, scoped, tag = 'scratch operand']
  %s0 = inlined_call_operand.vmem [shape: f32[2,24,64], index: 0, kind: input, shape index: {}]
  %s1 = inlined_call_operand.vmem [shape: f32[2,12,256], index: 1, kind: input, shape index: {}]
  %s2 = inlined_call_operand.vmem [shape: f32[64,256], index: 2, kind: input, shape index: {}]
  %s3 = inlined_call_operand.vmem [shape: f32[12,24], index: 3, kind: input, shape index: {}]
  %s4 = inlined_call_operand.vmem [shape: f32[12,1], index: 4, kind: input, shape index: {}]
  %s5 = inlined_call_operand.vmem [shape: f32[24,12], index: 5, kind: input, shape index: {}]
  %s6 = inlined_call_operand.vmem [shape: f32[24,12], index: 6, kind: input, shape index: {}]
  %s7 = inlined_call_operand.vmem [shape: f32[24,1], index: 7, kind: input, shape index: {}]
  %s8 = inlined_call_operand.vmem [shape: f32[5,3,2,2], index: 8, kind: input, shape index: {}]
  %s9 = inlined_call_operand.vmem [shape: f32[5,2,1], index: 9, kind: input, shape index: {}]
  %s10 = inlined_call_operand.vmem [shape: f32[12,12], index: 10, kind: input, shape index: {}]
  %s11 = inlined_call_operand.vmem [shape: f32[12,1], index: 11, kind: input, shape index: {}]
  %s12 = inlined_call_operand.vmem [shape: f32[12,2], index: 12, kind: input, shape index: {}]
  %s13 = inlined_call_operand.vmem [shape: f32[12,1], index: 13, kind: input, shape index: {}]
  %s14 = inlined_call_operand.vmem [shape: f32[5,3,2,2], index: 14, kind: input, shape index: {}]
  %s15 = inlined_call_operand.vmem [shape: f32[5,2,1], index: 15, kind: input, shape index: {}]
  %s16 = inlined_call_operand.vmem [shape: f32[12,12], index: 16, kind: input, shape index: {}]
  %s17 = inlined_call_operand.vmem [shape: f32[12,1], index: 17, kind: input, shape index: {}]
  %s18 = inlined_call_operand.vmem [shape: f32[2,12,256], index: 18, kind: output, shape index: {}]
  %s19 = sld [smem:[#allocation0]]
  $region105: #{conv_up_forward.1} parent=0
    _
  %s21 = ssub.s32 1, %s19
  %s22 = scalar_select 0, %s21, %s19
  loop: start=0, step=1, limit=4
  $region2: #{conv_up_forward.1} parent=0 // loop_pre_header
    _
  $region3: #{conv_up_forward.1} parent=0 // loop_header
    %s24 = sphi 0, %s28
    %p25 = scmp.ge.s32.totalorder %s24, 4
    %s34 = sphi 0, %s36
    %s37 = sphi 0, %s34
    %s38 = sphi 0, %s37
    %s54 = sphi 0, %s38
    %s60 = sphi 0, %s62
    %s63 = sphi 0, %s60
    %s64 = sphi 0, %s63
    %s80 = sphi 0, %s64
    %s84 = sphi 0, %s84
    %s86 = sphi 0, %s84
    %s87 = sphi 0, %s86
    %s101 = sphi 0, %s87
    %s105 = sphi 0, %s105
    %s107 = sphi 0, %s105
    %s108 = sphi 0, %s107
    %s122 = sphi 0, %s108
    %s126 = sphi 0, %s126
    %s128 = sphi 0, %s126
    %s129 = sphi 0, %s128
    %s143 = sphi 0, %s129
    %s147 = sphi 0, %s147
    %s149 = sphi 0, %s147
    %s150 = sphi 0, %s149
    %s164 = sphi 0, %s150
    %s168 = sphi 0, %s168
    %s170 = sphi 0, %s168
    %s171 = sphi 0, %s170
    %s185 = sphi 0, %s171
    %s189 = sphi 0, %s189
    %s191 = sphi 0, %s189
    %s192 = sphi 0, %s191
    %s206 = sphi 0, %s192
    %s210 = sphi 0, %s210
    %s212 = sphi 0, %s210
    %s213 = sphi 0, %s212
    %s227 = sphi 0, %s213
    %s231 = sphi 0, %s231
    %s233 = sphi 0, %s231
    %s234 = sphi 0, %s233
    %s248 = sphi 0, %s234
    %s252 = sphi 0, %s252
    %s254 = sphi 0, %s252
    %s255 = sphi 0, %s254
    %s269 = sphi 0, %s255
    %s273 = sphi 0, %s273
    %s275 = sphi 0, %s273
    %s276 = sphi 0, %s275
    %s290 = sphi 0, %s276
    %s294 = sphi 0, %s294
    %s296 = sphi 0, %s294
    %s297 = sphi 0, %s296
    %s311 = sphi 0, %s297
    %s315 = sphi 0, %s315
    %s317 = sphi 0, %s315
    %s318 = sphi 0, %s317
    %s332 = sphi 0, %s318
    %s336 = sphi 0, %s336
    %s338 = sphi 0, %s336
    %s339 = sphi 0, %s338
    %s353 = sphi 0, %s339
    %s357 = sphi 0, %s357
    %s359 = sphi 0, %s357
    %s360 = sphi 0, %s359
    %s374 = sphi 0, %s360
    %s378 = sphi 0, %s378
    %s380 = sphi 0, %s378
    %s381 = sphi 0, %s380
    %s395 = sphi 0, %s381
    %s399 = sphi 0, %s399
    %s401 = sphi 0, %s399
    %s402 = sphi 0, %s401
    %s416 = sphi 0, %s402
    %s422 = sphi 0, %s424
    %s425 = sphi 0, %s422
    %s426 = sphi 0, %s425
    %s442 = sphi 0, %s426
  $region4: #{conv_up_forward.1} parent=0 // loop_header_branch
    %27 = sbr.rel (%p25) target = $region8
  $region5: #{conv_up_forward.1} parent=0 // loop_body
    %s29 = ssub.s32 %s24, 1
    %s30 = ssub.s32 %s24, 2
    %s31 = sadd.s32 %s24, 1
    %s32 = ssub.s32 %s24, %s31
    %p33 = scmp.eq.s32.totalorder %s32, 0
    %s35 = sadd.s32 %s34, 1
    %s36 = scalar_select %p33, %s34, %s35
    %p39 = pneg %p33
    %p40 = scmp.eq.s32.totalorder %s24, 1
    %p41 = por %p39, %p40
    %p42 = scmp.ne.s32.totalorder %s34, %s37
    %p43 = scmp.eq.s32.totalorder %s24, 0
    %p44 = por %p42, %p43
    %p45 = scmp.ne.s32.totalorder %s34, %s37
    %p46 = scmp.eq.s32.totalorder %s29, 1
    %p47 = por %p45, %p46
    %p48 = scmp.ne.s32.totalorder %s37, %s38
    %p49 = scmp.eq.s32.totalorder %s29, 0
    %p50 = por %p48, %p49
    %p51 = scmp.ne.s32.totalorder %s37, %s38
    %p52 = scmp.eq.s32.totalorder %s30, 1
    %p53 = por %p51, %p52
    %p55 = scmp.ne.s32.totalorder %s38, %s54
    %p56 = scmp.eq.s32.totalorder %s30, 0
    %p57 = por %p55, %p56
    %s58 = ssub.s32 %s24, %s31
    %p59 = scmp.eq.s32.totalorder %s58, 0
    %s61 = sadd.s32 %s60, 1
    %s62 = scalar_select %p59, %s60, %s61
    %p65 = pneg %p59
    %p66 = scmp.eq.s32.totalorder %s24, 1
    %p67 = por %p65, %p66
    %p68 = scmp.ne.s32.totalorder %s60, %s63
    %p69 = scmp.eq.s32.totalorder %s24, 0
    %p70 = por %p68, %p69
    %p71 = scmp.ne.s32.totalorder %s60, %s63
    %p72 = scmp.eq.s32.totalorder %s29, 1
    %p73 = por %p71, %p72
    %p74 = scmp.ne.s32.totalorder %s63, %s64
    %p75 = scmp.eq.s32.totalorder %s29, 0
    %p76 = por %p74, %p75
    %p77 = scmp.ne.s32.totalorder %s63, %s64
    %p78 = scmp.eq.s32.totalorder %s30, 1
    %p79 = por %p77, %p78
    %p81 = scmp.ne.s32.totalorder %s64, %s80
    %p82 = scmp.eq.s32.totalorder %s30, 0
    %p83 = por %p81, %p82
    %s85 = sadd.s32 %s84, 1
    %p88 = scmp.eq.s32.totalorder %s24, 1
    %p89 = scmp.ne.s32.totalorder %s84, %s86
    %p90 = scmp.eq.s32.totalorder %s24, 0
    %p91 = por %p89, %p90
    %p92 = scmp.ne.s32.totalorder %s84, %s86
    %p93 = scmp.eq.s32.totalorder %s29, 1
    %p94 = por %p92, %p93
    %p95 = scmp.ne.s32.totalorder %s86, %s87
    %p96 = scmp.eq.s32.totalorder %s29, 0
    %p97 = por %p95, %p96
    %p98 = scmp.ne.s32.totalorder %s86, %s87
    %p99 = scmp.eq.s32.totalorder %s30, 1
    %p100 = por %p98, %p99
    %p102 = scmp.ne.s32.totalorder %s87, %s101
    %p103 = scmp.eq.s32.totalorder %s30, 0
    %p104 = por %p102, %p103
    %s106 = sadd.s32 %s105, 1
    %p109 = scmp.eq.s32.totalorder %s24, 1
    %p110 = scmp.ne.s32.totalorder %s105, %s107
    %p111 = scmp.eq.s32.totalorder %s24, 0
    %p112 = por %p110, %p111
    %p113 = scmp.ne.s32.totalorder %s105, %s107
    %p114 = scmp.eq.s32.totalorder %s29, 1
    %p115 = por %p113, %p114
    %p116 = scmp.ne.s32.totalorder %s107, %s108
    %p117 = scmp.eq.s32.totalorder %s29, 0
    %p118 = por %p116, %p117
    %p119 = scmp.ne.s32.totalorder %s107, %s108
    %p120 = scmp.eq.s32.totalorder %s30, 1
    %p121 = por %p119, %p120
    %p123 = scmp.ne.s32.totalorder %s108, %s122
    %p124 = scmp.eq.s32.totalorder %s30, 0
    %p125 = por %p123, %p124
    %s127 = sadd.s32 %s126, 1
    %p130 = scmp.eq.s32.totalorder %s24, 1
    %p131 = scmp.ne.s32.totalorder %s126, %s128
    %p132 = scmp.eq.s32.totalorder %s24, 0
    %p133 = por %p131, %p132
    %p134 = scmp.ne.s32.totalorder %s126, %s128
    %p135 = scmp.eq.s32.totalorder %s29, 1
    %p136 = por %p134, %p135
    %p137 = scmp.ne.s32.totalorder %s128, %s129
    %p138 = scmp.eq.s32.totalorder %s29, 0
    %p139 = por %p137, %p138
    %p140 = scmp.ne.s32.totalorder %s128, %s129
    %p141 = scmp.eq.s32.totalorder %s30, 1
    %p142 = por %p140, %p141
    %p144 = scmp.ne.s32.totalorder %s129, %s143
    %p145 = scmp.eq.s32.totalorder %s30, 0
    %p146 = por %p144, %p145
    %s148 = sadd.s32 %s147, 1
    %p151 = scmp.eq.s32.totalorder %s24, 1
    %p152 = scmp.ne.s32.totalorder %s147, %s149
    %p153 = scmp.eq.s32.totalorder %s24, 0
    %p154 = por %p152, %p153
    %p155 = scmp.ne.s32.totalorder %s147, %s149
    %p156 = scmp.eq.s32.totalorder %s29, 1
    %p157 = por %p155, %p156
    %p158 = scmp.ne.s32.totalorder %s149, %s150
    %p159 = scmp.eq.s32.totalorder %s29, 0
    %p160 = por %p158, %p159
    %p161 = scmp.ne.s32.totalorder %s149, %s150
    %p162 = scmp.eq.s32.totalorder %s30, 1
    %p163 = por %p161, %p162
    %p165 = scmp.ne.s32.totalorder %s150, %s164
    %p166 = scmp.eq.s32.totalorder %s30, 0
    %p167 = por %p165, %p166
    %s169 = sadd.s32 %s168, 1
    %p172 = scmp.eq.s32.totalorder %s24, 1
    %p173 = scmp.ne.s32.totalorder %s168, %s170
    %p174 = scmp.eq.s32.totalorder %s24, 0
    %p175 = por %p173, %p174
    %p176 = scmp.ne.s32.totalorder %s168, %s170
    %p177 = scmp.eq.s32.totalorder %s29, 1
    %p178 = por %p176, %p177
    %p179 = scmp.ne.s32.totalorder %s170, %s171
    %p180 = scmp.eq.s32.totalorder %s29, 0
    %p181 = por %p179, %p180
    %p182 = scmp.ne.s32.totalorder %s170, %s171
    %p183 = scmp.eq.s32.totalorder %s30, 1
    %p184 = por %p182, %p183
    %p186 = scmp.ne.s32.totalorder %s171, %s185
    %p187 = scmp.eq.s32.totalorder %s30, 0
    %p188 = por %p186, %p187
    %s190 = sadd.s32 %s189, 1
    %p193 = scmp.eq.s32.totalorder %s24, 1
    %p194 = scmp.ne.s32.totalorder %s189, %s191
    %p195 = scmp.eq.s32.totalorder %s24, 0
    %p196 = por %p194, %p195
    %p197 = scmp.ne.s32.totalorder %s189, %s191
    %p198 = scmp.eq.s32.totalorder %s29, 1
    %p199 = por %p197, %p198
    %p200 = scmp.ne.s32.totalorder %s191, %s192
    %p201 = scmp.eq.s32.totalorder %s29, 0
    %p202 = por %p200, %p201
    %p203 = scmp.ne.s32.totalorder %s191, %s192
    %p204 = scmp.eq.s32.totalorder %s30, 1
    %p205 = por %p203, %p204
    %p207 = scmp.ne.s32.totalorder %s192, %s206
    %p208 = scmp.eq.s32.totalorder %s30, 0
    %p209 = por %p207, %p208
    %s211 = sadd.s32 %s210, 1
    %p214 = scmp.eq.s32.totalorder %s24, 1
    %p215 = scmp.ne.s32.totalorder %s210, %s212
    %p216 = scmp.eq.s32.totalorder %s24, 0
    %p217 = por %p215, %p216
    %p218 = scmp.ne.s32.totalorder %s210, %s212
    %p219 = scmp.eq.s32.totalorder %s29, 1
    %p220 = por %p218, %p219
    %p221 = scmp.ne.s32.totalorder %s212, %s213
    %p222 = scmp.eq.s32.totalorder %s29, 0
    %p223 = por %p221, %p222
    %p224 = scmp.ne.s32.totalorder %s212, %s213
    %p225 = scmp.eq.s32.totalorder %s30, 1
    %p226 = por %p224, %p225
    %p228 = scmp.ne.s32.totalorder %s213, %s227
    %p229 = scmp.eq.s32.totalorder %s30, 0
    %p230 = por %p228, %p229
    %s232 = sadd.s32 %s231, 1
    %p235 = scmp.eq.s32.totalorder %s24, 1
    %p236 = scmp.ne.s32.totalorder %s231, %s233
    %p237 = scmp.eq.s32.totalorder %s24, 0
    %p238 = por %p236, %p237
    %p239 = scmp.ne.s32.totalorder %s231, %s233
    %p240 = scmp.eq.s32.totalorder %s29, 1
    %p241 = por %p239, %p240
    %p242 = scmp.ne.s32.totalorder %s233, %s234
    %p243 = scmp.eq.s32.totalorder %s29, 0
    %p244 = por %p242, %p243
    %p245 = scmp.ne.s32.totalorder %s233, %s234
    %p246 = scmp.eq.s32.totalorder %s30, 1
    %p247 = por %p245, %p246
    %p249 = scmp.ne.s32.totalorder %s234, %s248
    %p250 = scmp.eq.s32.totalorder %s30, 0
    %p251 = por %p249, %p250
    %s253 = sadd.s32 %s252, 1
    %p256 = scmp.eq.s32.totalorder %s24, 1
    %p257 = scmp.ne.s32.totalorder %s252, %s254
    %p258 = scmp.eq.s32.totalorder %s24, 0
    %p259 = por %p257, %p258
    %p260 = scmp.ne.s32.totalorder %s252, %s254
    %p261 = scmp.eq.s32.totalorder %s29, 1
    %p262 = por %p260, %p261
    %p263 = scmp.ne.s32.totalorder %s254, %s255
    %p264 = scmp.eq.s32.totalorder %s29, 0
    %p265 = por %p263, %p264
    %p266 = scmp.ne.s32.totalorder %s254, %s255
    %p267 = scmp.eq.s32.totalorder %s30, 1
    %p268 = por %p266, %p267
    %p270 = scmp.ne.s32.totalorder %s255, %s269
    %p271 = scmp.eq.s32.totalorder %s30, 0
    %p272 = por %p270, %p271
    %s274 = sadd.s32 %s273, 1
    %p277 = scmp.eq.s32.totalorder %s24, 1
    %p278 = scmp.ne.s32.totalorder %s273, %s275
    %p279 = scmp.eq.s32.totalorder %s24, 0
    %p280 = por %p278, %p279
    %p281 = scmp.ne.s32.totalorder %s273, %s275
    %p282 = scmp.eq.s32.totalorder %s29, 1
    %p283 = por %p281, %p282
    %p284 = scmp.ne.s32.totalorder %s275, %s276
    %p285 = scmp.eq.s32.totalorder %s29, 0
    %p286 = por %p284, %p285
    %p287 = scmp.ne.s32.totalorder %s275, %s276
    %p288 = scmp.eq.s32.totalorder %s30, 1
    %p289 = por %p287, %p288
    %p291 = scmp.ne.s32.totalorder %s276, %s290
    %p292 = scmp.eq.s32.totalorder %s30, 0
    %p293 = por %p291, %p292
    %s295 = sadd.s32 %s294, 1
    %p298 = scmp.eq.s32.totalorder %s24, 1
    %p299 = scmp.ne.s32.totalorder %s294, %s296
    %p300 = scmp.eq.s32.totalorder %s24, 0
    %p301 = por %p299, %p300
    %p302 = scmp.ne.s32.totalorder %s294, %s296
    %p303 = scmp.eq.s32.totalorder %s29, 1
    %p304 = por %p302, %p303
    %p305 = scmp.ne.s32.totalorder %s296, %s297
    %p306 = scmp.eq.s32.totalorder %s29, 0
    %p307 = por %p305, %p306
    %p308 = scmp.ne.s32.totalorder %s296, %s297
    %p309 = scmp.eq.s32.totalorder %s30, 1
    %p310 = por %p308, %p309
    %p312 = scmp.ne.s32.totalorder %s297, %s311
    %p313 = scmp.eq.s32.totalorder %s30, 0
    %p314 = por %p312, %p313
    %s316 = sadd.s32 %s315, 1
    %p319 = scmp.eq.s32.totalorder %s24, 1
    %p320 = scmp.ne.s32.totalorder %s315, %s317
    %p321 = scmp.eq.s32.totalorder %s24, 0
    %p322 = por %p320, %p321
    %p323 = scmp.ne.s32.totalorder %s315, %s317
    %p324 = scmp.eq.s32.totalorder %s29, 1
    %p325 = por %p323, %p324
    %p326 = scmp.ne.s32.totalorder %s317, %s318
    %p327 = scmp.eq.s32.totalorder %s29, 0
    %p328 = por %p326, %p327
    %p329 = scmp.ne.s32.totalorder %s317, %s318
    %p330 = scmp.eq.s32.totalorder %s30, 1
    %p331 = por %p329, %p330
    %p333 = scmp.ne.s32.totalorder %s318, %s332
    %p334 = scmp.eq.s32.totalorder %s30, 0
    %p335 = por %p333, %p334
    %s337 = sadd.s32 %s336, 1
    %p340 = scmp.eq.s32.totalorder %s24, 1
    %p341 = scmp.ne.s32.totalorder %s336, %s338
    %p342 = scmp.eq.s32.totalorder %s24, 0
    %p343 = por %p341, %p342
    %p344 = scmp.ne.s32.totalorder %s336, %s338
    %p345 = scmp.eq.s32.totalorder %s29, 1
    %p346 = por %p344, %p345
    %p347 = scmp.ne.s32.totalorder %s338, %s339
    %p348 = scmp.eq.s32.totalorder %s29, 0
    %p349 = por %p347, %p348
    %p350 = scmp.ne.s32.totalorder %s338, %s339
    %p351 = scmp.eq.s32.totalorder %s30, 1
    %p352 = por %p350, %p351
    %p354 = scmp.ne.s32.totalorder %s339, %s353
    %p355 = scmp.eq.s32.totalorder %s30, 0
    %p356 = por %p354, %p355
    %s358 = sadd.s32 %s357, 1
    %p361 = scmp.eq.s32.totalorder %s24, 1
    %p362 = scmp.ne.s32.totalorder %s357, %s359
    %p363 = scmp.eq.s32.totalorder %s24, 0
    %p364 = por %p362, %p363
    %p365 = scmp.ne.s32.totalorder %s357, %s359
    %p366 = scmp.eq.s32.totalorder %s29, 1
    %p367 = por %p365, %p366
    %p368 = scmp.ne.s32.totalorder %s359, %s360
    %p369 = scmp.eq.s32.totalorder %s29, 0
    %p370 = por %p368, %p369
    %p371 = scmp.ne.s32.totalorder %s359, %s360
    %p372 = scmp.eq.s32.totalorder %s30, 1
    %p373 = por %p371, %p372
    %p375 = scmp.ne.s32.totalorder %s360, %s374
    %p376 = scmp.eq.s32.totalorder %s30, 0
    %p377 = por %p375, %p376
    %s379 = sadd.s32 %s378, 1
    %p382 = scmp.eq.s32.totalorder %s24, 1
    %p383 = scmp.ne.s32.totalorder %s378, %s380
    %p384 = scmp.eq.s32.totalorder %s24, 0
    %p385 = por %p383, %p384
    %p386 = scmp.ne.s32.totalorder %s378, %s380
    %p387 = scmp.eq.s32.totalorder %s29, 1
    %p388 = por %p386, %p387
    %p389 = scmp.ne.s32.totalorder %s380, %s381
    %p390 = scmp.eq.s32.totalorder %s29, 0
    %p391 = por %p389, %p390
    %p392 = scmp.ne.s32.totalorder %s380, %s381
    %p393 = scmp.eq.s32.totalorder %s30, 1
    %p394 = por %p392, %p393
    %p396 = scmp.ne.s32.totalorder %s381, %s395
    %p397 = scmp.eq.s32.totalorder %s30, 0
    %p398 = por %p396, %p397
    %s400 = sadd.s32 %s399, 1
    %p403 = scmp.eq.s32.totalorder %s24, 1
    %p404 = scmp.ne.s32.totalorder %s399, %s401
    %p405 = scmp.eq.s32.totalorder %s24, 0
    %p406 = por %p404, %p405
    %p407 = scmp.ne.s32.totalorder %s399, %s401
    %p408 = scmp.eq.s32.totalorder %s29, 1
    %p409 = por %p407, %p408
    %p410 = scmp.ne.s32.totalorder %s401, %s402
    %p411 = scmp.eq.s32.totalorder %s29, 0
    %p412 = por %p410, %p411
    %p413 = scmp.ne.s32.totalorder %s401, %s402
    %p414 = scmp.eq.s32.totalorder %s30, 1
    %p415 = por %p413, %p414
    %p417 = scmp.ne.s32.totalorder %s402, %s416
    %p418 = scmp.eq.s32.totalorder %s30, 0
    %p419 = por %p417, %p418
    %s420 = ssub.s32 %s24, %s31
    %p421 = scmp.eq.s32.totalorder %s420, 0
    %s423 = sadd.s32 %s422, 1
    %s424 = scalar_select %p421, %s422, %s423
    %p427 = pneg %p421
    %p428 = scmp.eq.s32.totalorder %s24, 1
    %p429 = por %p427, %p428
    %p430 = scmp.ne.s32.totalorder %s422, %s425
    %p431 = scmp.eq.s32.totalorder %s24, 0
    %p432 = por %p430, %p431
    %p433 = scmp.ne.s32.totalorder %s422, %s425
    %p434 = scmp.eq.s32.totalorder %s29, 1
    %p435 = por %p433, %p434
    %p436 = scmp.ne.s32.totalorder %s425, %s426
    %p437 = scmp.eq.s32.totalorder %s29, 0
    %p438 = por %p436, %p437
    %p439 = scmp.ne.s32.totalorder %s425, %s426
    %p440 = scmp.eq.s32.totalorder %s30, 1
    %p441 = por %p439, %p440
    %p443 = scmp.ne.s32.totalorder %s426, %s442
    %p444 = scmp.eq.s32.totalorder %s30, 0
    %p445 = por %p443, %p444
    %p446 = scmp.le.s32.totalorder 1, %s24
    %p447 = scmp.lt.s32.totalorder %s24, 3
    %p448 = pnand %p446, %p447
    %p449 = pneg %p448
    // Predicated region
    $region9: #{conv_up_forward.1} parent=5 // pred_check
      _
    $region10: #{conv_up_forward.1} parent=5 // pred_check_branch
      %451 = sbr.rel (%p448) target = $region12
    $region11: #{conv_up_forward.1} parent=5 // pred_region
      %s452 = ssub.s32 %s24, 1
      // Predicated region
      $region13: #{conv_up_forward.1} parent=11 // pred_check
        %p453 = pneg %p97
      $region14: #{conv_up_forward.1} parent=11 // pred_check_branch
        %455 = sbr.rel (%p453) target = $region16
      $region15: #{conv_up_forward.1} parent=11 // pred_region
        _
      $region16: #{conv_up_forward.1} parent=11 // pred_fallthru
        _
      // Predicated region
      $region17: #{conv_up_forward.1} parent=11 // pred_check
        %p456 = pneg %p118
      $region18: #{conv_up_forward.1} parent=11 // pred_check_branch
        %458 = sbr.rel (%p456) target = $region20
      $region19: #{conv_up_forward.1} parent=11 // pred_region
        _
      $region20: #{conv_up_forward.1} parent=11 // pred_fallthru
        _
      // Predicated region
      $region21: #{conv_up_forward.1} parent=11 // pred_check
        %p459 = pneg %p139
      $region22: #{conv_up_forward.1} parent=11 // pred_check_branch
        %461 = sbr.rel (%p459) target = $region24
      $region23: #{conv_up_forward.1} parent=11 // pred_region
        _
      $region24: #{conv_up_forward.1} parent=11 // pred_fallthru
        _
      // Predicated region
      $region25: #{conv_up_forward.1} parent=11 // pred_check
        %p462 = pneg %p160
      $region26: #{conv_up_forward.1} parent=11 // pred_check_branch
        %464 = sbr.rel (%p462) target = $region28
      $region27: #{conv_up_forward.1} parent=11 // pred_region
        _
      $region28: #{conv_up_forward.1} parent=11 // pred_fallthru
        _
      // Predicated region
      $region29: #{conv_up_forward.1} parent=11 // pred_check
        %p465 = pneg %p181
      $region30: #{conv_up_forward.1} parent=11 // pred_check_branch
        %467 = sbr.rel (%p465) target = $region32
      $region31: #{conv_up_forward.1} parent=11 // pred_region
        _
      $region32: #{conv_up_forward.1} parent=11 // pred_fallthru
        _
      // Predicated region
      $region33: #{conv_up_forward.1} parent=11 // pred_check
        %p468 = pneg %p202
      $region34: #{conv_up_forward.1} parent=11 // pred_check_branch
        %470 = sbr.rel (%p468) target = $region36
      $region35: #{conv_up_forward.1} parent=11 // pred_region
        _
      $region36: #{conv_up_forward.1} parent=11 // pred_fallthru
        _
      // Predicated region
      $region37: #{conv_up_forward.1} parent=11 // pred_check
        %p471 = pneg %p223
      $region38: #{conv_up_forward.1} parent=11 // pred_check_branch
        %473 = sbr.rel (%p471) target = $region40
      $region39: #{conv_up_forward.1} parent=11 // pred_region
        _
      $region40: #{conv_up_forward.1} parent=11 // pred_fallthru
        _
      // Predicated region
      $region41: #{conv_up_forward.1} parent=11 // pred_check
        %p474 = pneg %p244
      $region42: #{conv_up_forward.1} parent=11 // pred_check_branch
        %476 = sbr.rel (%p474) target = $region44
      $region43: #{conv_up_forward.1} parent=11 // pred_region
        _
      $region44: #{conv_up_forward.1} parent=11 // pred_fallthru
        _
      // Predicated region
      $region45: #{conv_up_forward.1} parent=11 // pred_check
        %p477 = pneg %p265
      $region46: #{conv_up_forward.1} parent=11 // pred_check_branch
        %479 = sbr.rel (%p477) target = $region48
      $region47: #{conv_up_forward.1} parent=11 // pred_region
        _
      $region48: #{conv_up_forward.1} parent=11 // pred_fallthru
        _
      // Predicated region
      $region49: #{conv_up_forward.1} parent=11 // pred_check
        %p480 = pneg %p286
      $region50: #{conv_up_forward.1} parent=11 // pred_check_branch
        %482 = sbr.rel (%p480) target = $region52
      $region51: #{conv_up_forward.1} parent=11 // pred_region
        _
      $region52: #{conv_up_forward.1} parent=11 // pred_fallthru
        _
      // Predicated region
      $region53: #{conv_up_forward.1} parent=11 // pred_check
        %p483 = pneg %p307
      $region54: #{conv_up_forward.1} parent=11 // pred_check_branch
        %485 = sbr.rel (%p483) target = $region56
      $region55: #{conv_up_forward.1} parent=11 // pred_region
        _
      $region56: #{conv_up_forward.1} parent=11 // pred_fallthru
        _
      // Predicated region
      $region57: #{conv_up_forward.1} parent=11 // pred_check
        %p486 = pneg %p328
      $region58: #{conv_up_forward.1} parent=11 // pred_check_branch
        %488 = sbr.rel (%p486) target = $region60
      $region59: #{conv_up_forward.1} parent=11 // pred_region
        _
      $region60: #{conv_up_forward.1} parent=11 // pred_fallthru
        _
      // Predicated region
      $region61: #{conv_up_forward.1} parent=11 // pred_check
        %p489 = pneg %p349
      $region62: #{conv_up_forward.1} parent=11 // pred_check_branch
        %491 = sbr.rel (%p489) target = $region64
      $region63: #{conv_up_forward.1} parent=11 // pred_region
        _
      $region64: #{conv_up_forward.1} parent=11 // pred_fallthru
        _
      // Predicated region
      $region65: #{conv_up_forward.1} parent=11 // pred_check
        %p492 = pneg %p370
      $region66: #{conv_up_forward.1} parent=11 // pred_check_branch
        %494 = sbr.rel (%p492) target = $region68
      $region67: #{conv_up_forward.1} parent=11 // pred_region
        _
      $region68: #{conv_up_forward.1} parent=11 // pred_fallthru
        _
      // Predicated region
      $region69: #{conv_up_forward.1} parent=11 // pred_check
        %p495 = pneg %p391
      $region70: #{conv_up_forward.1} parent=11 // pred_check_branch
        %497 = sbr.rel (%p495) target = $region72
      $region71: #{conv_up_forward.1} parent=11 // pred_region
        _
      $region72: #{conv_up_forward.1} parent=11 // pred_fallthru
        _
      // Predicated region
      $region73: #{conv_up_forward.1} parent=11 // pred_check
        %p498 = pneg %p412
      $region74: #{conv_up_forward.1} parent=11 // pred_check_branch
        %500 = sbr.rel (%p498) target = $region76
      $region75: #{conv_up_forward.1} parent=11 // pred_region
        _
      $region76: #{conv_up_forward.1} parent=11 // pred_fallthru
        _
    $region12: #{conv_up_forward.1} parent=5 // pred_fallthru
      _
    %p501 = scmp.lt.s32.totalorder %s24, 2
    // Predicated region
    $region77: #{conv_up_forward.1} parent=5 // pred_check
      %p502 = pneg %p501
    $region78: #{conv_up_forward.1} parent=5 // pred_check_branch
      %504 = sbr.rel (%p502) target = $region80
    $region79: #{conv_up_forward.1} parent=5 // pred_region
      // Predicated region
      $region81: #{conv_up_forward.1} parent=79 // pred_check
        %p505 = pneg %p44
      $region82: #{conv_up_forward.1} parent=79 // pred_check_branch
        %507 = sbr.rel (%p505) target = $region84
      $region83: #{conv_up_forward.1} parent=79 // pred_region
        %p508 = scmp.lt.s32.totalorder %s24, 1
        %s509 = scalar_select %p508, %s24, 1
        %s510 = smul.addr %s509, 3
        %s511 = smul.addr %s510, 8
        %s512 = scalar_lea.vmem %s0, %s511
      $region84: #{conv_up_forward.1} parent=79 // pred_fallthru
        _
      // Predicated region
      $region85: #{conv_up_forward.1} parent=79 // pred_check
        %p513 = pneg %p70
      $region86: #{conv_up_forward.1} parent=79 // pred_check_branch
        %515 = sbr.rel (%p513) target = $region88
      $region87: #{conv_up_forward.1} parent=79 // pred_region
        %p516 = scmp.lt.s32.totalorder %s24, 1
        %s517 = scalar_select %p516, %s24, 1
        %s518 = smul.addr %s517, 4
        %s519 = smul.addr %s518, 8
        %s520 = scalar_lea.vmem %s1, %s519
      $region88: #{conv_up_forward.1} parent=79 // pred_fallthru
        _
    $region80: #{conv_up_forward.1} parent=5 // pred_fallthru
      _
    %p521 = scmp.le.s32.totalorder 1, %s24
    %p522 = scmp.lt.s32.totalorder %s24, 3
    %p523 = pnand %p521, %p522
    %p524 = pneg %p523
    // Predicated region
    $region89: #{conv_up_forward.1} parent=5 // pred_check
      _
    $region90: #{conv_up_forward.1} parent=5 // pred_check_branch
      %526 = sbr.rel (%p523) target = $region92
    $region91: #{conv_up_forward.1} parent=5 // pred_region
      %s527 = ssub.s32 %s24, 1
      %p528 = scmp.lt.s32.totalorder %s29, 1
      %s529 = scalar_select %p528, %s29, 1
      %s530 = smul.addr %s529, 3
      %s531 = smul.addr %s530, 8
      %s532 = scalar_lea.vmem %s0, %s531
      %p533 = pneg %p50
      %p534 = pneg %p47
      %p535 = scmp.lt.s32.totalorder %s29, 1
      %s536 = scalar_select %p535, %s29, 1
      %s537 = smul.addr %s536, 4
      %s538 = smul.addr %s537, 8
      %s539 = scalar_lea.vmem %s1, %s538
      %p540 = pneg %p76
      %p541 = pneg %p73
      %p542 = pneg %p97
      %p543 = pneg %p94
      %p544 = pneg %p118
      %p545 = pneg %p115
      %p546 = pneg %p139
      %p547 = pneg %p136
      %p548 = pneg %p160
      %p549 = pneg %p157
      %p550 = pneg %p181
      %p551 = pneg %p178
      %p552 = pneg %p202
      %p553 = pneg %p199
      %p554 = pneg %p223
      %p555 = pneg %p220
      %p556 = pneg %p244
      %p557 = pneg %p241
      %p558 = pneg %p265
      %p559 = pneg %p262
      %p560 = pneg %p286
      %p561 = pneg %p283
      %p562 = pneg %p307
      %p563 = pneg %p304
      %p564 = pneg %p328
      %p565 = pneg %p325
      %p566 = pneg %p349
      %p567 = pneg %p346
      %p568 = pneg %p370
      %p569 = pneg %p367
      %p570 = pneg %p391
      %p571 = pneg %p388
      %p572 = pneg %p412
      %p573 = pneg %p409
      %p574 = pneg %p438
      %p575 = pneg %p435
      %p576 = scmp.lt.s32.totalorder %s29, 1
      %s577 = scalar_select %p576, %s29, 1
      %s578 = smul.addr %s577, 4
      %s579 = smul.addr %s578, 8
      %s580 = scalar_lea.vmem %s18, %s579
      %p581 = scmp.lt.s32.totalorder %s29, 1
      %s582 = scalar_select %p581, %s29, 1
      %s583 = smul.addr %s582, 3
      %s584 = smul.addr %s583, 8
      %s585 = scalar_lea.vmem %s0, %s584
      %p586 = scmp.lt.s32.totalorder %s29, 1
      %s587 = scalar_select %p586, %s29, 1
      %s588 = smul.addr %s587, 4
      %s589 = smul.addr %s588, 8
      %s590 = scalar_lea.vmem %s1, %s589
      %p591 = scmp.lt.s32.totalorder %s29, 1
      %s592 = scalar_select %p591, %s29, 1
      %s593 = smul.addr %s592, 4
      %s594 = smul.addr %s593, 8
      %s595 = scalar_lea.vmem %s18, %s594
      %v596 = vld [vmem:[%s585] sm:$0xff]
      %v597 = vld [vmem:[%s585 + $0x8] sm:$0xff]
      %v598 = vld [vmem:[%s585 + $0x10] sm:$0xff]
      %v599 = vld [vmem:[%s590] sm:$0xff]
      %v600 = vld [vmem:[%s590 + $0x8] sm:$0xff]
      %v601 = vld [vmem:[%s590 + $0x10] sm:$0xf]
      %v602 = vld [vmem:[%s590 + $0x18] sm:$0xf]
      %v603 = vld [vmem:[%s3] sm:$0xff]
      %v604 = vld [vmem:[%s3 + $0x8] sm:$0xf]
      %v605 = vld [vmem:[%s4] sm:$0xff]
      %v606 = vld [vmem:[%s4 + $0x8] sm:$0xf]
      %608 = vset.pattern.permute.xlu0 0
      %609 = vperm.xlu0 %608, %v605
      %v610 = vpop.permute.xlu0 %609
      %613 = vset.pattern.permute.xlu0 0
      %614 = vperm.xlu0 %613, %v606
      %v615 = vpop.permute.xlu0 %614
      %vm617 = vcmask 195584
      %v619 = vsel %vm617, %v603, 0
      %v622 = vsel %vm617, %v604, 0
      %624 = vmatprep.subr.mxu0 0.0
      %625 = vmatpush1.msra.mxu0 0.0
      %626 = vmatprep.subr.mxu0 0.0
      %627 = vmatpush1.msra.mxu0 0.0
      %628 = vmatprep.subr.mxu0 0.0
      %629 = vmatpush1.msra.mxu0 0.0
      %630 = vmatprep.subr.mxu0 0.0
      %631 = vmatpush1.msra.mxu0 0.0
      %632 = vmatprep.subr.mxu0 0.0
      %633 = vmatpush1.msra.mxu0 0.0
      %634 = vmatprep.subr.mxu0 0.0
      %635 = vmatpush1.msra.mxu0 0.0
      %636 = vmatprep.subr.mxu0 0.0
      %637 = vmatpush1.msra.mxu0 0.0
      %638 = vmatprep.subr.mxu0 0.0
      %639 = vmatpush1.msra.mxu0 0.0
      %640 = vmatprep.subr.mxu0 0.0
      %641 = vmatpush1.msra.mxu0 0.0
      %642 = vmatprep.subr.mxu0 0.0
      %643 = vmatpush1.msra.mxu0 0.0
      %644 = vmatprep.subr.mxu0 0.0
      %645 = vmatpush1.msra.mxu0 0.0
      %646 = vmatprep.subr.mxu0 0.0
      %647 = vmatpush1.msra.mxu0 0.0
      %648 = vmatprep.subr.mxu0 0.0
      %649 = vmatpush1.msra.mxu0 0.0
      %650 = vmatprep.subr.mxu0 0.0
      %651 = vmatpush1.msra.mxu0 %v598
      %652 = vmatprep.subr.mxu0 0.0
      %653 = vmatpush1.msra.mxu0 %v597
      %654 = vmatprep.subr.mxu0 0.0
      %655 = vmatpush1.msra.mxu0 %v596
      %656 = vmatprep.subr.mxu0 0.0
      %657 = vmatpush2.msra.mxu0 0.0
      %658 = vmatprep.subr.mxu0 0.0
      %659 = vmatpush2.msra.mxu0 0.0
      %660 = vmatprep.subr.mxu0 0.0
      %661 = vmatpush2.msra.mxu0 0.0
      %662 = vmatprep.subr.mxu0 0.0
      %663 = vmatpush2.msra.mxu0 0.0
      %664 = vmatprep.subr.mxu0 0.0
      %665 = vmatpush2.msra.mxu0 0.0
      %666 = vmatprep.subr.mxu0 0.0
      %667 = vmatpush2.msra.mxu0 0.0
      %668 = vmatprep.subr.mxu0 0.0
      %669 = vmatpush2.msra.mxu0 0.0
      %670 = vmatprep.subr.mxu0 0.0
      %671 = vmatpush2.msra.mxu0 0.0
      %672 = vmatprep.subr.mxu0 0.0
      %673 = vmatpush2.msra.mxu0 0.0
      %674 = vmatprep.subr.mxu0 0.0
      %675 = vmatpush2.msra.mxu0 0.0
      %676 = vmatprep.subr.mxu0 0.0
      %677 = vmatpush2.msra.mxu0 0.0
      %678 = vmatprep.subr.mxu0 0.0
      %679 = vmatpush2.msra.mxu0 0.0
      %680 = vmatprep.subr.mxu0 0.0
      %681 = vmatpush2.msra.mxu0 0.0
      %682 = vmatprep.subr.mxu0 0.0
      %683 = vmatpush2.msra.mxu0 0.0
      %684 = vmatprep.subr.mxu0 0.0
      %685 = vmatpush2.msra.mxu0 0.0
      %686 = vmatprep.subr.mxu0 0.0
      %687 = vmatpush2.msra.mxu0 0.0
      %688 = vmatprep.mubr.f32.mxu0 0.0
      %689 = vmatmul.mubr.f32.gmra.mxu0 %v619
      %v690 = vpop.f32.mrf.mxu0
      %v691 = vadd.f32 %v610, %v690
      %v692 = vpop.f32.mrf.mxu0
      %693 = vmatprep.mubr.f32.mxu0 0.0
      %694 = vmatmul.mubr.f32.gmra.mxu0 %v622
      %v695 = vpop.f32.mrf.mxu0
      %v696 = vadd.f32 %v615, %v695
      %v697 = vpop.f32.mrf.mxu0
      %698 = vdwg.mxu0
      %v699 = vld [vmem:[%s2] sm:$0xff]
      %v700 = vld [vmem:[%s2 + $0x8] sm:$0xff]
      %v701 = vld [vmem:[%s2 + $0x10] sm:$0xff]
      %v702 = vld [vmem:[%s2 + $0x18] sm:$0xff]
      %v703 = vld [vmem:[%s2 + $0x20] sm:$0xff]
      %v704 = vld [vmem:[%s2 + $0x28] sm:$0xff]
      %v705 = vld [vmem:[%s2 + $0x30] sm:$0xff]
      %v706 = vld [vmem:[%s2 + $0x38] sm:$0xff]
      %v707 = vld [vmem:[%s2 + $0x40] sm:$0xff]
      %v708 = vld [vmem:[%s2 + $0x48] sm:$0xff]
      %v709 = vld [vmem:[%s2 + $0x50] sm:$0xff]
      %v710 = vld [vmem:[%s2 + $0x58] sm:$0xff]
      %v711 = vld [vmem:[%s2 + $0x60] sm:$0xff]
      %v712 = vld [vmem:[%s2 + $0x68] sm:$0xff]
      %v713 = vld [vmem:[%s2 + $0x70] sm:$0xff]
      %v714 = vld [vmem:[%s2 + $0x78] sm:$0xff]
      %vm715 = vcmask 523264
      %v717 = vsel %vm715, %v691, 0
      %v720 = vsel %vm715, %v696, 0
      %722 = vmatprep.subr.mxu0 0.0
      %723 = vmatpush1.msra.mxu0 0.0
      %724 = vmatprep.subr.mxu0 0.0
      %725 = vmatpush1.msra.mxu0 0.0
      %726 = vmatprep.subr.mxu0 0.0
      %727 = vmatpush1.msra.mxu0 0.0
      %728 = vmatprep.subr.mxu0 0.0
      %729 = vmatpush1.msra.mxu0 0.0
      %730 = vmatprep.subr.mxu0 0.0
      %731 = vmatpush1.msra.mxu0 0.0
      %732 = vmatprep.subr.mxu0 0.0
      %733 = vmatpush1.msra.mxu0 0.0
      %734 = vmatprep.subr.mxu0 0.0
      %735 = vmatpush1.msra.mxu0 0.0
      %736 = vmatprep.subr.mxu0 0.0
      %737 = vmatpush1.msra.mxu0 0.0
      %738 = vmatprep.subr.mxu0 %v714
      %739 = vmatpush1.msra.mxu0 %v713
      %740 = vmatprep.subr.mxu0 %v712
      %741 = vmatpush1.msra.mxu0 %v711
      %742 = vmatprep.subr.mxu0 %v710
      %743 = vmatpush1.msra.mxu0 %v709
      %744 = vmatprep.subr.mxu0 %v708
      %745 = vmatpush1.msra.mxu0 %v707
      %746 = vmatprep.subr.mxu0 %v706
      %747 = vmatpush1.msra.mxu0 %v705
      %748 = vmatprep.subr.mxu0 %v704
      %749 = vmatpush1.msra.mxu0 %v703
      %750 = vmatprep.subr.mxu0 %v702
      %751 = vmatpush1.msra.mxu0 %v701
      %752 = vmatprep.subr.mxu0 %v700
      %753 = vmatpush1.msra.mxu0 %v699
      %754 = vmatprep.subr.mxu0 0.0
      %755 = vmatpush2.msra.mxu0 0.0
      %756 = vmatprep.subr.mxu0 0.0
      %757 = vmatpush2.msra.mxu0 0.0
      %758 = vmatprep.subr.mxu0 0.0
      %759 = vmatpush2.msra.mxu0 0.0
      %760 = vmatprep.subr.mxu0 0.0
      %761 = vmatpush2.msra.mxu0 0.0
      %762 = vmatprep.subr.mxu0 0.0
      %763 = vmatpush2.msra.mxu0 0.0
      %764 = vmatprep.subr.mxu0 0.0
      %765 = vmatpush2.msra.mxu0 0.0
      %766 = vmatprep.subr.mxu0 0.0
      %767 = vmatpush2.msra.mxu0 0.0
      %768 = vmatprep.subr.mxu0 0.0
      %769 = vmatpush2.msra.mxu0 0.0
      %770 = vmatprep.subr.mxu0 0.0
      %771 = vmatpush2.msra.mxu0 0.0
      %772 = vmatprep.subr.mxu0 0.0
      %773 = vmatpush2.msra.mxu0 0.0
      %774 = vmatprep.subr.mxu0 0.0
      %775 = vmatpush2.msra.mxu0 0.0
      %776 = vmatprep.subr.mxu0 0.0
      %777 = vmatpush2.msra.mxu0 0.0
      %778 = vmatprep.subr.mxu0 0.0
      %779 = vmatpush2.msra.mxu0 0.0
      %780 = vmatprep.subr.mxu0 0.0
      %781 = vmatpush2.msra.mxu0 0.0
      %782 = vmatprep.subr.mxu0 0.0
      %783 = vmatpush2.msra.mxu0 0.0
      %784 = vmatprep.subr.mxu0 0.0
      %785 = vmatpush2.msra.mxu0 0.0
      %786 = vmatprep.mubr.f32.mxu0 0.0
      %787 = vmatmul.mubr.f32.gmra.mxu0 %v717
      %v788 = vpop.f32.mrf.mxu0
      %v789 = vadd.f32 0.0, %v788
      %v790 = vpop.f32.mrf.mxu0
      %v791 = vadd.f32 0.0, %v790
      %792 = vmatprep.mubr.f32.mxu0 0.0
      %793 = vmatmul.mubr.f32.gmra.mxu0 %v720
      %v794 = vpop.f32.mrf.mxu0
      %v795 = vadd.f32 0.0, %v794
      %v796 = vpop.f32.mrf.mxu0
      %v797 = vadd.f32 0.0, %v796
      %798 = vdwg.mxu0
      %v799 = vld [vmem:[%s5] sm:$0xff]
      %v800 = vld [vmem:[%s5 + $0x8] sm:$0xff]
      %v801 = vld [vmem:[%s5 + $0x10] sm:$0xff]
      %v802 = vld [vmem:[%s6] sm:$0xff]
      %v803 = vld [vmem:[%s6 + $0x8] sm:$0xff]
      %v804 = vld [vmem:[%s6 + $0x10] sm:$0xff]
      %vm805 = vcmask 97280
      %v807 = vsel %vm805, %v802, 0
      %v810 = vsel %vm805, %v803, 0
      %v813 = vsel %vm805, %v804, 0
      %vm815 = vcmask 1043456
      %v817 = vsel %vm815, %v601, 0
      %v820 = vsel %vm815, %v602, 0
      %822 = vmatprep.subr.mxu0 0.0
      %823 = vmatpush1.msra.mxu0 0.0
      %824 = vmatprep.subr.mxu0 0.0
      %825 = vmatpush1.msra.mxu0 0.0
      %826 = vmatprep.subr.mxu0 0.0
      %827 = vmatpush1.msra.mxu0 0.0
      %828 = vmatprep.subr.mxu0 0.0
      %829 = vmatpush1.msra.mxu0 0.0
      %830 = vmatprep.subr.mxu0 0.0
      %831 = vmatpush1.msra.mxu0 0.0
      %832 = vmatprep.subr.mxu0 0.0
      %833 = vmatpush1.msra.mxu0 0.0
      %834 = vmatprep.subr.mxu0 0.0
      %835 = vmatpush1.msra.mxu0 0.0
      %836 = vmatprep.subr.mxu0 0.0
      %837 = vmatpush1.msra.mxu0 0.0
      %838 = vmatprep.subr.mxu0 0.0
      %839 = vmatpush1.msra.mxu0 0.0
      %840 = vmatprep.subr.mxu0 0.0
      %841 = vmatpush1.msra.mxu0 0.0
      %842 = vmatprep.subr.mxu0 0.0
      %843 = vmatpush1.msra.mxu0 0.0
      %844 = vmatprep.subr.mxu0 0.0
      %845 = vmatpush1.msra.mxu0 0.0
      %846 = vmatprep.subr.mxu0 0.0
      %847 = vmatpush1.msra.mxu0 0.0
      %848 = vmatprep.subr.mxu0 0.0
      %849 = vmatpush1.msra.mxu0 0.0
      %850 = vmatprep.subr.mxu0 %v820
      %851 = vmatpush1.msra.mxu0 %v817
      %852 = vmatprep.subr.mxu0 %v600
      %853 = vmatpush1.msra.mxu0 %v599
      %854 = vmatprep.subr.mxu0 0.0
      %855 = vmatpush2.msra.mxu0 0.0
      %856 = vmatprep.subr.mxu0 0.0
      %857 = vmatpush2.msra.mxu0 0.0
      %858 = vmatprep.subr.mxu0 0.0
      %859 = vmatpush2.msra.mxu0 0.0
      %860 = vmatprep.subr.mxu0 0.0
      %861 = vmatpush2.msra.mxu0 0.0
      %862 = vmatprep.subr.mxu0 0.0
      %863 = vmatpush2.msra.mxu0 0.0
      %864 = vmatprep.subr.mxu0 0.0
      %865 = vmatpush2.msra.mxu0 0.0
      %866 = vmatprep.subr.mxu0 0.0
      %867 = vmatpush2.msra.mxu0 0.0
      %868 = vmatprep.subr.mxu0 0.0
      %869 = vmatpush2.msra.mxu0 0.0
      %870 = vmatprep.subr.mxu0 0.0
      %871 = vmatpush2.msra.mxu0 0.0
      %872 = vmatprep.subr.mxu0 0.0
      %873 = vmatpush2.msra.mxu0 0.0
      %874 = vmatprep.subr.mxu0 0.0
      %875 = vmatpush2.msra.mxu0 0.0
      %876 = vmatprep.subr.mxu0 0.0
      %877 = vmatpush2.msra.mxu0 0.0
      %878 = vmatprep.subr.mxu0 0.0
      %879 = vmatpush2.msra.mxu0 0.0
      %880 = vmatprep.subr.mxu0 0.0
      %881 = vmatpush2.msra.mxu0 0.0
      %882 = vmatprep.subr.mxu0 0.0
      %883 = vmatpush2.msra.mxu0 0.0
      %884 = vmatprep.subr.mxu0 0.0
      %885 = vmatpush2.msra.mxu0 0.0
      %886 = vmatprep.mubr.f32.mxu0 0.0
      %887 = vmatmul.mubr.f32.gmra.mxu0 %v807
      %v888 = vpop.f32.mrf.mxu0
      %v889 = vadd.f32 0.0, %v888
      %v890 = vpop.f32.mrf.mxu0
      %v891 = vadd.f32 0.0, %v890
      %892 = vmatprep.mubr.f32.mxu0 0.0
      %893 = vmatmul.mubr.f32.gmra.mxu0 %v810
      %v894 = vpop.f32.mrf.mxu0
      %v895 = vadd.f32 0.0, %v894
      %v896 = vpop.f32.mrf.mxu0
      %v897 = vadd.f32 0.0, %v896
      %898 = vmatprep.mubr.f32.mxu0 0.0
      %899 = vmatmul.mubr.f32.gmra.mxu0 %v813
      %v900 = vpop.f32.mrf.mxu0
      %v901 = vadd.f32 0.0, %v900
      %v902 = vpop.f32.mrf.mxu0
      %v903 = vadd.f32 0.0, %v902
      %904 = vdwg.mxu0
      %v906 = vsel %vm805, %v799, 0
      %v909 = vsel %vm805, %v800, 0
      %v912 = vsel %vm805, %v801, 0
      %v915 = vsel %vm815, %v795, 0
      %v918 = vsel %vm815, %v797, 0
      %920 = vmatprep.subr.mxu0 0.0
      %921 = vmatpush1.msra.mxu0 0.0
      %922 = vmatprep.subr.mxu0 0.0
      %923 = vmatpush1.msra.mxu0 0.0
      %924 = vmatprep.subr.mxu0 0.0
      %925 = vmatpush1.msra.mxu0 0.0
      %926 = vmatprep.subr.mxu0 0.0
      %927 = vmatpush1.msra.mxu0 0.0
      %928 = vmatprep.subr.mxu0 0.0
      %929 = vmatpush1.msra.mxu0 0.0
      %930 = vmatprep.subr.mxu0 0.0
      %931 = vmatpush1.msra.mxu0 0.0
      %932 = vmatprep.subr.mxu0 0.0
      %933 = vmatpush1.msra.mxu0 0.0
      %934 = vmatprep.subr.mxu0 0.0
      %935 = vmatpush1.msra.mxu0 0.0
      %936 = vmatprep.subr.mxu0 0.0
      %937 = vmatpush1.msra.mxu0 0.0
      %938 = vmatprep.subr.mxu0 0.0
      %939 = vmatpush1.msra.mxu0 0.0
      %940 = vmatprep.subr.mxu0 0.0
      %941 = vmatpush1.msra.mxu0 0.0
      %942 = vmatprep.subr.mxu0 0.0
      %943 = vmatpush1.msra.mxu0 0.0
      %944 = vmatprep.subr.mxu0 0.0
      %945 = vmatpush1.msra.mxu0 0.0
      %946 = vmatprep.subr.mxu0 0.0
      %947 = vmatpush1.msra.mxu0 0.0
      %948 = vmatprep.subr.mxu0 %v918
      %949 = vmatpush1.msra.mxu0 %v915
      %950 = vmatprep.subr.mxu0 %v791
      %951 = vmatpush1.msra.mxu0 %v789
      %952 = vmatprep.subr.mxu0 0.0
      %953 = vmatpush2.msra.mxu0 0.0
      %954 = vmatprep.subr.mxu0 0.0
      %955 = vmatpush2.msra.mxu0 0.0
      %956 = vmatprep.subr.mxu0 0.0
      %957 = vmatpush2.msra.mxu0 0.0
      %958 = vmatprep.subr.mxu0 0.0
      %959 = vmatpush2.msra.mxu0 0.0
      %960 = vmatprep.subr.mxu0 0.0
      %961 = vmatpush2.msra.mxu0 0.0
      %962 = vmatprep.subr.mxu0 0.0
      %963 = vmatpush2.msra.mxu0 0.0
      %964 = vmatprep.subr.mxu0 0.0
      %965 = vmatpush2.msra.mxu0 0.0
      %966 = vmatprep.subr.mxu0 0.0
      %967 = vmatpush2.msra.mxu0 0.0
      %968 = vmatprep.subr.mxu0 0.0
      %969 = vmatpush2.msra.mxu0 0.0
      %970 = vmatprep.subr.mxu0 0.0
      %971 = vmatpush2.msra.mxu0 0.0
      %972 = vmatprep.subr.mxu0 0.0
      %973 = vmatpush2.msra.mxu0 0.0
      %974 = vmatprep.subr.mxu0 0.0
      %975 = vmatpush2.msra.mxu0 0.0
      %976 = vmatprep.subr.mxu0 0.0
      %977 = vmatpush2.msra.mxu0 0.0
      %978 = vmatprep.subr.mxu0 0.0
      %979 = vmatpush2.msra.mxu0 0.0
      %980 = vmatprep.subr.mxu0 0.0
      %981 = vmatpush2.msra.mxu0 0.0
      %982 = vmatprep.subr.mxu0 0.0
      %983 = vmatpush2.msra.mxu0 0.0
      %984 = vmatprep.mubr.f32.mxu0 0.0
      %985 = vmatmul.mubr.f32.gmra.mxu0 %v906
      %v986 = vpop.f32.mrf.mxu0
      %v987 = vadd.f32 %v889, %v986
      %v988 = vpop.f32.mrf.mxu0
      %v989 = vadd.f32 %v891, %v988
      %990 = vmatprep.mubr.f32.mxu0 0.0
      %991 = vmatmul.mubr.f32.gmra.mxu0 %v909
      %v992 = vpop.f32.mrf.mxu0
      %v993 = vadd.f32 %v895, %v992
      %v994 = vpop.f32.mrf.mxu0
      %v995 = vadd.f32 %v897, %v994
      %996 = vmatprep.mubr.f32.mxu0 0.0
      %997 = vmatmul.mubr.f32.gmra.mxu0 %v912
      %v998 = vpop.f32.mrf.mxu0
      %v999 = vadd.f32 %v901, %v998
      %v1000 = vpop.f32.mrf.mxu0
      %v1001 = vadd.f32 %v903, %v1000
      %1002 = vdwg.mxu0
      %v1003 = vld [vmem:[%s7] sm:$0xff]
      %v1004 = vld [vmem:[%s7 + $0x8] sm:$0xff]
      %v1005 = vld [vmem:[%s7 + $0x10] sm:$0xff]
      %1007 = vset.pattern.permute.xlu0 0
      %1008 = vperm.xlu0 %1007, %v1003
      %v1009 = vpop.permute.xlu0 %1008
      %1012 = vset.pattern.permute.xlu0 0
      %1013 = vperm.xlu0 %1012, %v1004
      %v1014 = vpop.permute.xlu0 %1013
      %1017 = vset.pattern.permute.xlu0 0
      %1018 = vperm.xlu0 %1017, %v1005
      %v1019 = vpop.permute.xlu0 %1018
      %v1021 = vadd.f32 %v987, %v1009
      %v1022 = vadd.f32 %v989, %v1009
      %v1023 = vadd.f32 %v993, %v1014
      %v1024 = vadd.f32 %v995, %v1014
      %v1025 = vadd.f32 %v999, %v1019
      %v1026 = vadd.f32 %v1001, %v1019
      %v1027 = vmul.f32 %v1023, %v1023
      %v1028 = vmul.f32 %v1024, %v1024
      %v1029 = vmul.f32 %v1025, %v1025
      %v1030 = vmul.f32 %v1026, %v1026
      %v1035 = vrot.slane %v1023, 4
      %v1036 = vrot.slane %v1025, 4
      %v1037 = vsel %vm815, %v1035, %v1036
      %v1038 = vrot.slane %v1024, 4
      %v1039 = vrot.slane %v1026, 4
      %v1040 = vsel %vm815, %v1038, %v1039
      %v1045 = vsel %vm815, %v1036, %v1027
      %v1046 = vsel %vm815, %v1039, %v1028
      %v1047 = vadd.f32 %v1037, %v1040
      %1048 = vadd.xlane.f32.xlu0 %v1047
      %v1049 = vpop.xlane.xlu0 %1048
      %v1050 = vadd.f32 %v1045, %v1046
      %1051 = vadd.xlane.f32.xlu0 %v1050
      %v1052 = vpop.xlane.xlu0 %1051
      %v1053 = vadd.f32 %v1029, %v1030
      %1054 = vadd.xlane.f32.xlu0 %v1053
      %v1055 = vpop.xlane.xlu0 %1054
      %v1056 = vrcp.pop 256.0
      %v1057 = vmul.f32 %v1049, %v1056
      %v1058 = vmul.f32 %v1052, %v1056
      %v1059 = vmul.f32 %v1055, %v1056
      %v1060 = vmul.f32 %v1057, %v1057
      %v1061 = vmul.f32 %v1058, %v1058
      %v1064 = vrot.slane %v1060, 4
      %v1065 = vrot.slane %v1061, 4
      %v1066 = vsel %vm815, %v1064, %v1065
      %v1069 = vsub.f32 %v1058, %v1064
      %v1070 = vsub.f32 %v1059, %v1066
      %v1071 = vmax.f32 %v1069, 0.0
      %v1072 = vmax.f32 %v1070, 0.0
      %v1075 = vrot.slane %v1057, 4
      %v1076 = vrot.slane %v1058, 4
      %v1077 = vsel %vm815, %v1075, %v1076
      %v1080 = vsub.f32 %v1023, %v1075
      %v1081 = vsub.f32 %v1024, %v1075
      %v1082 = vsub.f32 %v1025, %v1077
      %v1083 = vsub.f32 %v1026, %v1077
      %v1084 = vadd.f32 %v1071, 1e-05
      %v1085 = vadd.f32 %v1072, 1e-05
      %v1086 = vrsqrt.pop %v1084
      %v1087 = vrsqrt.pop %v1085
      %1089 = vset.pattern.permute.xlu0 0
      %1090 = vperm.xlu0 %1089, %v1086
      %v1091 = vpop.permute.xlu0 %1090
      %1094 = vset.pattern.permute.xlu0 0
      %1095 = vperm.xlu0 %1094, %v1087
      %v1096 = vpop.permute.xlu0 %1095
      %v1098 = vmul.f32 %v1080, %v1091
      %v1099 = vmul.f32 %v1081, %v1091
      %v1100 = vmul.f32 %v1082, %v1096
      %v1101 = vmul.f32 %v1083, %v1096
      %v1102 = vmax.f32 %v1098, 0.0
      %v1103 = vmax.f32 %v1099, 0.0
      %v1104 = vmax.f32 %v1100, 0.0
      %v1105 = vmax.f32 %v1101, 0.0
      %v1106 = vlaneseq
      %v1107 = vand.u32 %v1106, 127
      %v1108 = vadd.s32 %v1107, 128
      %vm1109 = vcmp.lt.s32.totalorder %v1107, 0
      %v1110 = vsub.s32 0, %v1107
      %v1111 = vsel %vm1109, %v1110, %v1107
      %v1112 = vshrl.u32 %v1111, 4
      %v1113 = vand.u32 %v1111, 15
      %v1114 = vsub.s32 0, %v1113
      %v1115 = vsel %vm1109, %v1114, %v1113
      %vm1116 = vcmp.lt.s32.totalorder %v1108, 0
      %v1117 = vsub.s32 0, %v1108
      %v1118 = vsel %vm1116, %v1117, %v1108
      %v1119 = vshrl.u32 %v1118, 4
      %v1120 = vand.u32 %v1118, 15
      %v1121 = vsub.s32 0, %v1120
      %v1122 = vsel %vm1116, %v1121, %v1120
      %vm1123 = vcmp.ne.s32.totalorder %v1115, 0
      %vm1124 = vcmp.ne.s32.totalorder %v1122, 0
      %vm1125 = vcmp.lt.s32.totalorder %v1115, 0
      %vm1126 = vcmp.lt.s32.totalorder %v1122, 0
      %vm1127 = vmand %vm1125, %vm1123
      %vm1128 = vmand %vm1126, %vm1124
      %v1129 = vadd.s32 %v1115, 16
      %v1130 = vadd.s32 %v1122, 16
      %v1131 = vsel %vm1127, %v1129, %v1115
      %v1132 = vsel %vm1128, %v1130, %v1122
      %vm1133 = vcmp.ge.s32.totalorder %v1131, 1
      %vm1134 = vcmp.ge.s32.totalorder %v1132, 1
      %v1135 = vsel %vm1133, 1, 0
      %v1136 = vsel %vm1134, 1, 0
      %v1137 = vcvt.s32.f32 %v1135
      %v1138 = vcvt.s32.f32 %v1136
      %vm1139 = vcmp.le.s32.totalorder %v1131, 14
      %vm1140 = vcmp.le.s32.totalorder %v1132, 14
      %v1141 = vsel %vm1139, 1, 0
      %v1142 = vsel %vm1140, 1, 0
      %v1143 = vcvt.s32.f32 %v1141
      %v1144 = vcvt.s32.f32 %v1142
      %vm1145 = vcmp.ge.s32.totalorder %v1107, 16
      %vm1146 = vcmp.ge.s32.totalorder %v1108, 16
      %v1147 = vsel %vm1145, 1, 0
      %v1148 = vsel %vm1146, 1, 0
      %v1149 = vcvt.s32.f32 %v1147
      %v1150 = vcvt.s32.f32 %v1148
      %vm1151 = vcmp.lt.s32.totalorder %v1107, 240
      %vm1152 = vcmp.lt.s32.totalorder %v1108, 240
      %v1153 = vsel %vm1151, 1, 0
      %v1154 = vsel %vm1152, 1, 0
      %v1155 = vcvt.s32.f32 %v1153
      %v1156 = vcvt.s32.f32 %v1154
      %v1159 = vrot.slane %v1102, 6
      %v1160 = vrot.slane %v1103, 6
      %v1163 = vadd.f32 %v1102, %v1159
      %v1164 = vadd.f32 %v1103, %v1160
      %v1167 = vrot.slane %v1163, 6
      %v1168 = vrot.slane %v1164, 6
      %1171 = vrot.lane.b32.xlu0 %v1167, 1
      %v1172 = vpop.permute.xlu0 %1171
      %1173 = vrot.lane.b32.xlu0 %v1168, 1
      %v1174 = vpop.permute.xlu0 %1173
      %vm1175 = vcmp.lt.s32.totalorder %v1107, 1
      %v1176 = vsel %vm1175, %v1172, %v1174
      %v1177 = vsel %vm1175, %v1174, %v1172
      %v1178 = vmul.f32 %v1177, %v1137
      %v1179 = vmul.f32 %v1176, %v1138
      %1180 = vrot.lane.b32.xlu0 %v1167, 127
      %v1181 = vpop.permute.xlu0 %1180
      %1182 = vrot.lane.b32.xlu0 %v1168, 127
      %v1183 = vpop.permute.xlu0 %1182
      %vm1184 = vcmp.lt.s32.totalorder %v1107, 127
      %v1185 = vsel %vm1184, %v1181, %v1183
      %v1186 = vsel %vm1184, %v1183, %v1181
      %v1187 = vmul.f32 %v1185, %v1143
      %v1188 = vmul.f32 %v1186, %v1144
      %v1189 = vld [vmem:[%s8] sm:$0x3]
      %v1190 = vld [vmem:[%s8 + $0x2] sm:$0x3]
      %v1191 = vld [vmem:[%s8 + $0x4] sm:$0x3]
      %v1192 = vld [vmem:[%s9] sm:$0x3]
      %1194 = vset.pattern.permute.xlu0 0
      %1195 = vperm.xlu0 %1194, %v1189
      %v1196 = vpop.permute.xlu0 %1195
      %v1198 = vlaneseq
      %v1199 = vshrl.u32 %v1198, 7
      %v1200 = vsub.s32 0, %v1199
      %v1201 = vrot.slane %v1178, %v1200
      %v1202 = vlaneseq
      %v1203 = vshrl.u32 %v1202, 7
      %v1204 = vsub.s32 0, %v1203
      %v1205 = vrot.slane %v1179, %v1204
      %v1206 = vmul.f32 %v1196, %v1201
      %v1207 = vmul.f32 %v1196, %v1205
      %1209 = vset.pattern.permute.xlu0 0
      %1210 = vperm.xlu0 %1209, %v1192
      %v1211 = vpop.permute.xlu0 %1210
      %v1213 = vadd.f32 %v1211, %v1206
      %v1214 = vadd.f32 %v1211, %v1207
      %1215 = vset.pattern.permute.xlu0 1
      %1216 = vperm.xlu0 %1215, %v1189
      %v1217 = vpop.permute.xlu0 %1216
      %v1219 = vlaneseq
      %v1220 = vshrl.u32 %v1219, 7
      %v1221 = vsub.s32 1, %v1220
      %v1222 = vrot.slane %v1178, %v1221
      %v1223 = vlaneseq
      %v1224 = vshrl.u32 %v1223, 7
      %v1225 = vsub.s32 1, %v1224
      %v1226 = vrot.slane %v1179, %v1225
      %v1227 = vmul.f32 %v1217, %v1222
      %v1228 = vmul.f32 %v1217, %v1226
      %v1229 = vadd.f32 %v1213, %v1227
      %v1230 = vadd.f32 %v1214, %v1228
      %1232 = vset.pattern.permute.xlu0 0
      %1233 = vperm.xlu0 %1232, %v1190
      %v1234 = vpop.permute.xlu0 %1233
      %v1236 = vlaneseq
      %v1237 = vshrl.u32 %v1236, 7
      %v1238 = vsub.s32 6, %v1237
      %v1239 = vrot.slane %v1163, %v1238
      %v1240 = vlaneseq
      %v1241 = vshrl.u32 %v1240, 7
      %v1242 = vsub.s32 6, %v1241
      %v1243 = vrot.slane %v1164, %v1242
      %v1244 = vmul.f32 %v1234, %v1239
      %v1245 = vmul.f32 %v1234, %v1243
      %v1246 = vadd.f32 %v1229, %v1244
      %v1247 = vadd.f32 %v1230, %v1245
      %1248 = vset.pattern.permute.xlu0 1
      %1249 = vperm.xlu0 %1248, %v1190
      %v1250 = vpop.permute.xlu0 %1249
      %v1252 = vlaneseq
      %v1253 = vshrl.u32 %v1252, 7
      %v1254 = vsub.s32 7, %v1253
      %v1255 = vrot.slane %v1163, %v1254
      %v1256 = vlaneseq
      %v1257 = vshrl.u32 %v1256, 7
      %v1258 = vsub.s32 7, %v1257
      %v1259 = vrot.slane %v1164, %v1258
      %v1260 = vmul.f32 %v1250, %v1255
      %v1261 = vmul.f32 %v1250, %v1259
      %v1262 = vadd.f32 %v1246, %v1260
      %v1263 = vadd.f32 %v1247, %v1261
      %1265 = vset.pattern.permute.xlu0 0
      %1266 = vperm.xlu0 %1265, %v1191
      %v1267 = vpop.permute.xlu0 %1266
      %v1269 = vlaneseq
      %v1270 = vshrl.u32 %v1269, 7
      %v1271 = vsub.s32 0, %v1270
      %v1272 = vrot.slane %v1187, %v1271
      %v1273 = vlaneseq
      %v1274 = vshrl.u32 %v1273, 7
      %v1275 = vsub.s32 0, %v1274
      %v1276 = vrot.slane %v1188, %v1275
      %v1277 = vmul.f32 %v1267, %v1272
      %v1278 = vmul.f32 %v1267, %v1276
      %v1279 = vadd.f32 %v1262, %v1277
      %v1280 = vadd.f32 %v1263, %v1278
      %1281 = vset.pattern.permute.xlu0 1
      %1282 = vperm.xlu0 %1281, %v1191
      %v1283 = vpop.permute.xlu0 %1282
      %v1285 = vlaneseq
      %v1286 = vshrl.u32 %v1285, 7
      %v1287 = vsub.s32 1, %v1286
      %v1288 = vrot.slane %v1187, %v1287
      %v1289 = vlaneseq
      %v1290 = vshrl.u32 %v1289, 7
      %v1291 = vsub.s32 1, %v1290
      %v1292 = vrot.slane %v1188, %v1291
      %v1293 = vmul.f32 %v1283, %v1288
      %v1294 = vmul.f32 %v1283, %v1292
      %v1295 = vadd.f32 %v1279, %v1293
      %v1296 = vadd.f32 %v1280, %v1294
      %v1297 = vmul.f32 %v1295, %v1295
      %v1298 = vmul.f32 %v1296, %v1296
      %v1301 = vrot.slane %v1297, 6
      %v1302 = vrot.slane %v1298, 6
      %vm1305 = vcmask 1041408
      %v1306 = vsel %vm1305, %v1295, %v1301
      %v1307 = vsel %vm1305, %v1296, %v1302
      %v1308 = vsel %vm815, %v1306, 0.0
      %v1309 = vsel %vm815, %v1307, 0.0
      %v1310 = vadd.f32 %v1308, %v1309
      %1311 = vadd.xlane.f32.xlu0 %v1310
      %v1312 = vpop.xlane.xlu0 %1311
      %v1313 = vmul.f32 %v1312, %v1056
      %v1314 = vmul.f32 %v1313, %v1313
      %v1316 = vrot.slane %v1314, 6
      %v1318 = vsub.f32 %v1313, %v1316
      %v1319 = vmax.f32 %v1318, 0.0
      %v1320 = vsub.f32 %v1295, %v1313
      %v1321 = vsub.f32 %v1296, %v1313
      %v1322 = vadd.f32 %v1319, 1e-05
      %v1323 = vrsqrt.pop %v1322
      %1325 = vset.pattern.permute.xlu0 0
      %1326 = vperm.xlu0 %1325, %v1323
      %v1327 = vpop.permute.xlu0 %1326
      %v1328 = vrot.slane %v1327, 2
      %v1330 = vmul.f32 %v1320, %v1328
      %v1331 = vmul.f32 %v1321, %v1328
      %v1332 = vmax.f32 %v1330, 0.0
      %v1333 = vmax.f32 %v1331, 0.0
      %v1334 = vadd.f32 %v1104, %v1332
      %v1335 = vadd.f32 %v1105, %v1333
      %1336 = vrot.lane.b32.xlu0 %v1334, 1
      %v1337 = vpop.permute.xlu0 %1336
      %1338 = vrot.lane.b32.xlu0 %v1335, 1
      %v1339 = vpop.permute.xlu0 %1338
      %v1340 = vsel %vm1175, %v1337, %v1339
      %v1341 = vsel %vm1175, %v1339, %v1337
      %v1342 = vmul.f32 %v1341, %v1137
      %v1343 = vmul.f32 %v1340, %v1138
      %1344 = vrot.lane.b32.xlu0 %v1334, 127
      %v1345 = vpop.permute.xlu0 %1344
      %1346 = vrot.lane.b32.xlu0 %v1335, 127
      %v1347 = vpop.permute.xlu0 %1346
      %v1348 = vsel %vm1184, %v1345, %v1347
      %v1349 = vsel %vm1184, %v1347, %v1345
      %v1350 = vmul.f32 %v1348, %v1143
      %v1351 = vmul.f32 %v1349, %v1144
      %s1352 = scalar_lea.vmem %s8, 6
      %v1353 = vld [vmem:[%s1352] sm:$0x3]
      %v1354 = vld [vmem:[%s1352 + $0x2] sm:$0x3]
      %v1355 = vld [vmem:[%s1352 + $0x4] sm:$0x3]
      %s1356 = scalar_lea.vmem %s9, 2
      %v1357 = vld [vmem:[%s1356] sm:$0x3]
      %1359 = vset.pattern.permute.xlu0 0
      %1360 = vperm.xlu0 %1359, %v1353
      %v1361 = vpop.permute.xlu0 %1360
      %v1363 = vlaneseq
      %v1364 = vshrl.u32 %v1363, 7
      %v1365 = vsub.s32 0, %v1364
      %v1366 = vrot.slane %v1342, %v1365
      %v1367 = vlaneseq
      %v1368 = vshrl.u32 %v1367, 7
      %v1369 = vsub.s32 0, %v1368
      %v1370 = vrot.slane %v1343, %v1369
      %v1371 = vmul.f32 %v1361, %v1366
      %v1372 = vmul.f32 %v1361, %v1370
      %1374 = vset.pattern.permute.xlu0 0
      %1375 = vperm.xlu0 %1374, %v1357
      %v1376 = vpop.permute.xlu0 %1375
      %v1378 = vadd.f32 %v1376, %v1371
      %v1379 = vadd.f32 %v1376, %v1372
      %1380 = vset.pattern.permute.xlu0 1
      %1381 = vperm.xlu0 %1380, %v1353
      %v1382 = vpop.permute.xlu0 %1381
      %v1384 = vlaneseq
      %v1385 = vshrl.u32 %v1384, 7
      %v1386 = vsub.s32 1, %v1385
      %v1387 = vrot.slane %v1342, %v1386
      %v1388 = vlaneseq
      %v1389 = vshrl.u32 %v1388, 7
      %v1390 = vsub.s32 1, %v1389
      %v1391 = vrot.slane %v1343, %v1390
      %v1392 = vmul.f32 %v1382, %v1387
      %v1393 = vmul.f32 %v1382, %v1391
      %v1394 = vadd.f32 %v1378, %v1392
      %v1395 = vadd.f32 %v1379, %v1393
      %1397 = vset.pattern.permute.xlu0 0
      %1398 = vperm.xlu0 %1397, %v1354
      %v1399 = vpop.permute.xlu0 %1398
      %v1401 = vlaneseq
      %v1402 = vshrl.u32 %v1401, 7
      %v1403 = vsub.s32 0, %v1402
      %v1404 = vrot.slane %v1334, %v1403
      %v1405 = vlaneseq
      %v1406 = vshrl.u32 %v1405, 7
      %v1407 = vsub.s32 0, %v1406
      %v1408 = vrot.slane %v1335, %v1407
      %v1409 = vmul.f32 %v1399, %v1404
      %v1410 = vmul.f32 %v1399, %v1408
      %v1411 = vadd.f32 %v1394, %v1409
      %v1412 = vadd.f32 %v1395, %v1410
      %1413 = vset.pattern.permute.xlu0 1
      %1414 = vperm.xlu0 %1413, %v1354
      %v1415 = vpop.permute.xlu0 %1414
      %v1417 = vlaneseq
      %v1418 = vshrl.u32 %v1417, 7
      %v1419 = vsub.s32 1, %v1418
      %v1420 = vrot.slane %v1334, %v1419
      %v1421 = vlaneseq
      %v1422 = vshrl.u32 %v1421, 7
      %v1423 = vsub.s32 1, %v1422
      %v1424 = vrot.slane %v1335, %v1423
      %v1425 = vmul.f32 %v1415, %v1420
      %v1426 = vmul.f32 %v1415, %v1424
      %v1427 = vadd.f32 %v1411, %v1425
      %v1428 = vadd.f32 %v1412, %v1426
      %1430 = vset.pattern.permute.xlu0 0
      %1431 = vperm.xlu0 %1430, %v1355
      %v1432 = vpop.permute.xlu0 %1431
      %v1434 = vlaneseq
      %v1435 = vshrl.u32 %v1434, 7
      %v1436 = vsub.s32 0, %v1435
      %v1437 = vrot.slane %v1350, %v1436
      %v1438 = vlaneseq
      %v1439 = vshrl.u32 %v1438, 7
      %v1440 = vsub.s32 0, %v1439
      %v1441 = vrot.slane %v1351, %v1440
      %v1442 = vmul.f32 %v1432, %v1437
      %v1443 = vmul.f32 %v1432, %v1441
      %v1444 = vadd.f32 %v1427, %v1442
      %v1445 = vadd.f32 %v1428, %v1443
      %1446 = vset.pattern.permute.xlu0 1
      %1447 = vperm.xlu0 %1446, %v1355
      %v1448 = vpop.permute.xlu0 %1447
      %v1450 = vlaneseq
      %v1451 = vshrl.u32 %v1450, 7
      %v1452 = vsub.s32 1, %v1451
      %v1453 = vrot.slane %v1350, %v1452
      %v1454 = vlaneseq
      %v1455 = vshrl.u32 %v1454, 7
      %v1456 = vsub.s32 1, %v1455
      %v1457 = vrot.slane %v1351, %v1456
      %v1458 = vmul.f32 %v1448, %v1453
      %v1459 = vmul.f32 %v1448, %v1457
      %v1460 = vadd.f32 %v1444, %v1458
      %v1461 = vadd.f32 %v1445, %v1459
      %v1462 = vmul.f32 %v1460, %v1460
      %v1463 = vmul.f32 %v1461, %v1461
      %v1466 = vrot.slane %v1462, 6
      %v1467 = vrot.slane %v1463, 6
      %v1470 = vsel %vm1305, %v1460, %v1466
      %v1471 = vsel %vm1305, %v1461, %v1467
      %v1472 = vsel %vm815, %v1470, 0.0
      %v1473 = vsel %vm815, %v1471, 0.0
      %v1474 = vadd.f32 %v1472, %v1473
      %1475 = vadd.xlane.f32.xlu0 %v1474
      %v1476 = vpop.xlane.xlu0 %1475
      %v1477 = vmul.f32 %v1476, %v1056
      %v1478 = vmul.f32 %v1477, %v1477
      %v1480 = vrot.slane %v1478, 6
      %v1482 = vsub.f32 %v1477, %v1480
      %v1483 = vmax.f32 %v1482, 0.0
      %v1484 = vsub.f32 %v1460, %v1477
      %v1485 = vsub.f32 %v1461, %v1477
      %v1486 = vadd.f32 %v1483, 1e-05
      %v1487 = vrsqrt.pop %v1486
      %1489 = vset.pattern.permute.xlu0 0
      %1490 = vperm.xlu0 %1489, %v1487
      %v1491 = vpop.permute.xlu0 %1490
      %v1492 = vrot.slane %v1491, 2
      %v1494 = vmul.f32 %v1484, %v1492
      %v1495 = vmul.f32 %v1485, %v1492
      %v1496 = vmax.f32 %v1494, 0.0
      %v1497 = vmax.f32 %v1495, 0.0
      %v1500 = vrot.slane %v1496, 6
      %v1501 = vrot.slane %v1497, 6
      %v1504 = vadd.f32 %v1104, %v1500
      %v1505 = vadd.f32 %v1105, %v1501
      %v1508 = vrot.slane %v1504, 2
      %v1509 = vrot.slane %v1505, 2
      %1512 = vrot.lane.b32.xlu0 %v1508, 1
      %v1513 = vpop.permute.xlu0 %1512
      %1514 = vrot.lane.b32.xlu0 %v1509, 1
      %v1515 = vpop.permute.xlu0 %1514
      %v1516 = vsel %vm1175, %v1513, %v1515
      %v1517 = vsel %vm1175, %v1515, %v1513
      %v1518 = vmul.f32 %v1517, %v1137
      %v1519 = vmul.f32 %v1516, %v1138
      %1520 = vrot.lane.b32.xlu0 %v1508, 127
      %v1521 = vpop.permute.xlu0 %1520
      %1522 = vrot.lane.b32.xlu0 %v1509, 127
      %v1523 = vpop.permute.xlu0 %1522
      %v1524 = vsel %vm1184, %v1521, %v1523
      %v1525 = vsel %vm1184, %v1523, %v1521
      %v1526 = vmul.f32 %v1524, %v1143
      %v1527 = vmul.f32 %v1525, %v1144
      %s1528 = scalar_lea.vmem %s8, 12
      %v1529 = vld [vmem:[%s1528] sm:$0x3]
      %v1530 = vld [vmem:[%s1528 + $0x2] sm:$0x3]
      %v1531 = vld [vmem:[%s1528 + $0x4] sm:$0x3]
      %s1532 = scalar_lea.vmem %s9, 4
      %v1533 = vld [vmem:[%s1532] sm:$0x3]
      %1535 = vset.pattern.permute.xlu0 0
      %1536 = vperm.xlu0 %1535, %v1529
      %v1537 = vpop.permute.xlu0 %1536
      %v1539 = vlaneseq
      %v1540 = vshrl.u32 %v1539, 7
      %v1541 = vsub.s32 0, %v1540
      %v1542 = vrot.slane %v1518, %v1541
      %v1543 = vlaneseq
      %v1544 = vshrl.u32 %v1543, 7
      %v1545 = vsub.s32 0, %v1544
      %v1546 = vrot.slane %v1519, %v1545
      %v1547 = vmul.f32 %v1537, %v1542
      %v1548 = vmul.f32 %v1537, %v1546
      %1550 = vset.pattern.permute.xlu0 0
      %1551 = vperm.xlu0 %1550, %v1533
      %v1552 = vpop.permute.xlu0 %1551
      %v1554 = vadd.f32 %v1552, %v1547
      %v1555 = vadd.f32 %v1552, %v1548
      %1556 = vset.pattern.permute.xlu0 1
      %1557 = vperm.xlu0 %1556, %v1529
      %v1558 = vpop.permute.xlu0 %1557
      %v1560 = vlaneseq
      %v1561 = vshrl.u32 %v1560, 7
      %v1562 = vsub.s32 1, %v1561
      %v1563 = vrot.slane %v1518, %v1562
      %v1564 = vlaneseq
      %v1565 = vshrl.u32 %v1564, 7
      %v1566 = vsub.s32 1, %v1565
      %v1567 = vrot.slane %v1519, %v1566
      %v1568 = vmul.f32 %v1558, %v1563
      %v1569 = vmul.f32 %v1558, %v1567
      %v1570 = vadd.f32 %v1554, %v1568
      %v1571 = vadd.f32 %v1555, %v1569
      %1573 = vset.pattern.permute.xlu0 0
      %1574 = vperm.xlu0 %1573, %v1530
      %v1575 = vpop.permute.xlu0 %1574
      %v1577 = vlaneseq
      %v1578 = vshrl.u32 %v1577, 7
      %v1579 = vsub.s32 2, %v1578
      %v1580 = vrot.slane %v1504, %v1579
      %v1581 = vlaneseq
      %v1582 = vshrl.u32 %v1581, 7
      %v1583 = vsub.s32 2, %v1582
      %v1584 = vrot.slane %v1505, %v1583
      %v1585 = vmul.f32 %v1575, %v1580
      %v1586 = vmul.f32 %v1575, %v1584
      %v1587 = vadd.f32 %v1570, %v1585
      %v1588 = vadd.f32 %v1571, %v1586
      %1589 = vset.pattern.permute.xlu0 1
      %1590 = vperm.xlu0 %1589, %v1530
      %v1591 = vpop.permute.xlu0 %1590
      %v1593 = vlaneseq
      %v1594 = vshrl.u32 %v1593, 7
      %v1595 = vsub.s32 3, %v1594
      %v1596 = vrot.slane %v1504, %v1595
      %v1597 = vlaneseq
      %v1598 = vshrl.u32 %v1597, 7
      %v1599 = vsub.s32 3, %v1598
      %v1600 = vrot.slane %v1505, %v1599
      %v1601 = vmul.f32 %v1591, %v1596
      %v1602 = vmul.f32 %v1591, %v1600
      %v1603 = vadd.f32 %v1587, %v1601
      %v1604 = vadd.f32 %v1588, %v1602
      %1606 = vset.pattern.permute.xlu0 0
      %1607 = vperm.xlu0 %1606, %v1531
      %v1608 = vpop.permute.xlu0 %1607
      %v1610 = vlaneseq
      %v1611 = vshrl.u32 %v1610, 7
      %v1612 = vsub.s32 0, %v1611
      %v1613 = vrot.slane %v1526, %v1612
      %v1614 = vlaneseq
      %v1615 = vshrl.u32 %v1614, 7
      %v1616 = vsub.s32 0, %v1615
      %v1617 = vrot.slane %v1527, %v1616
      %v1618 = vmul.f32 %v1608, %v1613
      %v1619 = vmul.f32 %v1608, %v1617
      %v1620 = vadd.f32 %v1603, %v1618
      %v1621 = vadd.f32 %v1604, %v1619
      %1622 = vset.pattern.permute.xlu0 1
      %1623 = vperm.xlu0 %1622, %v1531
      %v1624 = vpop.permute.xlu0 %1623
      %v1626 = vlaneseq
      %v1627 = vshrl.u32 %v1626, 7
      %v1628 = vsub.s32 1, %v1627
      %v1629 = vrot.slane %v1526, %v1628
      %v1630 = vlaneseq
      %v1631 = vshrl.u32 %v1630, 7
      %v1632 = vsub.s32 1, %v1631
      %v1633 = vrot.slane %v1527, %v1632
      %v1634 = vmul.f32 %v1624, %v1629
      %v1635 = vmul.f32 %v1624, %v1633
      %v1636 = vadd.f32 %v1620, %v1634
      %v1637 = vadd.f32 %v1621, %v1635
      %v1638 = vmul.f32 %v1636, %v1636
      %v1639 = vmul.f32 %v1637, %v1637
      %v1642 = vrot.slane %v1638, 6
      %v1643 = vrot.slane %v1639, 6
      %v1646 = vsel %vm1305, %v1636, %v1642
      %v1647 = vsel %vm1305, %v1637, %v1643
      %v1648 = vsel %vm815, %v1646, 0.0
      %v1649 = vsel %vm815, %v1647, 0.0
      %v1650 = vadd.f32 %v1648, %v1649
      %1651 = vadd.xlane.f32.xlu0 %v1650
      %v1652 = vpop.xlane.xlu0 %1651
      %v1653 = vmul.f32 %v1652, %v1056
      %v1654 = vmul.f32 %v1653, %v1653
      %v1656 = vrot.slane %v1654, 6
      %v1658 = vsub.f32 %v1653, %v1656
      %v1659 = vmax.f32 %v1658, 0.0
      %v1660 = vsub.f32 %v1636, %v1653
      %v1661 = vsub.f32 %v1637, %v1653
      %v1662 = vadd.f32 %v1659, 1e-05
      %v1663 = vrsqrt.pop %v1662
      %1665 = vset.pattern.permute.xlu0 0
      %1666 = vperm.xlu0 %1665, %v1663
      %v1667 = vpop.permute.xlu0 %1666
      %v1668 = vrot.slane %v1667, 2
      %v1670 = vmul.f32 %v1660, %v1668
      %v1671 = vmul.f32 %v1661, %v1668
      %v1672 = vmax.f32 %v1670, 0.0
      %v1673 = vmax.f32 %v1671, 0.0
      %v1676 = vrot.slane %v1672, 4
      %v1677 = vrot.slane %v1673, 4
      %v1680 = vadd.f32 %v1104, %v1676
      %v1681 = vadd.f32 %v1105, %v1677
      %v1684 = vrot.slane %v1680, 4
      %v1685 = vrot.slane %v1681, 4
      %1688 = vrot.lane.b32.xlu0 %v1684, 1
      %v1689 = vpop.permute.xlu0 %1688
      %1690 = vrot.lane.b32.xlu0 %v1685, 1
      %v1691 = vpop.permute.xlu0 %1690
      %v1692 = vsel %vm1175, %v1689, %v1691
      %v1693 = vsel %vm1175, %v1691, %v1689
      %v1694 = vmul.f32 %v1693, %v1137
      %v1695 = vmul.f32 %v1692, %v1138
      %1696 = vrot.lane.b32.xlu0 %v1684, 127
      %v1697 = vpop.permute.xlu0 %1696
      %1698 = vrot.lane.b32.xlu0 %v1685, 127
      %v1699 = vpop.permute.xlu0 %1698
      %v1700 = vsel %vm1184, %v1697, %v1699
      %v1701 = vsel %vm1184, %v1699, %v1697
      %v1702 = vmul.f32 %v1700, %v1143
      %v1703 = vmul.f32 %v1701, %v1144
      %s1704 = scalar_lea.vmem %s8, 18
      %v1705 = vld [vmem:[%s1704] sm:$0x3]
      %v1706 = vld [vmem:[%s1704 + $0x2] sm:$0x3]
      %v1707 = vld [vmem:[%s1704 + $0x4] sm:$0x3]
      %s1708 = scalar_lea.vmem %s9, 6
      %v1709 = vld [vmem:[%s1708] sm:$0x3]
      %1711 = vset.pattern.permute.xlu0 0
      %1712 = vperm.xlu0 %1711, %v1705
      %v1713 = vpop.permute.xlu0 %1712
      %v1715 = vlaneseq
      %v1716 = vshrl.u32 %v1715, 7
      %v1717 = vsub.s32 0, %v1716
      %v1718 = vrot.slane %v1694, %v1717
      %v1719 = vlaneseq
      %v1720 = vshrl.u32 %v1719, 7
      %v1721 = vsub.s32 0, %v1720
      %v1722 = vrot.slane %v1695, %v1721
      %v1723 = vmul.f32 %v1713, %v1718
      %v1724 = vmul.f32 %v1713, %v1722
      %1726 = vset.pattern.permute.xlu0 0
      %1727 = vperm.xlu0 %1726, %v1709
      %v1728 = vpop.permute.xlu0 %1727
      %v1730 = vadd.f32 %v1728, %v1723
      %v1731 = vadd.f32 %v1728, %v1724
      %1732 = vset.pattern.permute.xlu0 1
      %1733 = vperm.xlu0 %1732, %v1705
      %v1734 = vpop.permute.xlu0 %1733
      %v1736 = vlaneseq
      %v1737 = vshrl.u32 %v1736, 7
      %v1738 = vsub.s32 1, %v1737
      %v1739 = vrot.slane %v1694, %v1738
      %v1740 = vlaneseq
      %v1741 = vshrl.u32 %v1740, 7
      %v1742 = vsub.s32 1, %v1741
      %v1743 = vrot.slane %v1695, %v1742
      %v1744 = vmul.f32 %v1734, %v1739
      %v1745 = vmul.f32 %v1734, %v1743
      %v1746 = vadd.f32 %v1730, %v1744
      %v1747 = vadd.f32 %v1731, %v1745
      %1749 = vset.pattern.permute.xlu0 0
      %1750 = vperm.xlu0 %1749, %v1706
      %v1751 = vpop.permute.xlu0 %1750
      %v1753 = vlaneseq
      %v1754 = vshrl.u32 %v1753, 7
      %v1755 = vsub.s32 4, %v1754
      %v1756 = vrot.slane %v1680, %v1755
      %v1757 = vlaneseq
      %v1758 = vshrl.u32 %v1757, 7
      %v1759 = vsub.s32 4, %v1758
      %v1760 = vrot.slane %v1681, %v1759
      %v1761 = vmul.f32 %v1751, %v1756
      %v1762 = vmul.f32 %v1751, %v1760
      %v1763 = vadd.f32 %v1746, %v1761
      %v1764 = vadd.f32 %v1747, %v1762
      %1765 = vset.pattern.permute.xlu0 1
      %1766 = vperm.xlu0 %1765, %v1706
      %v1767 = vpop.permute.xlu0 %1766
      %v1769 = vlaneseq
      %v1770 = vshrl.u32 %v1769, 7
      %v1771 = vsub.s32 5, %v1770
      %v1772 = vrot.slane %v1680, %v1771
      %v1773 = vlaneseq
      %v1774 = vshrl.u32 %v1773, 7
      %v1775 = vsub.s32 5, %v1774
      %v1776 = vrot.slane %v1681, %v1775
      %v1777 = vmul.f32 %v1767, %v1772
      %v1778 = vmul.f32 %v1767, %v1776
      %v1779 = vadd.f32 %v1763, %v1777
      %v1780 = vadd.f32 %v1764, %v1778
      %1782 = vset.pattern.permute.xlu0 0
      %1783 = vperm.xlu0 %1782, %v1707
      %v1784 = vpop.permute.xlu0 %1783
      %v1786 = vlaneseq
      %v1787 = vshrl.u32 %v1786, 7
      %v1788 = vsub.s32 0, %v1787
      %v1789 = vrot.slane %v1702, %v1788
      %v1790 = vlaneseq
      %v1791 = vshrl.u32 %v1790, 7
      %v1792 = vsub.s32 0, %v1791
      %v1793 = vrot.slane %v1703, %v1792
      %v1794 = vmul.f32 %v1784, %v1789
      %v1795 = vmul.f32 %v1784, %v1793
      %v1796 = vadd.f32 %v1779, %v1794
      %v1797 = vadd.f32 %v1780, %v1795
      %1798 = vset.pattern.permute.xlu0 1
      %1799 = vperm.xlu0 %1798, %v1707
      %v1800 = vpop.permute.xlu0 %1799
      %v1802 = vlaneseq
      %v1803 = vshrl.u32 %v1802, 7
      %v1804 = vsub.s32 1, %v1803
      %v1805 = vrot.slane %v1702, %v1804
      %v1806 = vlaneseq
      %v1807 = vshrl.u32 %v1806, 7
      %v1808 = vsub.s32 1, %v1807
      %v1809 = vrot.slane %v1703, %v1808
      %v1810 = vmul.f32 %v1800, %v1805
      %v1811 = vmul.f32 %v1800, %v1809
      %v1812 = vadd.f32 %v1796, %v1810
      %v1813 = vadd.f32 %v1797, %v1811
      %v1814 = vmul.f32 %v1812, %v1812
      %v1815 = vmul.f32 %v1813, %v1813
      %v1818 = vrot.slane %v1814, 6
      %v1819 = vrot.slane %v1815, 6
      %v1822 = vsel %vm1305, %v1812, %v1818
      %v1823 = vsel %vm1305, %v1813, %v1819
      %v1824 = vsel %vm815, %v1822, 0.0
      %v1825 = vsel %vm815, %v1823, 0.0
      %v1826 = vadd.f32 %v1824, %v1825
      %1827 = vadd.xlane.f32.xlu0 %v1826
      %v1828 = vpop.xlane.xlu0 %1827
      %v1829 = vmul.f32 %v1828, %v1056
      %v1830 = vmul.f32 %v1829, %v1829
      %v1832 = vrot.slane %v1830, 6
      %v1834 = vsub.f32 %v1829, %v1832
      %v1835 = vmax.f32 %v1834, 0.0
      %v1836 = vsub.f32 %v1812, %v1829
      %v1837 = vsub.f32 %v1813, %v1829
      %v1838 = vadd.f32 %v1835, 1e-05
      %v1839 = vrsqrt.pop %v1838
      %1841 = vset.pattern.permute.xlu0 0
      %1842 = vperm.xlu0 %1841, %v1839
      %v1843 = vpop.permute.xlu0 %1842
      %v1844 = vrot.slane %v1843, 2
      %v1846 = vmul.f32 %v1836, %v1844
      %v1847 = vmul.f32 %v1837, %v1844
      %v1848 = vmax.f32 %v1846, 0.0
      %v1849 = vmax.f32 %v1847, 0.0
      %v1852 = vrot.slane %v1848, 2
      %v1853 = vrot.slane %v1849, 2
      %v1856 = vadd.f32 %v1104, %v1852
      %v1857 = vadd.f32 %v1105, %v1853
      %v1860 = vrot.slane %v1856, 6
      %v1861 = vrot.slane %v1857, 6
      %1864 = vrot.lane.b32.xlu0 %v1860, 1
      %v1865 = vpop.permute.xlu0 %1864
      %1866 = vrot.lane.b32.xlu0 %v1861, 1
      %v1867 = vpop.permute.xlu0 %1866
      %v1868 = vsel %vm1175, %v1865, %v1867
      %v1869 = vsel %vm1175, %v1867, %v1865
      %v1870 = vmul.f32 %v1869, %v1137
      %v1871 = vmul.f32 %v1868, %v1138
      %1872 = vrot.lane.b32.xlu0 %v1860, 127
      %v1873 = vpop.permute.xlu0 %1872
      %1874 = vrot.lane.b32.xlu0 %v1861, 127
      %v1875 = vpop.permute.xlu0 %1874
      %v1876 = vsel %vm1184, %v1873, %v1875
      %v1877 = vsel %vm1184, %v1875, %v1873
      %v1878 = vmul.f32 %v1876, %v1143
      %v1879 = vmul.f32 %v1877, %v1144
      %s1880 = scalar_lea.vmem %s8, 24
      %v1881 = vld [vmem:[%s1880] sm:$0x3]
      %v1882 = vld [vmem:[%s1880 + $0x2] sm:$0x3]
      %v1883 = vld [vmem:[%s1880 + $0x4] sm:$0x3]
      %s1884 = scalar_lea.vmem %s9, 8
      %v1885 = vld [vmem:[%s1884] sm:$0x3]
      %1887 = vset.pattern.permute.xlu0 0
      %1888 = vperm.xlu0 %1887, %v1881
      %v1889 = vpop.permute.xlu0 %1888
      %v1891 = vlaneseq
      %v1892 = vshrl.u32 %v1891, 7
      %v1893 = vsub.s32 0, %v1892
      %v1894 = vrot.slane %v1870, %v1893
      %v1895 = vlaneseq
      %v1896 = vshrl.u32 %v1895, 7
      %v1897 = vsub.s32 0, %v1896
      %v1898 = vrot.slane %v1871, %v1897
      %v1899 = vmul.f32 %v1889, %v1894
      %v1900 = vmul.f32 %v1889, %v1898
      %1902 = vset.pattern.permute.xlu0 0
      %1903 = vperm.xlu0 %1902, %v1885
      %v1904 = vpop.permute.xlu0 %1903
      %v1906 = vadd.f32 %v1904, %v1899
      %v1907 = vadd.f32 %v1904, %v1900
      %1908 = vset.pattern.permute.xlu0 1
      %1909 = vperm.xlu0 %1908, %v1881
      %v1910 = vpop.permute.xlu0 %1909
      %v1912 = vlaneseq
      %v1913 = vshrl.u32 %v1912, 7
      %v1914 = vsub.s32 1, %v1913
      %v1915 = vrot.slane %v1870, %v1914
      %v1916 = vlaneseq
      %v1917 = vshrl.u32 %v1916, 7
      %v1918 = vsub.s32 1, %v1917
      %v1919 = vrot.slane %v1871, %v1918
      %v1920 = vmul.f32 %v1910, %v1915
      %v1921 = vmul.f32 %v1910, %v1919
      %v1922 = vadd.f32 %v1906, %v1920
      %v1923 = vadd.f32 %v1907, %v1921
      %1925 = vset.pattern.permute.xlu0 0
      %1926 = vperm.xlu0 %1925, %v1882
      %v1927 = vpop.permute.xlu0 %1926
      %v1929 = vlaneseq
      %v1930 = vshrl.u32 %v1929, 7
      %v1931 = vsub.s32 6, %v1930
      %v1932 = vrot.slane %v1856, %v1931
      %v1933 = vlaneseq
      %v1934 = vshrl.u32 %v1933, 7
      %v1935 = vsub.s32 6, %v1934
      %v1936 = vrot.slane %v1857, %v1935
      %v1937 = vmul.f32 %v1927, %v1932
      %v1938 = vmul.f32 %v1927, %v1936
      %v1939 = vadd.f32 %v1922, %v1937
      %v1940 = vadd.f32 %v1923, %v1938
      %1941 = vset.pattern.permute.xlu0 1
      %1942 = vperm.xlu0 %1941, %v1882
      %v1943 = vpop.permute.xlu0 %1942
      %v1945 = vlaneseq
      %v1946 = vshrl.u32 %v1945, 7
      %v1947 = vsub.s32 7, %v1946
      %v1948 = vrot.slane %v1856, %v1947
      %v1949 = vlaneseq
      %v1950 = vshrl.u32 %v1949, 7
      %v1951 = vsub.s32 7, %v1950
      %v1952 = vrot.slane %v1857, %v1951
      %v1953 = vmul.f32 %v1943, %v1948
      %v1954 = vmul.f32 %v1943, %v1952
      %v1955 = vadd.f32 %v1939, %v1953
      %v1956 = vadd.f32 %v1940, %v1954
      %1958 = vset.pattern.permute.xlu0 0
      %1959 = vperm.xlu0 %1958, %v1883
      %v1960 = vpop.permute.xlu0 %1959
      %v1962 = vlaneseq
      %v1963 = vshrl.u32 %v1962, 7
      %v1964 = vsub.s32 0, %v1963
      %v1965 = vrot.slane %v1878, %v1964
      %v1966 = vlaneseq
      %v1967 = vshrl.u32 %v1966, 7
      %v1968 = vsub.s32 0, %v1967
      %v1969 = vrot.slane %v1879, %v1968
      %v1970 = vmul.f32 %v1960, %v1965
      %v1971 = vmul.f32 %v1960, %v1969
      %v1972 = vadd.f32 %v1955, %v1970
      %v1973 = vadd.f32 %v1956, %v1971
      %1974 = vset.pattern.permute.xlu0 1
      %1975 = vperm.xlu0 %1974, %v1883
      %v1976 = vpop.permute.xlu0 %1975
      %v1978 = vlaneseq
      %v1979 = vshrl.u32 %v1978, 7
      %v1980 = vsub.s32 1, %v1979
      %v1981 = vrot.slane %v1878, %v1980
      %v1982 = vlaneseq
      %v1983 = vshrl.u32 %v1982, 7
      %v1984 = vsub.s32 1, %v1983
      %v1985 = vrot.slane %v1879, %v1984
      %v1986 = vmul.f32 %v1976, %v1981
      %v1987 = vmul.f32 %v1976, %v1985
      %v1988 = vadd.f32 %v1972, %v1986
      %v1989 = vadd.f32 %v1973, %v1987
      %v1990 = vmul.f32 %v1988, %v1988
      %v1991 = vmul.f32 %v1989, %v1989
      %v1994 = vrot.slane %v1990, 6
      %v1995 = vrot.slane %v1991, 6
      %v1998 = vsel %vm1305, %v1988, %v1994
      %v1999 = vsel %vm1305, %v1989, %v1995
      %v2000 = vsel %vm815, %v1998, 0.0
      %v2001 = vsel %vm815, %v1999, 0.0
      %v2002 = vadd.f32 %v2000, %v2001
      %2003 = vadd.xlane.f32.xlu0 %v2002
      %v2004 = vpop.xlane.xlu0 %2003
      %v2005 = vmul.f32 %v2004, %v1056
      %v2006 = vmul.f32 %v2005, %v2005
      %v2008 = vrot.slane %v2006, 6
      %v2010 = vsub.f32 %v2005, %v2008
      %v2011 = vmax.f32 %v2010, 0.0
      %v2012 = vsub.f32 %v1988, %v2005
      %v2013 = vsub.f32 %v1989, %v2005
      %v2014 = vadd.f32 %v2011, 1e-05
      %v2015 = vrsqrt.pop %v2014
      %2017 = vset.pattern.permute.xlu0 0
      %2018 = vperm.xlu0 %2017, %v2015
      %v2019 = vpop.permute.xlu0 %2018
      %v2020 = vrot.slane %v2019, 2
      %v2022 = vmul.f32 %v2012, %v2020
      %v2023 = vmul.f32 %v2013, %v2020
      %v2024 = vmax.f32 %v2022, 0.0
      %v2025 = vmax.f32 %v2023, 0.0
      %v2028 = vrot.slane %v1332, 4
      %v2029 = vrot.slane %v1333, 4
      %v2032 = vadd.f32 %v1102, %v2028
      %v2033 = vadd.f32 %v1103, %v2029
      %v2034 = vrot.slane %v1496, 4
      %v2035 = vrot.slane %v1497, 4
      %v2038 = vadd.f32 %v2032, %v2034
      %v2039 = vadd.f32 %v2033, %v2035
      %v2040 = vadd.f32 %v2038, %v1676
      %v2041 = vadd.f32 %v2039, %v1677
      %v2042 = vrot.slane %v1848, 4
      %v2043 = vrot.slane %v1849, 4
      %v2046 = vadd.f32 %v2040, %v2042
      %v2047 = vadd.f32 %v2041, %v2043
      %v2050 = vrot.slane %v2024, 4
      %v2051 = vrot.slane %v2025, 4
      %v2054 = vadd.f32 %v2046, %v2050
      %v2055 = vadd.f32 %v2047, %v2051
      %vm2056 = vcmask 1045508
      %v2057 = vsel %vm2056, %v2054, 0.0
      %v2058 = vsel %vm2056, %v2055, 0.0
      %v2059 = vadd.f32 %v2057, %v2058
      %2060 = vadd.xlane.f32.xlu0 %v2059
      %v2061 = vpop.xlane.xlu0 %2060
      %v2062 = vmul.f32 %v2061, %v1056
      %v2063 = vld [vmem:[%s12] sm:$0xff]
      %v2064 = vld [vmem:[%s12 + $0x8] sm:$0xf]
      %v2065 = vld [vmem:[%s13] sm:$0xff]
      %v2066 = vld [vmem:[%s13 + $0x8] sm:$0xf]
      %v2068 = vrot.slane %v2062, 4
      %vm2069 = vcmask 15360
      %v2071 = vsel %vm2069, %v2063, 0
      %v2074 = vsel %vm2069, %v2064, 0
      %v2076 = vsel %vm1305, %v2068, 0
      %2078 = vmatprep.subr.mxu0 0.0
      %2079 = vmatpush1.msra.mxu0 0.0
      %2080 = vmatprep.subr.mxu0 0.0
      %2081 = vmatpush1.msra.mxu0 0.0
      %2082 = vmatprep.subr.mxu0 0.0
      %2083 = vmatpush1.msra.mxu0 0.0
      %2084 = vmatprep.subr.mxu0 0.0
      %2085 = vmatpush1.msra.mxu0 0.0
      %2086 = vmatprep.subr.mxu0 0.0
      %2087 = vmatpush1.msra.mxu0 0.0
      %2088 = vmatprep.subr.mxu0 0.0
      %2089 = vmatpush1.msra.mxu0 0.0
      %2090 = vmatprep.subr.mxu0 0.0
      %2091 = vmatpush1.msra.mxu0 0.0
      %2092 = vmatprep.subr.mxu0 0.0
      %2093 = vmatpush1.msra.mxu0 0.0
      %2094 = vmatprep.subr.mxu0 0.0
      %2095 = vmatpush1.msra.mxu0 0.0
      %2096 = vmatprep.subr.mxu0 0.0
      %2097 = vmatpush1.msra.mxu0 0.0
      %2098 = vmatprep.subr.mxu0 0.0
      %2099 = vmatpush1.msra.mxu0 0.0
      %2100 = vmatprep.subr.mxu0 0.0
      %2101 = vmatpush1.msra.mxu0 0.0
      %2102 = vmatprep.subr.mxu0 0.0
      %2103 = vmatpush1.msra.mxu0 0.0
      %2104 = vmatprep.subr.mxu0 0.0
      %2105 = vmatpush1.msra.mxu0 0.0
      %2106 = vmatprep.subr.mxu0 0.0
      %2107 = vmatpush1.msra.mxu0 0.0
      %2108 = vmatprep.subr.mxu0 0.0
      %2109 = vmatpush1.msra.mxu0 %v2076
      %2110 = vmatprep.subr.mxu0 0.0
      %2111 = vmatpush2.msra.mxu0 0.0
      %2112 = vmatprep.subr.mxu0 0.0
      %2113 = vmatpush2.msra.mxu0 0.0
      %2114 = vmatprep.subr.mxu0 0.0
      %2115 = vmatpush2.msra.mxu0 0.0
      %2116 = vmatprep.subr.mxu0 0.0
      %2117 = vmatpush2.msra.mxu0 0.0
      %2118 = vmatprep.subr.mxu0 0.0
      %2119 = vmatpush2.msra.mxu0 0.0
      %2120 = vmatprep.subr.mxu0 0.0
      %2121 = vmatpush2.msra.mxu0 0.0
      %2122 = vmatprep.subr.mxu0 0.0
      %2123 = vmatpush2.msra.mxu0 0.0
      %2124 = vmatprep.subr.mxu0 0.0
      %2125 = vmatpush2.msra.mxu0 0.0
      %2126 = vmatprep.subr.mxu0 0.0
      %2127 = vmatpush2.msra.mxu0 0.0
      %2128 = vmatprep.subr.mxu0 0.0
      %2129 = vmatpush2.msra.mxu0 0.0
      %2130 = vmatprep.subr.mxu0 0.0
      %2131 = vmatpush2.msra.mxu0 0.0
      %2132 = vmatprep.subr.mxu0 0.0
      %2133 = vmatpush2.msra.mxu0 0.0
      %2134 = vmatprep.subr.mxu0 0.0
      %2135 = vmatpush2.msra.mxu0 0.0
      %2136 = vmatprep.subr.mxu0 0.0
      %2137 = vmatpush2.msra.mxu0 0.0
      %2138 = vmatprep.subr.mxu0 0.0
      %2139 = vmatpush2.msra.mxu0 0.0
      %2140 = vmatprep.subr.mxu0 0.0
      %2141 = vmatpush2.msra.mxu0 0.0
      %2142 = vmatprep.mubr.f32.mxu0 0.0
      %2143 = vmatmul.mubr.f32.gmra.mxu0 %v2071
      %v2144 = vpop.f32.mrf.mxu0
      %v2145 = vadd.f32 %v2065, %v2144
      %v2146 = vpop.f32.mrf.mxu0
      %2147 = vmatprep.mubr.f32.mxu0 0.0
      %2148 = vmatmul.mubr.f32.gmra.mxu0 %v2074
      %v2149 = vpop.f32.mrf.mxu0
      %v2150 = vadd.f32 %v2066, %v2149
      %v2151 = vpop.f32.mrf.mxu0
      %2152 = vdwg.mxu0
      %v2154 = vrot.slane %v2145, 2
      %v2156 = vmax.f32 %v2145, %v2154
      %v2157 = vrot.slane %v2145, 4
      %v2159 = vmax.f32 %v2156, %v2157
      %v2160 = vrot.slane %v2145, 6
      %v2162 = vmax.f32 %v2159, %v2160
      %v2163 = vmax.f32 %v2162, %v2150
      %v2165 = vrot.slane %v2150, 2
      %v2167 = vmax.f32 %v2163, %v2165
      %v2168 = vsub.f32 %v2145, %v2167
      %v2169 = vmul.f32 %v2168, 1.442695
      %v2170 = vpow.pop %v2169
      %v2172 = vrot.slane %v2167, 6
      %v2174 = vsub.f32 %v2145, %v2172
      %v2175 = vmul.f32 %v2174, 1.442695
      %v2176 = vpow.pop %v2175
      %v2177 = vrot.slane %v2167, 4
      %v2179 = vsub.f32 %v2145, %v2177
      %v2180 = vmul.f32 %v2179, 1.442695
      %v2181 = vpow.pop %v2180
      %v2182 = vrot.slane %v2167, 2
      %v2184 = vsub.f32 %v2145, %v2182
      %v2185 = vmul.f32 %v2184, 1.442695
      %v2186 = vpow.pop %v2185
      %v2187 = vsub.f32 %v2150, %v2167
      %v2188 = vmul.f32 %v2187, 1.442695
      %v2189 = vpow.pop %v2188
      %v2190 = vsub.f32 %v2150, %v2172
      %v2191 = vmul.f32 %v2190, 1.442695
      %v2192 = vpow.pop %v2191
      %v2194 = vrot.slane %v2176, 2
      %v2196 = vadd.f32 %v2170, %v2194
      %v2198 = vrot.slane %v2181, 4
      %v2200 = vadd.f32 %v2196, %v2198
      %v2202 = vrot.slane %v2186, 6
      %v2204 = vadd.f32 %v2200, %v2202
      %v2205 = vadd.f32 %v2204, %v2189
      %v2207 = vrot.slane %v2192, 2
      %v2209 = vadd.f32 %v2205, %v2207
      %v2210 = vrcp.pop %v2209
      %v2211 = vmul.f32 1.0, %v2210
      %v2212 = vmul.f32 %v2170, %v2211
      %2214 = vset.pattern.permute.xlu0 0
      %2215 = vperm.xlu0 %2214, %v2212
      %v2216 = vpop.permute.xlu0 %2215
      %v2217 = vrot.slane %v2216, 4
      %v2219 = vmul.f32 %v1102, %v2217
      %v2220 = vmul.f32 %v1103, %v2217
      %v2223 = vrot.slane %v2219, 4
      %v2224 = vrot.slane %v2220, 4
      %2227 = vst [vmem:[#allocation2] sm:$0x3] %v2223
      %2228 = vst [vmem:[#allocation2 + $0x8] sm:$0x3] %v2224
      %v2230 = vrot.slane %v2211, 6
      %v2232 = vmul.f32 %v2176, %v2230
      %2234 = vset.pattern.permute.xlu0 0
      %2235 = vperm.xlu0 %2234, %v2232
      %v2236 = vpop.permute.xlu0 %2235
      %v2237 = vrot.slane %v2236, 2
      %v2239 = vmul.f32 %v1332, %v2237
      %v2240 = vmul.f32 %v1333, %v2237
      %v2243 = vrot.slane %v2239, 6
      %v2244 = vrot.slane %v2240, 6
      %2247 = vst [vmem:[#allocation2] sm:$0xc] %v2243
      %2248 = vst [vmem:[#allocation2 + $0x8] sm:$0xc] %v2244
      %v2249 = vrot.slane %v2211, 4
      %v2251 = vmul.f32 %v2181, %v2249
      %2253 = vset.pattern.permute.xlu0 0
      %2254 = vperm.xlu0 %2253, %v2251
      %v2255 = vpop.permute.xlu0 %2254
      %v2256 = vrot.slane %v2255, 4
      %v2258 = vmul.f32 %v1496, %v2256
      %v2259 = vmul.f32 %v1497, %v2256
      %v2262 = vrot.slane %v2258, 4
      %v2263 = vrot.slane %v2259, 4
      %2266 = vst [vmem:[#allocation2] sm:$0x30] %v2262
      %2267 = vst [vmem:[#allocation2 + $0x8] sm:$0x30] %v2263
      %v2268 = vrot.slane %v2211, 2
      %v2270 = vmul.f32 %v2186, %v2268
      %2272 = vset.pattern.permute.xlu0 0
      %2273 = vperm.xlu0 %2272, %v2270
      %v2274 = vpop.permute.xlu0 %2273
      %v2275 = vrot.slane %v2274, 6
      %v2277 = vmul.f32 %v1672, %v2275
      %v2278 = vmul.f32 %v1673, %v2275
      %v2281 = vrot.slane %v2277, 2
      %v2282 = vrot.slane %v2278, 2
      %2285 = vst [vmem:[#allocation2] sm:$0xc0] %v2281
      %2286 = vst [vmem:[#allocation2 + $0x8] sm:$0xc0] %v2282
      %v2287 = vmul.f32 %v2189, %v2211
      %2289 = vset.pattern.permute.xlu0 0
      %2290 = vperm.xlu0 %2289, %v2287
      %v2291 = vpop.permute.xlu0 %2290
      %v2293 = vmul.f32 %v1848, %v2291
      %v2294 = vmul.f32 %v1849, %v2291
      %2295 = vst [vmem:[#allocation2 + $0x10] sm:$0x3] %v2293
      %2296 = vst [vmem:[#allocation2 + $0x18] sm:$0x3] %v2294
      %v2297 = vmul.f32 %v2192, %v2230
      %2299 = vset.pattern.permute.xlu0 0
      %2300 = vperm.xlu0 %2299, %v2297
      %v2301 = vpop.permute.xlu0 %2300
      %v2302 = vrot.slane %v2301, 2
      %v2304 = vmul.f32 %v2024, %v2302
      %v2305 = vmul.f32 %v2025, %v2302
      %v2308 = vrot.slane %v2304, 6
      %v2309 = vrot.slane %v2305, 6
      %2312 = vst [vmem:[#allocation2 + $0x10] sm:$0xc] %v2308
      %2313 = vst [vmem:[#allocation2 + $0x18] sm:$0xc] %v2309
      %v2314 = vld [vmem:[%s10] sm:$0xff]
      %v2315 = vld [vmem:[%s10 + $0x8] sm:$0xf]
      %v2316 = vld [vmem:[#allocation2] sm:$0xff]
      %v2317 = vld [vmem:[#allocation2 + $0x8] sm:$0xff]
      %v2318 = vld [vmem:[#allocation2 + $0x10] sm:$0xf]
      %v2319 = vld [vmem:[#allocation2 + $0x18] sm:$0xf]
      %v2320 = vld [vmem:[%s11] sm:$0xff]
      %v2321 = vld [vmem:[%s11 + $0x8] sm:$0xf]
      %2323 = vset.pattern.permute.xlu0 0
      %2324 = vperm.xlu0 %2323, %v2320
      %v2325 = vpop.permute.xlu0 %2324
      %2328 = vset.pattern.permute.xlu0 0
      %2329 = vperm.xlu0 %2328, %v2321
      %v2330 = vpop.permute.xlu0 %2329
      %v2333 = vsel %vm805, %v2314, 0
      %v2336 = vsel %vm805, %v2315, 0
      %v2339 = vsel %vm815, %v2318, 0
      %v2342 = vsel %vm815, %v2319, 0
      %2344 = vmatprep.subr.mxu0 0.0
      %2345 = vmatpush1.msra.mxu0 0.0
      %2346 = vmatprep.subr.mxu0 0.0
      %2347 = vmatpush1.msra.mxu0 0.0
      %2348 = vmatprep.subr.mxu0 0.0
      %2349 = vmatpush1.msra.mxu0 0.0
      %2350 = vmatprep.subr.mxu0 0.0
      %2351 = vmatpush1.msra.mxu0 0.0
      %2352 = vmatprep.subr.mxu0 0.0
      %2353 = vmatpush1.msra.mxu0 0.0
      %2354 = vmatprep.subr.mxu0 0.0
      %2355 = vmatpush1.msra.mxu0 0.0
      %2356 = vmatprep.subr.mxu0 0.0
      %2357 = vmatpush1.msra.mxu0 0.0
      %2358 = vmatprep.subr.mxu0 0.0
      %2359 = vmatpush1.msra.mxu0 0.0
      %2360 = vmatprep.subr.mxu0 0.0
      %2361 = vmatpush1.msra.mxu0 0.0
      %2362 = vmatprep.subr.mxu0 0.0
      %2363 = vmatpush1.msra.mxu0 0.0
      %2364 = vmatprep.subr.mxu0 0.0
      %2365 = vmatpush1.msra.mxu0 0.0
      %2366 = vmatprep.subr.mxu0 0.0
      %2367 = vmatpush1.msra.mxu0 0.0
      %2368 = vmatprep.subr.mxu0 0.0
      %2369 = vmatpush1.msra.mxu0 0.0
      %2370 = vmatprep.subr.mxu0 0.0
      %2371 = vmatpush1.msra.mxu0 0.0
      %2372 = vmatprep.subr.mxu0 %v2342
      %2373 = vmatpush1.msra.mxu0 %v2339
      %2374 = vmatprep.subr.mxu0 %v2317
      %2375 = vmatpush1.msra.mxu0 %v2316
      %2376 = vmatprep.subr.mxu0 0.0
      %2377 = vmatpush2.msra.mxu0 0.0
      %2378 = vmatprep.subr.mxu0 0.0
      %2379 = vmatpush2.msra.mxu0 0.0
      %2380 = vmatprep.subr.mxu0 0.0
      %2381 = vmatpush2.msra.mxu0 0.0
      %2382 = vmatprep.subr.mxu0 0.0
      %2383 = vmatpush2.msra.mxu0 0.0
      %2384 = vmatprep.subr.mxu0 0.0
      %2385 = vmatpush2.msra.mxu0 0.0
      %2386 = vmatprep.subr.mxu0 0.0
      %2387 = vmatpush2.msra.mxu0 0.0
      %2388 = vmatprep.subr.mxu0 0.0
      %2389 = vmatpush2.msra.mxu0 0.0
      %2390 = vmatprep.subr.mxu0 0.0
      %2391 = vmatpush2.msra.mxu0 0.0
      %2392 = vmatprep.subr.mxu0 0.0
      %2393 = vmatpush2.msra.mxu0 0.0
      %2394 = vmatprep.subr.mxu0 0.0
      %2395 = vmatpush2.msra.mxu0 0.0
      %2396 = vmatprep.subr.mxu0 0.0
      %2397 = vmatpush2.msra.mxu0 0.0
      %2398 = vmatprep.subr.mxu0 0.0
      %2399 = vmatpush2.msra.mxu0 0.0
      %2400 = vmatprep.subr.mxu0 0.0
      %2401 = vmatpush2.msra.mxu0 0.0
      %2402 = vmatprep.subr.mxu0 0.0
      %2403 = vmatpush2.msra.mxu0 0.0
      %2404 = vmatprep.subr.mxu0 0.0
      %2405 = vmatpush2.msra.mxu0 0.0
      %2406 = vmatprep.subr.mxu0 0.0
      %2407 = vmatpush2.msra.mxu0 0.0
      %2408 = vmatprep.mubr.f32.mxu0 0.0
      %2409 = vmatmul.mubr.f32.gmra.mxu0 %v2333
      %v2410 = vpop.f32.mrf.mxu0
      %v2411 = vadd.f32 %v2325, %v2410
      %v2412 = vpop.f32.mrf.mxu0
      %v2413 = vadd.f32 %v2325, %v2412
      %2414 = vmatprep.mubr.f32.mxu0 0.0
      %2415 = vmatmul.mubr.f32.gmra.mxu0 %v2336
      %v2416 = vpop.f32.mrf.mxu0
      %v2417 = vadd.f32 %v2330, %v2416
      %v2418 = vpop.f32.mrf.mxu0
      %v2419 = vadd.f32 %v2330, %v2418
      %2420 = vdwg.mxu0
      %v2423 = vrot.slane %v2411, 2
      %v2424 = vrot.slane %v2413, 2
      %2427 = vrot.lane.b32.xlu0 %v2423, 16
      %v2428 = vpop.permute.xlu0 %2427
      %2429 = vrot.lane.b32.xlu0 %v2424, 16
      %v2430 = vpop.permute.xlu0 %2429
      %vm2431 = vcmp.lt.s32.totalorder %v1107, 16
      %v2432 = vsel %vm2431, %v2428, %v2430
      %v2433 = vsel %vm2431, %v2430, %v2428
      %v2434 = vmul.f32 %v2433, %v1149
      %v2435 = vmul.f32 %v2432, %v1150
      %2436 = vrot.lane.b32.xlu0 %v2423, 112
      %v2437 = vpop.permute.xlu0 %2436
      %2438 = vrot.lane.b32.xlu0 %v2424, 112
      %v2439 = vpop.permute.xlu0 %2438
      %vm2440 = vcmp.lt.s32.totalorder %v1107, 112
      %v2441 = vsel %vm2440, %v2437, %v2439
      %v2442 = vsel %vm2440, %v2439, %v2437
      %v2443 = vmul.f32 %v2441, %v1155
      %v2444 = vmul.f32 %v2442, %v1156
      %v2445 = vld [vmem:[%s14] sm:$0x3]
      %v2446 = vld [vmem:[%s14 + $0x2] sm:$0x3]
      %v2447 = vld [vmem:[%s14 + $0x4] sm:$0x3]
      %v2448 = vld [vmem:[%s15] sm:$0x3]
      %2450 = vset.pattern.permute.xlu0 0
      %2451 = vperm.xlu0 %2450, %v2445
      %v2452 = vpop.permute.xlu0 %2451
      %v2454 = vlaneseq
      %v2455 = vshrl.u32 %v2454, 7
      %v2456 = vsub.s32 0, %v2455
      %v2457 = vrot.slane %v2434, %v2456
      %v2458 = vlaneseq
      %v2459 = vshrl.u32 %v2458, 7
      %v2460 = vsub.s32 0, %v2459
      %v2461 = vrot.slane %v2435, %v2460
      %v2462 = vmul.f32 %v2452, %v2457
      %v2463 = vmul.f32 %v2452, %v2461
      %2465 = vset.pattern.permute.xlu0 0
      %2466 = vperm.xlu0 %2465, %v2448
      %v2467 = vpop.permute.xlu0 %2466
      %v2469 = vadd.f32 %v2467, %v2462
      %v2470 = vadd.f32 %v2467, %v2463
      %2471 = vset.pattern.permute.xlu0 1
      %2472 = vperm.xlu0 %2471, %v2445
      %v2473 = vpop.permute.xlu0 %2472
      %v2475 = vlaneseq
      %v2476 = vshrl.u32 %v2475, 7
      %v2477 = vsub.s32 1, %v2476
      %v2478 = vrot.slane %v2434, %v2477
      %v2479 = vlaneseq
      %v2480 = vshrl.u32 %v2479, 7
      %v2481 = vsub.s32 1, %v2480
      %v2482 = vrot.slane %v2435, %v2481
      %v2483 = vmul.f32 %v2473, %v2478
      %v2484 = vmul.f32 %v2473, %v2482
      %v2485 = vadd.f32 %v2469, %v2483
      %v2486 = vadd.f32 %v2470, %v2484
      %2488 = vset.pattern.permute.xlu0 0
      %2489 = vperm.xlu0 %2488, %v2446
      %v2490 = vpop.permute.xlu0 %2489
      %v2492 = vlaneseq
      %v2493 = vshrl.u32 %v2492, 7
      %v2494 = vsub.s32 2, %v2493
      %v2495 = vrot.slane %v2411, %v2494
      %v2496 = vlaneseq
      %v2497 = vshrl.u32 %v2496, 7
      %v2498 = vsub.s32 2, %v2497
      %v2499 = vrot.slane %v2413, %v2498
      %v2500 = vmul.f32 %v2490, %v2495
      %v2501 = vmul.f32 %v2490, %v2499
      %v2502 = vadd.f32 %v2485, %v2500
      %v2503 = vadd.f32 %v2486, %v2501
      %2504 = vset.pattern.permute.xlu0 1
      %2505 = vperm.xlu0 %2504, %v2446
      %v2506 = vpop.permute.xlu0 %2505
      %v2508 = vlaneseq
      %v2509 = vshrl.u32 %v2508, 7
      %v2510 = vsub.s32 3, %v2509
      %v2511 = vrot.slane %v2411, %v2510
      %v2512 = vlaneseq
      %v2513 = vshrl.u32 %v2512, 7
      %v2514 = vsub.s32 3, %v2513
      %v2515 = vrot.slane %v2413, %v2514
      %v2516 = vmul.f32 %v2506, %v2511
      %v2517 = vmul.f32 %v2506, %v2515
      %v2518 = vadd.f32 %v2502, %v2516
      %v2519 = vadd.f32 %v2503, %v2517
      %2521 = vset.pattern.permute.xlu0 0
      %2522 = vperm.xlu0 %2521, %v2447
      %v2523 = vpop.permute.xlu0 %2522
      %v2525 = vlaneseq
      %v2526 = vshrl.u32 %v2525, 7
      %v2527 = vsub.s32 0, %v2526
      %v2528 = vrot.slane %v2443, %v2527
      %v2529 = vlaneseq
      %v2530 = vshrl.u32 %v2529, 7
      %v2531 = vsub.s32 0, %v2530
      %v2532 = vrot.slane %v2444, %v2531
      %v2533 = vmul.f32 %v2523, %v2528
      %v2534 = vmul.f32 %v2523, %v2532
      %v2535 = vadd.f32 %v2518, %v2533
      %v2536 = vadd.f32 %v2519, %v2534
      %2537 = vset.pattern.permute.xlu0 1
      %2538 = vperm.xlu0 %2537, %v2447
      %v2539 = vpop.permute.xlu0 %2538
      %v2541 = vlaneseq
      %v2542 = vshrl.u32 %v2541, 7
      %v2543 = vsub.s32 1, %v2542
      %v2544 = vrot.slane %v2443, %v2543
      %v2545 = vlaneseq
      %v2546 = vshrl.u32 %v2545, 7
      %v2547 = vsub.s32 1, %v2546
      %v2548 = vrot.slane %v2444, %v2547
      %v2549 = vmul.f32 %v2539, %v2544
      %v2550 = vmul.f32 %v2539, %v2548
      %v2551 = vadd.f32 %v2535, %v2549
      %v2552 = vadd.f32 %v2536, %v2550
      %v2553 = vmul.f32 %v2551, %v2551
      %v2554 = vmul.f32 %v2552, %v2552
      %v2557 = vrot.slane %v2553, 6
      %v2558 = vrot.slane %v2554, 6
      %v2561 = vsel %vm1305, %v2551, %v2557
      %v2562 = vsel %vm1305, %v2552, %v2558
      %v2563 = vsel %vm815, %v2561, 0.0
      %v2564 = vsel %vm815, %v2562, 0.0
      %v2565 = vadd.f32 %v2563, %v2564
      %2566 = vadd.xlane.f32.xlu0 %v2565
      %v2567 = vpop.xlane.xlu0 %2566
      %v2568 = vmul.f32 %v2567, %v1056
      %v2569 = vmul.f32 %v2568, %v2568
      %v2571 = vrot.slane %v2569, 6
      %v2573 = vsub.f32 %v2568, %v2571
      %v2574 = vmax.f32 %v2573, 0.0
      %v2575 = vsub.f32 %v2551, %v2568
      %v2576 = vsub.f32 %v2552, %v2568
      %v2577 = vadd.f32 %v2574, 1e-05
      %v2578 = vrsqrt.pop %v2577
      %2580 = vset.pattern.permute.xlu0 0
      %2581 = vperm.xlu0 %2580, %v2578
      %v2582 = vpop.permute.xlu0 %2581
      %v2583 = vrot.slane %v2582, 2
      %v2585 = vmul.f32 %v2575, %v2583
      %v2586 = vmul.f32 %v2576, %v2583
      %v2587 = vmax.f32 %v2585, 0.0
      %v2588 = vmax.f32 %v2586, 0.0
      %v2589 = vrot.slane %v2411, 4
      %v2590 = vrot.slane %v2413, 4
      %v2593 = vadd.f32 %v2587, %v2589
      %v2594 = vadd.f32 %v2588, %v2590
      %2595 = vrot.lane.b32.xlu0 %v2593, 16
      %v2596 = vpop.permute.xlu0 %2595
      %2597 = vrot.lane.b32.xlu0 %v2594, 16
      %v2598 = vpop.permute.xlu0 %2597
      %v2599 = vsel %vm2431, %v2596, %v2598
      %v2600 = vsel %vm2431, %v2598, %v2596
      %v2601 = vmul.f32 %v2600, %v1149
      %v2602 = vmul.f32 %v2599, %v1150
      %2603 = vrot.lane.b32.xlu0 %v2593, 112
      %v2604 = vpop.permute.xlu0 %2603
      %2605 = vrot.lane.b32.xlu0 %v2594, 112
      %v2606 = vpop.permute.xlu0 %2605
      %v2607 = vsel %vm2440, %v2604, %v2606
      %v2608 = vsel %vm2440, %v2606, %v2604
      %v2609 = vmul.f32 %v2607, %v1155
      %v2610 = vmul.f32 %v2608, %v1156
      %s2611 = scalar_lea.vmem %s14, 6
      %v2612 = vld [vmem:[%s2611] sm:$0x3]
      %v2613 = vld [vmem:[%s2611 + $0x2] sm:$0x3]
      %v2614 = vld [vmem:[%s2611 + $0x4] sm:$0x3]
      %s2615 = scalar_lea.vmem %s15, 2
      %v2616 = vld [vmem:[%s2615] sm:$0x3]
      %2618 = vset.pattern.permute.xlu0 0
      %2619 = vperm.xlu0 %2618, %v2612
      %v2620 = vpop.permute.xlu0 %2619
      %v2622 = vlaneseq
      %v2623 = vshrl.u32 %v2622, 7
      %v2624 = vsub.s32 0, %v2623
      %v2625 = vrot.slane %v2601, %v2624
      %v2626 = vlaneseq
      %v2627 = vshrl.u32 %v2626, 7
      %v2628 = vsub.s32 0, %v2627
      %v2629 = vrot.slane %v2602, %v2628
      %v2630 = vmul.f32 %v2620, %v2625
      %v2631 = vmul.f32 %v2620, %v2629
      %2633 = vset.pattern.permute.xlu0 0
      %2634 = vperm.xlu0 %2633, %v2616
      %v2635 = vpop.permute.xlu0 %2634
      %v2637 = vadd.f32 %v2635, %v2630
      %v2638 = vadd.f32 %v2635, %v2631
      %2639 = vset.pattern.permute.xlu0 1
      %2640 = vperm.xlu0 %2639, %v2612
      %v2641 = vpop.permute.xlu0 %2640
      %v2643 = vlaneseq
      %v2644 = vshrl.u32 %v2643, 7
      %v2645 = vsub.s32 1, %v2644
      %v2646 = vrot.slane %v2601, %v2645
      %v2647 = vlaneseq
      %v2648 = vshrl.u32 %v2647, 7
      %v2649 = vsub.s32 1, %v2648
      %v2650 = vrot.slane %v2602, %v2649
      %v2651 = vmul.f32 %v2641, %v2646
      %v2652 = vmul.f32 %v2641, %v2650
      %v2653 = vadd.f32 %v2637, %v2651
      %v2654 = vadd.f32 %v2638, %v2652
      %2656 = vset.pattern.permute.xlu0 0
      %2657 = vperm.xlu0 %2656, %v2613
      %v2658 = vpop.permute.xlu0 %2657
      %v2660 = vlaneseq
      %v2661 = vshrl.u32 %v2660, 7
      %v2662 = vsub.s32 0, %v2661
      %v2663 = vrot.slane %v2593, %v2662
      %v2664 = vlaneseq
      %v2665 = vshrl.u32 %v2664, 7
      %v2666 = vsub.s32 0, %v2665
      %v2667 = vrot.slane %v2594, %v2666
      %v2668 = vmul.f32 %v2658, %v2663
      %v2669 = vmul.f32 %v2658, %v2667
      %v2670 = vadd.f32 %v2653, %v2668
      %v2671 = vadd.f32 %v2654, %v2669
      %2672 = vset.pattern.permute.xlu0 1
      %2673 = vperm.xlu0 %2672, %v2613
      %v2674 = vpop.permute.xlu0 %2673
      %v2676 = vlaneseq
      %v2677 = vshrl.u32 %v2676, 7
      %v2678 = vsub.s32 1, %v2677
      %v2679 = vrot.slane %v2593, %v2678
      %v2680 = vlaneseq
      %v2681 = vshrl.u32 %v2680, 7
      %v2682 = vsub.s32 1, %v2681
      %v2683 = vrot.slane %v2594, %v2682
      %v2684 = vmul.f32 %v2674, %v2679
      %v2685 = vmul.f32 %v2674, %v2683
      %v2686 = vadd.f32 %v2670, %v2684
      %v2687 = vadd.f32 %v2671, %v2685
      %2689 = vset.pattern.permute.xlu0 0
      %2690 = vperm.xlu0 %2689, %v2614
      %v2691 = vpop.permute.xlu0 %2690
      %v2693 = vlaneseq
      %v2694 = vshrl.u32 %v2693, 7
      %v2695 = vsub.s32 0, %v2694
      %v2696 = vrot.slane %v2609, %v2695
      %v2697 = vlaneseq
      %v2698 = vshrl.u32 %v2697, 7
      %v2699 = vsub.s32 0, %v2698
      %v2700 = vrot.slane %v2610, %v2699
      %v2701 = vmul.f32 %v2691, %v2696
      %v2702 = vmul.f32 %v2691, %v2700
      %v2703 = vadd.f32 %v2686, %v2701
      %v2704 = vadd.f32 %v2687, %v2702
      %2705 = vset.pattern.permute.xlu0 1
      %2706 = vperm.xlu0 %2705, %v2614
      %v2707 = vpop.permute.xlu0 %2706
      %v2709 = vlaneseq
      %v2710 = vshrl.u32 %v2709, 7
      %v2711 = vsub.s32 1, %v2710
      %v2712 = vrot.slane %v2609, %v2711
      %v2713 = vlaneseq
      %v2714 = vshrl.u32 %v2713, 7
      %v2715 = vsub.s32 1, %v2714
      %v2716 = vrot.slane %v2610, %v2715
      %v2717 = vmul.f32 %v2707, %v2712
      %v2718 = vmul.f32 %v2707, %v2716
      %v2719 = vadd.f32 %v2703, %v2717
      %v2720 = vadd.f32 %v2704, %v2718
      %v2721 = vmul.f32 %v2719, %v2719
      %v2722 = vmul.f32 %v2720, %v2720
      %v2725 = vrot.slane %v2721, 6
      %v2726 = vrot.slane %v2722, 6
      %v2729 = vsel %vm1305, %v2719, %v2725
      %v2730 = vsel %vm1305, %v2720, %v2726
      %v2731 = vsel %vm815, %v2729, 0.0
      %v2732 = vsel %vm815, %v2730, 0.0
      %v2733 = vadd.f32 %v2731, %v2732
      %2734 = vadd.xlane.f32.xlu0 %v2733
      %v2735 = vpop.xlane.xlu0 %2734
      %v2736 = vmul.f32 %v2735, %v1056
      %v2737 = vmul.f32 %v2736, %v2736
      %v2739 = vrot.slane %v2737, 6
      %v2741 = vsub.f32 %v2736, %v2739
      %v2742 = vmax.f32 %v2741, 0.0
      %v2743 = vsub.f32 %v2719, %v2736
      %v2744 = vsub.f32 %v2720, %v2736
      %v2745 = vadd.f32 %v2742, 1e-05
      %v2746 = vrsqrt.pop %v2745
      %2748 = vset.pattern.permute.xlu0 0
      %2749 = vperm.xlu0 %2748, %v2746
      %v2750 = vpop.permute.xlu0 %2749
      %v2751 = vrot.slane %v2750, 2
      %v2753 = vmul.f32 %v2743, %v2751
      %v2754 = vmul.f32 %v2744, %v2751
      %v2755 = vmax.f32 %v2753, 0.0
      %v2756 = vmax.f32 %v2754, 0.0
      %v2757 = vrot.slane %v2411, 6
      %v2758 = vrot.slane %v2413, 6
      %v2761 = vadd.f32 %v2755, %v2757
      %v2762 = vadd.f32 %v2756, %v2758
      %2763 = vrot.lane.b32.xlu0 %v2761, 16
      %v2764 = vpop.permute.xlu0 %2763
      %2765 = vrot.lane.b32.xlu0 %v2762, 16
      %v2766 = vpop.permute.xlu0 %2765
      %v2767 = vsel %vm2431, %v2764, %v2766
      %v2768 = vsel %vm2431, %v2766, %v2764
      %v2769 = vmul.f32 %v2768, %v1149
      %v2770 = vmul.f32 %v2767, %v1150
      %2771 = vrot.lane.b32.xlu0 %v2761, 112
      %v2772 = vpop.permute.xlu0 %2771
      %2773 = vrot.lane.b32.xlu0 %v2762, 112
      %v2774 = vpop.permute.xlu0 %2773
      %v2775 = vsel %vm2440, %v2772, %v2774
      %v2776 = vsel %vm2440, %v2774, %v2772
      %v2777 = vmul.f32 %v2775, %v1155
      %v2778 = vmul.f32 %v2776, %v1156
      %s2779 = scalar_lea.vmem %s14, 12
      %v2780 = vld [vmem:[%s2779] sm:$0x3]
      %v2781 = vld [vmem:[%s2779 + $0x2] sm:$0x3]
      %v2782 = vld [vmem:[%s2779 + $0x4] sm:$0x3]
      %s2783 = scalar_lea.vmem %s15, 4
      %v2784 = vld [vmem:[%s2783] sm:$0x3]
      %2786 = vset.pattern.permute.xlu0 0
      %2787 = vperm.xlu0 %2786, %v2780
      %v2788 = vpop.permute.xlu0 %2787
      %v2790 = vlaneseq
      %v2791 = vshrl.u32 %v2790, 7
      %v2792 = vsub.s32 0, %v2791
      %v2793 = vrot.slane %v2769, %v2792
      %v2794 = vlaneseq
      %v2795 = vshrl.u32 %v2794, 7
      %v2796 = vsub.s32 0, %v2795
      %v2797 = vrot.slane %v2770, %v2796
      %v2798 = vmul.f32 %v2788, %v2793
      %v2799 = vmul.f32 %v2788, %v2797
      %2801 = vset.pattern.permute.xlu0 0
      %2802 = vperm.xlu0 %2801, %v2784
      %v2803 = vpop.permute.xlu0 %2802
      %v2805 = vadd.f32 %v2803, %v2798
      %v2806 = vadd.f32 %v2803, %v2799
      %2807 = vset.pattern.permute.xlu0 1
      %2808 = vperm.xlu0 %2807, %v2780
      %v2809 = vpop.permute.xlu0 %2808
      %v2811 = vlaneseq
      %v2812 = vshrl.u32 %v2811, 7
      %v2813 = vsub.s32 1, %v2812
      %v2814 = vrot.slane %v2769, %v2813
      %v2815 = vlaneseq
      %v2816 = vshrl.u32 %v2815, 7
      %v2817 = vsub.s32 1, %v2816
      %v2818 = vrot.slane %v2770, %v2817
      %v2819 = vmul.f32 %v2809, %v2814
      %v2820 = vmul.f32 %v2809, %v2818
      %v2821 = vadd.f32 %v2805, %v2819
      %v2822 = vadd.f32 %v2806, %v2820
      %2824 = vset.pattern.permute.xlu0 0
      %2825 = vperm.xlu0 %2824, %v2781
      %v2826 = vpop.permute.xlu0 %2825
      %v2828 = vlaneseq
      %v2829 = vshrl.u32 %v2828, 7
      %v2830 = vsub.s32 0, %v2829
      %v2831 = vrot.slane %v2761, %v2830
      %v2832 = vlaneseq
      %v2833 = vshrl.u32 %v2832, 7
      %v2834 = vsub.s32 0, %v2833
      %v2835 = vrot.slane %v2762, %v2834
      %v2836 = vmul.f32 %v2826, %v2831
      %v2837 = vmul.f32 %v2826, %v2835
      %v2838 = vadd.f32 %v2821, %v2836
      %v2839 = vadd.f32 %v2822, %v2837
      %2840 = vset.pattern.permute.xlu0 1
      %2841 = vperm.xlu0 %2840, %v2781
      %v2842 = vpop.permute.xlu0 %2841
      %v2844 = vlaneseq
      %v2845 = vshrl.u32 %v2844, 7
      %v2846 = vsub.s32 1, %v2845
      %v2847 = vrot.slane %v2761, %v2846
      %v2848 = vlaneseq
      %v2849 = vshrl.u32 %v2848, 7
      %v2850 = vsub.s32 1, %v2849
      %v2851 = vrot.slane %v2762, %v2850
      %v2852 = vmul.f32 %v2842, %v2847
      %v2853 = vmul.f32 %v2842, %v2851
      %v2854 = vadd.f32 %v2838, %v2852
      %v2855 = vadd.f32 %v2839, %v2853
      %2857 = vset.pattern.permute.xlu0 0
      %2858 = vperm.xlu0 %2857, %v2782
      %v2859 = vpop.permute.xlu0 %2858
      %v2861 = vlaneseq
      %v2862 = vshrl.u32 %v2861, 7
      %v2863 = vsub.s32 0, %v2862
      %v2864 = vrot.slane %v2777, %v2863
      %v2865 = vlaneseq
      %v2866 = vshrl.u32 %v2865, 7
      %v2867 = vsub.s32 0, %v2866
      %v2868 = vrot.slane %v2778, %v2867
      %v2869 = vmul.f32 %v2859, %v2864
      %v2870 = vmul.f32 %v2859, %v2868
      %v2871 = vadd.f32 %v2854, %v2869
      %v2872 = vadd.f32 %v2855, %v2870
      %2873 = vset.pattern.permute.xlu0 1
      %2874 = vperm.xlu0 %2873, %v2782
      %v2875 = vpop.permute.xlu0 %2874
      %v2877 = vlaneseq
      %v2878 = vshrl.u32 %v2877, 7
      %v2879 = vsub.s32 1, %v2878
      %v2880 = vrot.slane %v2777, %v2879
      %v2881 = vlaneseq
      %v2882 = vshrl.u32 %v2881, 7
      %v2883 = vsub.s32 1, %v2882
      %v2884 = vrot.slane %v2778, %v2883
      %v2885 = vmul.f32 %v2875, %v2880
      %v2886 = vmul.f32 %v2875, %v2884
      %v2887 = vadd.f32 %v2871, %v2885
      %v2888 = vadd.f32 %v2872, %v2886
      %v2889 = vmul.f32 %v2887, %v2887
      %v2890 = vmul.f32 %v2888, %v2888
      %v2893 = vrot.slane %v2889, 6
      %v2894 = vrot.slane %v2890, 6
      %v2897 = vsel %vm1305, %v2887, %v2893
      %v2898 = vsel %vm1305, %v2888, %v2894
      %v2899 = vsel %vm815, %v2897, 0.0
      %v2900 = vsel %vm815, %v2898, 0.0
      %v2901 = vadd.f32 %v2899, %v2900
      %2902 = vadd.xlane.f32.xlu0 %v2901
      %v2903 = vpop.xlane.xlu0 %2902
      %v2904 = vmul.f32 %v2903, %v1056
      %v2905 = vmul.f32 %v2904, %v2904
      %v2907 = vrot.slane %v2905, 6
      %v2909 = vsub.f32 %v2904, %v2907
      %v2910 = vmax.f32 %v2909, 0.0
      %v2911 = vsub.f32 %v2887, %v2904
      %v2912 = vsub.f32 %v2888, %v2904
      %v2913 = vadd.f32 %v2910, 1e-05
      %v2914 = vrsqrt.pop %v2913
      %2916 = vset.pattern.permute.xlu0 0
      %2917 = vperm.xlu0 %2916, %v2914
      %v2918 = vpop.permute.xlu0 %2917
      %v2919 = vrot.slane %v2918, 2
      %v2921 = vmul.f32 %v2911, %v2919
      %v2922 = vmul.f32 %v2912, %v2919
      %v2923 = vmax.f32 %v2921, 0.0
      %v2924 = vmax.f32 %v2922, 0.0
      %v2925 = vadd.f32 %v2923, %v2417
      %v2926 = vadd.f32 %v2924, %v2419
      %2927 = vrot.lane.b32.xlu0 %v2925, 16
      %v2928 = vpop.permute.xlu0 %2927
      %2929 = vrot.lane.b32.xlu0 %v2926, 16
      %v2930 = vpop.permute.xlu0 %2929
      %v2931 = vsel %vm2431, %v2928, %v2930
      %v2932 = vsel %vm2431, %v2930, %v2928
      %v2933 = vmul.f32 %v2932, %v1149
      %v2934 = vmul.f32 %v2931, %v1150
      %2935 = vrot.lane.b32.xlu0 %v2925, 112
      %v2936 = vpop.permute.xlu0 %2935
      %2937 = vrot.lane.b32.xlu0 %v2926, 112
      %v2938 = vpop.permute.xlu0 %2937
      %v2939 = vsel %vm2440, %v2936, %v2938
      %v2940 = vsel %vm2440, %v2938, %v2936
      %v2941 = vmul.f32 %v2939, %v1155
      %v2942 = vmul.f32 %v2940, %v1156
      %s2943 = scalar_lea.vmem %s14, 18
      %v2944 = vld [vmem:[%s2943] sm:$0x3]
      %v2945 = vld [vmem:[%s2943 + $0x2] sm:$0x3]
      %v2946 = vld [vmem:[%s2943 + $0x4] sm:$0x3]
      %s2947 = scalar_lea.vmem %s15, 6
      %v2948 = vld [vmem:[%s2947] sm:$0x3]
      %2950 = vset.pattern.permute.xlu0 0
      %2951 = vperm.xlu0 %2950, %v2944
      %v2952 = vpop.permute.xlu0 %2951
      %v2954 = vlaneseq
      %v2955 = vshrl.u32 %v2954, 7
      %v2956 = vsub.s32 0, %v2955
      %v2957 = vrot.slane %v2933, %v2956
      %v2958 = vlaneseq
      %v2959 = vshrl.u32 %v2958, 7
      %v2960 = vsub.s32 0, %v2959
      %v2961 = vrot.slane %v2934, %v2960
      %v2962 = vmul.f32 %v2952, %v2957
      %v2963 = vmul.f32 %v2952, %v2961
      %2965 = vset.pattern.permute.xlu0 0
      %2966 = vperm.xlu0 %2965, %v2948
      %v2967 = vpop.permute.xlu0 %2966
      %v2969 = vadd.f32 %v2967, %v2962
      %v2970 = vadd.f32 %v2967, %v2963
      %2971 = vset.pattern.permute.xlu0 1
      %2972 = vperm.xlu0 %2971, %v2944
      %v2973 = vpop.permute.xlu0 %2972
      %v2975 = vlaneseq
      %v2976 = vshrl.u32 %v2975, 7
      %v2977 = vsub.s32 1, %v2976
      %v2978 = vrot.slane %v2933, %v2977
      %v2979 = vlaneseq
      %v2980 = vshrl.u32 %v2979, 7
      %v2981 = vsub.s32 1, %v2980
      %v2982 = vrot.slane %v2934, %v2981
      %v2983 = vmul.f32 %v2973, %v2978
      %v2984 = vmul.f32 %v2973, %v2982
      %v2985 = vadd.f32 %v2969, %v2983
      %v2986 = vadd.f32 %v2970, %v2984
      %2988 = vset.pattern.permute.xlu0 0
      %2989 = vperm.xlu0 %2988, %v2945
      %v2990 = vpop.permute.xlu0 %2989
      %v2992 = vlaneseq
      %v2993 = vshrl.u32 %v2992, 7
      %v2994 = vsub.s32 0, %v2993
      %v2995 = vrot.slane %v2925, %v2994
      %v2996 = vlaneseq
      %v2997 = vshrl.u32 %v2996, 7
      %v2998 = vsub.s32 0, %v2997
      %v2999 = vrot.slane %v2926, %v2998
      %v3000 = vmul.f32 %v2990, %v2995
      %v3001 = vmul.f32 %v2990, %v2999
      %v3002 = vadd.f32 %v2985, %v3000
      %v3003 = vadd.f32 %v2986, %v3001
      %3004 = vset.pattern.permute.xlu0 1
      %3005 = vperm.xlu0 %3004, %v2945
      %v3006 = vpop.permute.xlu0 %3005
      %v3008 = vlaneseq
      %v3009 = vshrl.u32 %v3008, 7
      %v3010 = vsub.s32 1, %v3009
      %v3011 = vrot.slane %v2925, %v3010
      %v3012 = vlaneseq
      %v3013 = vshrl.u32 %v3012, 7
      %v3014 = vsub.s32 1, %v3013
      %v3015 = vrot.slane %v2926, %v3014
      %v3016 = vmul.f32 %v3006, %v3011
      %v3017 = vmul.f32 %v3006, %v3015
      %v3018 = vadd.f32 %v3002, %v3016
      %v3019 = vadd.f32 %v3003, %v3017
      %3021 = vset.pattern.permute.xlu0 0
      %3022 = vperm.xlu0 %3021, %v2946
      %v3023 = vpop.permute.xlu0 %3022
      %v3025 = vlaneseq
      %v3026 = vshrl.u32 %v3025, 7
      %v3027 = vsub.s32 0, %v3026
      %v3028 = vrot.slane %v2941, %v3027
      %v3029 = vlaneseq
      %v3030 = vshrl.u32 %v3029, 7
      %v3031 = vsub.s32 0, %v3030
      %v3032 = vrot.slane %v2942, %v3031
      %v3033 = vmul.f32 %v3023, %v3028
      %v3034 = vmul.f32 %v3023, %v3032
      %v3035 = vadd.f32 %v3018, %v3033
      %v3036 = vadd.f32 %v3019, %v3034
      %3037 = vset.pattern.permute.xlu0 1
      %3038 = vperm.xlu0 %3037, %v2946
      %v3039 = vpop.permute.xlu0 %3038
      %v3041 = vlaneseq
      %v3042 = vshrl.u32 %v3041, 7
      %v3043 = vsub.s32 1, %v3042
      %v3044 = vrot.slane %v2941, %v3043
      %v3045 = vlaneseq
      %v3046 = vshrl.u32 %v3045, 7
      %v3047 = vsub.s32 1, %v3046
      %v3048 = vrot.slane %v2942, %v3047
      %v3049 = vmul.f32 %v3039, %v3044
      %v3050 = vmul.f32 %v3039, %v3048
      %v3051 = vadd.f32 %v3035, %v3049
      %v3052 = vadd.f32 %v3036, %v3050
      %v3053 = vmul.f32 %v3051, %v3051
      %v3054 = vmul.f32 %v3052, %v3052
      %v3057 = vrot.slane %v3053, 6
      %v3058 = vrot.slane %v3054, 6
      %v3061 = vsel %vm1305, %v3051, %v3057
      %v3062 = vsel %vm1305, %v3052, %v3058
      %v3063 = vsel %vm815, %v3061, 0.0
      %v3064 = vsel %vm815, %v3062, 0.0
      %v3065 = vadd.f32 %v3063, %v3064
      %3066 = vadd.xlane.f32.xlu0 %v3065
      %v3067 = vpop.xlane.xlu0 %3066
      %v3068 = vmul.f32 %v3067, %v1056
      %v3069 = vmul.f32 %v3068, %v3068
      %v3071 = vrot.slane %v3069, 6
      %v3073 = vsub.f32 %v3068, %v3071
      %v3074 = vmax.f32 %v3073, 0.0
      %v3075 = vsub.f32 %v3051, %v3068
      %v3076 = vsub.f32 %v3052, %v3068
      %v3077 = vadd.f32 %v3074, 1e-05
      %v3078 = vrsqrt.pop %v3077
      %3080 = vset.pattern.permute.xlu0 0
      %3081 = vperm.xlu0 %3080, %v3078
      %v3082 = vpop.permute.xlu0 %3081
      %v3083 = vrot.slane %v3082, 2
      %v3085 = vmul.f32 %v3075, %v3083
      %v3086 = vmul.f32 %v3076, %v3083
      %v3087 = vmax.f32 %v3085, 0.0
      %v3088 = vmax.f32 %v3086, 0.0
      %v3091 = vrot.slane %v2417, 2
      %v3092 = vrot.slane %v2419, 2
      %v3095 = vadd.f32 %v3087, %v3091
      %v3096 = vadd.f32 %v3088, %v3092
      %3097 = vrot.lane.b32.xlu0 %v3095, 16
      %v3098 = vpop.permute.xlu0 %3097
      %3099 = vrot.lane.b32.xlu0 %v3096, 16
      %v3100 = vpop.permute.xlu0 %3099
      %v3101 = vsel %vm2431, %v3098, %v3100
      %v3102 = vsel %vm2431, %v3100, %v3098
      %v3103 = vmul.f32 %v3102, %v1149
      %v3104 = vmul.f32 %v3101, %v1150
      %3105 = vrot.lane.b32.xlu0 %v3095, 112
      %v3106 = vpop.permute.xlu0 %3105
      %3107 = vrot.lane.b32.xlu0 %v3096, 112
      %v3108 = vpop.permute.xlu0 %3107
      %v3109 = vsel %vm2440, %v3106, %v3108
      %v3110 = vsel %vm2440, %v3108, %v3106
      %v3111 = vmul.f32 %v3109, %v1155
      %v3112 = vmul.f32 %v3110, %v1156
      %s3113 = scalar_lea.vmem %s14, 24
      %v3114 = vld [vmem:[%s3113] sm:$0x3]
      %v3115 = vld [vmem:[%s3113 + $0x2] sm:$0x3]
      %v3116 = vld [vmem:[%s3113 + $0x4] sm:$0x3]
      %s3117 = scalar_lea.vmem %s15, 8
      %v3118 = vld [vmem:[%s3117] sm:$0x3]
      %3120 = vset.pattern.permute.xlu0 0
      %3121 = vperm.xlu0 %3120, %v3114
      %v3122 = vpop.permute.xlu0 %3121
      %v3124 = vlaneseq
      %v3125 = vshrl.u32 %v3124, 7
      %v3126 = vsub.s32 0, %v3125
      %v3127 = vrot.slane %v3103, %v3126
      %v3128 = vlaneseq
      %v3129 = vshrl.u32 %v3128, 7
      %v3130 = vsub.s32 0, %v3129
      %v3131 = vrot.slane %v3104, %v3130
      %v3132 = vmul.f32 %v3122, %v3127
      %v3133 = vmul.f32 %v3122, %v3131
      %3135 = vset.pattern.permute.xlu0 0
      %3136 = vperm.xlu0 %3135, %v3118
      %v3137 = vpop.permute.xlu0 %3136
      %v3139 = vadd.f32 %v3137, %v3132
      %v3140 = vadd.f32 %v3137, %v3133
      %3141 = vset.pattern.permute.xlu0 1
      %3142 = vperm.xlu0 %3141, %v3114
      %v3143 = vpop.permute.xlu0 %3142
      %v3145 = vlaneseq
      %v3146 = vshrl.u32 %v3145, 7
      %v3147 = vsub.s32 1, %v3146
      %v3148 = vrot.slane %v3103, %v3147
      %v3149 = vlaneseq
      %v3150 = vshrl.u32 %v3149, 7
      %v3151 = vsub.s32 1, %v3150
      %v3152 = vrot.slane %v3104, %v3151
      %v3153 = vmul.f32 %v3143, %v3148
      %v3154 = vmul.f32 %v3143, %v3152
      %v3155 = vadd.f32 %v3139, %v3153
      %v3156 = vadd.f32 %v3140, %v3154
      %3158 = vset.pattern.permute.xlu0 0
      %3159 = vperm.xlu0 %3158, %v3115
      %v3160 = vpop.permute.xlu0 %3159
      %v3162 = vlaneseq
      %v3163 = vshrl.u32 %v3162, 7
      %v3164 = vsub.s32 0, %v3163
      %v3165 = vrot.slane %v3095, %v3164
      %v3166 = vlaneseq
      %v3167 = vshrl.u32 %v3166, 7
      %v3168 = vsub.s32 0, %v3167
      %v3169 = vrot.slane %v3096, %v3168
      %v3170 = vmul.f32 %v3160, %v3165
      %v3171 = vmul.f32 %v3160, %v3169
      %v3172 = vadd.f32 %v3155, %v3170
      %v3173 = vadd.f32 %v3156, %v3171
      %3174 = vset.pattern.permute.xlu0 1
      %3175 = vperm.xlu0 %3174, %v3115
      %v3176 = vpop.permute.xlu0 %3175
      %v3178 = vlaneseq
      %v3179 = vshrl.u32 %v3178, 7
      %v3180 = vsub.s32 1, %v3179
      %v3181 = vrot.slane %v3095, %v3180
      %v3182 = vlaneseq
      %v3183 = vshrl.u32 %v3182, 7
      %v3184 = vsub.s32 1, %v3183
      %v3185 = vrot.slane %v3096, %v3184
      %v3186 = vmul.f32 %v3176, %v3181
      %v3187 = vmul.f32 %v3176, %v3185
      %v3188 = vadd.f32 %v3172, %v3186
      %v3189 = vadd.f32 %v3173, %v3187
      %3191 = vset.pattern.permute.xlu0 0
      %3192 = vperm.xlu0 %3191, %v3116
      %v3193 = vpop.permute.xlu0 %3192
      %v3195 = vlaneseq
      %v3196 = vshrl.u32 %v3195, 7
      %v3197 = vsub.s32 0, %v3196
      %v3198 = vrot.slane %v3111, %v3197
      %v3199 = vlaneseq
      %v3200 = vshrl.u32 %v3199, 7
      %v3201 = vsub.s32 0, %v3200
      %v3202 = vrot.slane %v3112, %v3201
      %v3203 = vmul.f32 %v3193, %v3198
      %v3204 = vmul.f32 %v3193, %v3202
      %v3205 = vadd.f32 %v3188, %v3203
      %v3206 = vadd.f32 %v3189, %v3204
      %3207 = vset.pattern.permute.xlu0 1
      %3208 = vperm.xlu0 %3207, %v3116
      %v3209 = vpop.permute.xlu0 %3208
      %v3211 = vlaneseq
      %v3212 = vshrl.u32 %v3211, 7
      %v3213 = vsub.s32 1, %v3212
      %v3214 = vrot.slane %v3111, %v3213
      %v3215 = vlaneseq
      %v3216 = vshrl.u32 %v3215, 7
      %v3217 = vsub.s32 1, %v3216
      %v3218 = vrot.slane %v3112, %v3217
      %v3219 = vmul.f32 %v3209, %v3214
      %v3220 = vmul.f32 %v3209, %v3218
      %v3221 = vadd.f32 %v3205, %v3219
      %v3222 = vadd.f32 %v3206, %v3220
      %v3223 = vmul.f32 %v3221, %v3221
      %v3224 = vmul.f32 %v3222, %v3222
      %v3227 = vrot.slane %v3223, 6
      %v3228 = vrot.slane %v3224, 6
      %v3231 = vsel %vm1305, %v3221, %v3227
      %v3232 = vsel %vm1305, %v3222, %v3228
      %v3233 = vsel %vm815, %v3231, 0.0
      %v3234 = vsel %vm815, %v3232, 0.0
      %v3235 = vadd.f32 %v3233, %v3234
      %3236 = vadd.xlane.f32.xlu0 %v3235
      %v3237 = vpop.xlane.xlu0 %3236
      %v3238 = vmul.f32 %v3237, %v1056
      %v3239 = vmul.f32 %v3238, %v3238
      %v3241 = vrot.slane %v3239, 6
      %v3243 = vsub.f32 %v3238, %v3241
      %v3244 = vmax.f32 %v3243, 0.0
      %v3245 = vsub.f32 %v3221, %v3238
      %v3246 = vsub.f32 %v3222, %v3238
      %v3247 = vadd.f32 %v3244, 1e-05
      %v3248 = vrsqrt.pop %v3247
      %3250 = vset.pattern.permute.xlu0 0
      %3251 = vperm.xlu0 %3250, %v3248
      %v3252 = vpop.permute.xlu0 %3251
      %v3253 = vrot.slane %v3252, 2
      %v3255 = vmul.f32 %v3245, %v3253
      %v3256 = vmul.f32 %v3246, %v3253
      %v3257 = vmax.f32 %v3255, 0.0
      %v3258 = vmax.f32 %v3256, 0.0
      %3259 = vst [vmem:[#allocation2] sm:$0x3] %v2411
      %3260 = vst [vmem:[#allocation2 + $0x8] sm:$0x3] %v2413
      %v3263 = vrot.slane %v2587, 6
      %v3264 = vrot.slane %v2588, 6
      %3267 = vst [vmem:[#allocation2] sm:$0xc] %v3263
      %3268 = vst [vmem:[#allocation2 + $0x8] sm:$0xc] %v3264
      %v3271 = vrot.slane %v2755, 4
      %v3272 = vrot.slane %v2756, 4
      %3275 = vst [vmem:[#allocation2] sm:$0x30] %v3271
      %3276 = vst [vmem:[#allocation2 + $0x8] sm:$0x30] %v3272
      %v3279 = vrot.slane %v2923, 2
      %v3280 = vrot.slane %v2924, 2
      %3283 = vst [vmem:[#allocation2] sm:$0xc0] %v3279
      %3284 = vst [vmem:[#allocation2 + $0x8] sm:$0xc0] %v3280
      %3285 = vst [vmem:[#allocation2 + $0x10] sm:$0x3] %v3087
      %3286 = vst [vmem:[#allocation2 + $0x18] sm:$0x3] %v3088
      %v3289 = vrot.slane %v3257, 6
      %v3290 = vrot.slane %v3258, 6
      %3293 = vst [vmem:[#allocation2 + $0x10] sm:$0xc] %v3289
      %3294 = vst [vmem:[#allocation2 + $0x18] sm:$0xc] %v3290
      %v3295 = vld [vmem:[%s16] sm:$0xff]
      %v3296 = vld [vmem:[%s16 + $0x8] sm:$0xf]
      %v3297 = vld [vmem:[#allocation2] sm:$0xff]
      %v3298 = vld [vmem:[#allocation2 + $0x8] sm:$0xff]
      %v3299 = vld [vmem:[#allocation2 + $0x10] sm:$0xf]
      %v3300 = vld [vmem:[#allocation2 + $0x18] sm:$0xf]
      %v3301 = vld [vmem:[%s17] sm:$0xff]
      %v3302 = vld [vmem:[%s17 + $0x8] sm:$0xf]
      %3304 = vset.pattern.permute.xlu0 0
      %3305 = vperm.xlu0 %3304, %v3301
      %v3306 = vpop.permute.xlu0 %3305
      %3309 = vset.pattern.permute.xlu0 0
      %3310 = vperm.xlu0 %3309, %v3302
      %v3311 = vpop.permute.xlu0 %3310
      %v3314 = vsel %vm805, %v3295, 0
      %v3317 = vsel %vm805, %v3296, 0
      %v3320 = vsel %vm815, %v3299, 0
      %v3323 = vsel %vm815, %v3300, 0
      %3325 = vmatprep.subr.mxu0 0.0
      %3326 = vmatpush1.msra.mxu0 0.0
      %3327 = vmatprep.subr.mxu0 0.0
      %3328 = vmatpush1.msra.mxu0 0.0
      %3329 = vmatprep.subr.mxu0 0.0
      %3330 = vmatpush1.msra.mxu0 0.0
      %3331 = vmatprep.subr.mxu0 0.0
      %3332 = vmatpush1.msra.mxu0 0.0
      %3333 = vmatprep.subr.mxu0 0.0
      %3334 = vmatpush1.msra.mxu0 0.0
      %3335 = vmatprep.subr.mxu0 0.0
      %3336 = vmatpush1.msra.mxu0 0.0
      %3337 = vmatprep.subr.mxu0 0.0
      %3338 = vmatpush1.msra.mxu0 0.0
      %3339 = vmatprep.subr.mxu0 0.0
      %3340 = vmatpush1.msra.mxu0 0.0
      %3341 = vmatprep.subr.mxu0 0.0
      %3342 = vmatpush1.msra.mxu0 0.0
      %3343 = vmatprep.subr.mxu0 0.0
      %3344 = vmatpush1.msra.mxu0 0.0
      %3345 = vmatprep.subr.mxu0 0.0
      %3346 = vmatpush1.msra.mxu0 0.0
      %3347 = vmatprep.subr.mxu0 0.0
      %3348 = vmatpush1.msra.mxu0 0.0
      %3349 = vmatprep.subr.mxu0 0.0
      %3350 = vmatpush1.msra.mxu0 0.0
      %3351 = vmatprep.subr.mxu0 0.0
      %3352 = vmatpush1.msra.mxu0 0.0
      %3353 = vmatprep.subr.mxu0 %v3323
      %3354 = vmatpush1.msra.mxu0 %v3320
      %3355 = vmatprep.subr.mxu0 %v3298
      %3356 = vmatpush1.msra.mxu0 %v3297
      %3357 = vmatprep.subr.mxu0 0.0
      %3358 = vmatpush2.msra.mxu0 0.0
      %3359 = vmatprep.subr.mxu0 0.0
      %3360 = vmatpush2.msra.mxu0 0.0
      %3361 = vmatprep.subr.mxu0 0.0
      %3362 = vmatpush2.msra.mxu0 0.0
      %3363 = vmatprep.subr.mxu0 0.0
      %3364 = vmatpush2.msra.mxu0 0.0
      %3365 = vmatprep.subr.mxu0 0.0
      %3366 = vmatpush2.msra.mxu0 0.0
      %3367 = vmatprep.subr.mxu0 0.0
      %3368 = vmatpush2.msra.mxu0 0.0
      %3369 = vmatprep.subr.mxu0 0.0
      %3370 = vmatpush2.msra.mxu0 0.0
      %3371 = vmatprep.subr.mxu0 0.0
      %3372 = vmatpush2.msra.mxu0 0.0
      %3373 = vmatprep.subr.mxu0 0.0
      %3374 = vmatpush2.msra.mxu0 0.0
      %3375 = vmatprep.subr.mxu0 0.0
      %3376 = vmatpush2.msra.mxu0 0.0
      %3377 = vmatprep.subr.mxu0 0.0
      %3378 = vmatpush2.msra.mxu0 0.0
      %3379 = vmatprep.subr.mxu0 0.0
      %3380 = vmatpush2.msra.mxu0 0.0
      %3381 = vmatprep.subr.mxu0 0.0
      %3382 = vmatpush2.msra.mxu0 0.0
      %3383 = vmatprep.subr.mxu0 0.0
      %3384 = vmatpush2.msra.mxu0 0.0
      %3385 = vmatprep.subr.mxu0 0.0
      %3386 = vmatpush2.msra.mxu0 0.0
      %3387 = vmatprep.subr.mxu0 0.0
      %3388 = vmatpush2.msra.mxu0 0.0
      %3389 = vmatprep.mubr.f32.mxu0 0.0
      %3390 = vmatmul.mubr.f32.gmra.mxu0 %v3314
      %v3391 = vpop.f32.mrf.mxu0
      %v3392 = vadd.f32 %v3306, %v3391
      %v3393 = vpop.f32.mrf.mxu0
      %v3394 = vadd.f32 %v3306, %v3393
      %3395 = vmatprep.mubr.f32.mxu0 0.0
      %3396 = vmatmul.mubr.f32.gmra.mxu0 %v3317
      %v3397 = vpop.f32.mrf.mxu0
      %v3398 = vadd.f32 %v3311, %v3397
      %v3399 = vpop.f32.mrf.mxu0
      %v3400 = vadd.f32 %v3311, %v3399
      %3401 = vdwg.mxu0
      %v3402 = vadd.f32 %v3392, %v1021
      %v3403 = vadd.f32 %v3394, %v1022
      %v3404 = vadd.f32 %v3398, %v1023
      %v3405 = vadd.f32 %v3400, %v1024
      %v3406 = vmax.f32 %v3402, 0.0
      %v3407 = vmax.f32 %v3403, 0.0
      %v3408 = vmax.f32 %v3404, 0.0
      %v3409 = vmax.f32 %v3405, 0.0
      %3410 = vst [vmem:[%s595] sm:$0xff] %v3406
      %3411 = vst [vmem:[%s595 + $0x8] sm:$0xff] %v3407
      %3412 = vst [vmem:[%s595 + $0x10] sm:$0xf] %v3408
      %3413 = vst [vmem:[%s595 + $0x18] sm:$0xf] %v3409
      %p3414 = scmp.lt.s32.totalorder %s29, 1
      %s3415 = scalar_select %p3414, %s29, 1
      %s3416 = smul.addr %s3415, 4
      %s3417 = smul.addr %s3416, 8
      %s3418 = scalar_lea.vmem %s18, %s3417
      // Predicated region
      $region93: #{conv_up_forward.1} parent=91 // pred_check
        %p3419 = pneg %p435
      $region94: #{conv_up_forward.1} parent=91 // pred_check_branch
        %3421 = sbr.rel (%p3419) target = $region96
      $region95: #{conv_up_forward.1} parent=91 // pred_region
        _
      $region96: #{conv_up_forward.1} parent=91 // pred_fallthru
        _
    $region92: #{conv_up_forward.1} parent=5 // pred_fallthru
      _
    %p3422 = scmp.le.s32.totalorder 2, %s24
    // Predicated region
    $region97: #{conv_up_forward.1} parent=5 // pred_check
      %p3423 = pneg %p3422
    $region98: #{conv_up_forward.1} parent=5 // pred_check_branch
      %3425 = sbr.rel (%p3423) target = $region100
    $region99: #{conv_up_forward.1} parent=5 // pred_region
      %s3426 = ssub.s32 %s24, 2
      // Predicated region
      $region101: #{conv_up_forward.1} parent=99 // pred_check
        %p3427 = pneg %p441
      $region102: #{conv_up_forward.1} parent=99 // pred_check_branch
        %3429 = sbr.rel (%p3427) target = $region104
      $region103: #{conv_up_forward.1} parent=99 // pred_region
        %p3430 = scmp.lt.s32.totalorder %s30, 1
        %s3431 = scalar_select %p3430, %s30, 1
        %s3432 = smul.addr %s3431, 4
        %s3433 = smul.addr %s3432, 8
        %s3434 = scalar_lea.vmem %s18, %s3433
      $region104: #{conv_up_forward.1} parent=99 // pred_fallthru
        _
    $region100: #{conv_up_forward.1} parent=5 // pred_fallthru
      _
  $region6: #{conv_up_forward.1} parent=0 // loop_footer
    %s28 = sadd.s32 1, %s24
  $region7: #{conv_up_forward.1} parent=0 // loop_footer_branch
    %23 = sbr.rel target = $region3
  $region8: #{conv_up_forward.1} parent=0 // loop_exit
    _

</llo_original>
